<compile_context>
chip_gen: v7x
topology: tpu7x:2x2x1
jax: 0.10.0
libtpu: 0.0.40
codegen_flags: <defaults>
</compile_context>

<pallas_src>
import functools

import numpy as np
import jax
import jax.numpy as jnp
from jax import lax
from jax.experimental import pallas as pl
from jax.experimental.pallas import tpu as pltpu


# ----------------------------------------------------------------------------
# In-kernel helper: reference layer_norm, two-pass f32 statistics.
#   mean = sum(v)/(L*D); std = sqrt(sum((v-mean)^2))/(L*D); out = (v-mean)/std
# ----------------------------------------------------------------------------
def _layer_norm_2pass(v, Lb, d_model):
    denom = Lb * jnp.float32(d_model)
    mean = jnp.sum(v) / denom
    c = v - mean
    inv = denom / jnp.sqrt(jnp.sum(c * c))
    return c * inv


# ----------------------------------------------------------------------------
# Pallas kernel: one grid step == block_b batch elements, full (block_b,S,D)
# slab in VMEM.  Weights are grid-invariant.
# ----------------------------------------------------------------------------
def _attn_block_kernel(L_ref, x_ref, wqkv_ref, bqkv_ref, ws_ref, w1_ref, w2_ref,
                       o_ref, *, n_heads, block_b):
    i0 = pl.program_id(0) * block_b      # first global batch index of this tile
    x3 = x_ref[...]                      # (Bt, S, D) f32, ORIGINAL channel layout
    Bt, S, D = x3.shape
    dh = D // n_heads

    # --- fused QKV projection: bf16 operands, f32 accumulation, M = Bt*S ---
    x2 = x3.reshape(Bt * S, D)                                   # leading-dim reshape only
    qkv = jnp.dot(x2.astype(jnp.bfloat16), wqkv_ref[...],
                  preferred_element_type=jnp.float32) + bqkv_ref[...]
    qkv = qkv.astype(jnp.bfloat16)
    Qa = qkv[:, 0 * D:1 * D]             # 128-lane-aligned segment slices
    Ka = qkv[:, 1 * D:2 * D]             # (head-major columns; Q pre-scaled by 1/sqrt(D))
    Va = qkv[:, 2 * D:3 * D]

    # --- per-(local batch, head) attention ---
    # Heads are merged back to the ORIGINAL channel order by accumulating
    # oh @ Ws[h*dh:(h+1)*dh, :] (a 0/1 scatter matmul, MXU) on top of the f32
    # residual x — no concatenate, no masked scratch stores, no lane shuffle.
    # TODO(synk): for large S, add a KV grid axis ("arbitrary") with online-
    #             softmax accumulators (flash-style) so the (S, S) scores never
    #             exceed VMEM (required on v7x's 64 MiB at production S).
    qk_dims = (((1,), (1,)), ((), ()))   # contract dh of both operands (no K transpose)
    attn_res = []
    for b in range(block_b):
        r0 = b * S
        acc = x3[b]                      # (S, D) f32 residual as accumulator init
        for h in range(n_heads):
            lo = h * dh
            Qh = Qa[r0:r0 + S, lo:lo + dh]                       # (S, dh) bf16
            Kh = Ka[r0:r0 + S, lo:lo + dh]
            Vh = Va[r0:r0 + S, lo:lo + dh]
            s = lax.dot_general(Qh, Kh, qk_dims,
                                preferred_element_type=jnp.float32)   # (S, S) f32
            s = s - jnp.max(s, axis=-1, keepdims=True)           # softmax over keys
            e = jnp.exp(s)
            p = e * pl.reciprocal(jnp.sum(e, axis=-1, keepdims=True), approx=True)
            oh = jnp.dot(p.astype(jnp.bfloat16), Vh,
                         preferred_element_type=jnp.float32)     # (S, dh) f32
            acc = acc + jnp.dot(oh.astype(jnp.bfloat16),
                                ws_ref[lo:lo + dh, :],
                                preferred_element_type=jnp.float32)
        attn_res.append(acc)             # (S, D) f32, original layout, + residual

    # --- layer_norm 1 (per batch element, f32) ---
    y_rows = [_layer_norm_2pass(attn_res[b], L_ref[i0 + b], D) for b in range(block_b)]
    y = jnp.concatenate(y_rows, axis=0)  # (Bt*S, D), leading-axis concat (cheap)

    # --- FFN: swish(y @ W1) @ W2 + y (bf16 MXU operands, f32 elementwise) ---
    h1 = jnp.dot(y.astype(jnp.bfloat16), w1_ref[...], preferred_element_type=jnp.float32)
    h1 = h1 * jax.nn.sigmoid(h1)
    z = jnp.dot(h1.astype(jnp.bfloat16), w2_ref[...], preferred_element_type=jnp.float32) + y

    # --- layer_norm 2 + lane-dense (D = 128) stores ---
    for b in range(block_b):
        o_ref[b] = _layer_norm_2pass(z[b * S:(b + 1) * S, :], L_ref[i0 + b], D)


# ----------------------------------------------------------------------------
# One-time weight prep ("parameter load time"): head-major column permutation
# of Wq/Wk/Wv (+Bq), softmax scale folded into the Q columns, fused QKV weight,
# per-head scatter matrix, bf16 cast of all MXU weights.
# ----------------------------------------------------------------------------
def prepare_params(params, n_heads):
    Wq, Bq, Wk, Wv = params["Wq"], params["Bq"], params["Wk"], params["Wv"]
    D = Wq.shape[0]
    dh = D // n_heads
    scale = 1.0 / float(np.sqrt(D))

    def perm_cols(w):                    # new[..., h*dh + d] = old[..., d*n_heads + h]
        *lead, d = w.shape
        return w.reshape(*lead, dh, n_heads).swapaxes(-1, -2).reshape(*lead, d)

    wqkv = jnp.concatenate([perm_cols(Wq) * scale, perm_cols(Wk), perm_cols(Wv)], axis=1)
    bqkv = jnp.concatenate([perm_cols(Bq) * scale,
                            jnp.zeros((1, D), jnp.float32),
                            jnp.zeros((1, D), jnp.float32)], axis=1)

    # Scatter matrix: head-major column h*dh + d  ->  original channel d*n_heads + h
    perm = np.arange(D).reshape(dh, n_heads).T.reshape(-1)       # perm[h*dh+d] = d*H+h
    ws = np.zeros((D, D), np.float32)
    ws[np.arange(D), perm] = 1.0

    return {
        "wqkv": wqkv.astype(jnp.bfloat16),   # (D, 3D)
        "bqkv": bqkv.astype(jnp.float32),    # (1, 3D) bias kept f32 (added post-MXU)
        "ws": jnp.asarray(ws, dtype=jnp.bfloat16),   # (D, D)
        "w1": params["W1"].astype(jnp.bfloat16),
        "w2": params["W2"].astype(jnp.bfloat16),
    }


# ----------------------------------------------------------------------------
# Wrapper: pallas_call (no activation permutation / transposes on the host side)
# ----------------------------------------------------------------------------
@functools.partial(jax.jit, static_argnums=(3, 4))
def attn_block_pallas(x, L, prepped, n_heads, block_b):
    B, S, D = x.shape
    assert B % block_b == 0 and D % n_heads == 0

    # VMEM budget from the hardware (generation-correct; cap at 3/4 physical).
    try:
        phys = int(getattr(pltpu.get_tpu_info(), "vmem_capacity_bytes", 64 * 1024 * 1024))
    except Exception:  # pragma: no cover - conservative fallback
        phys = 64 * 1024 * 1024
    f32, bf16 = 4, 2
    est = (2 * 2 * block_b * S * D * f32                      # x / out, double-buffered
           + 2 * (3 * D * D + 3 * D + 3 * D * D) * bf16       # weights (double-buffered)
           + (10 * block_b * S * D + 2 * block_b * S * S) * f32)   # live intermediates
    vmem_limit = int(min(max(2 * est, 16 * 1024 * 1024), phys * 3 // 4))
    # TODO(synk): at real d_model, single-buffer the grid-invariant weights
    #             (pl.Buffered(1) or memory_space=pl.ANY + one sync_copy);
    #             negligible at D=128 so omitted here for lowering safety.

    kernel = functools.partial(_attn_block_kernel, n_heads=n_heads, block_b=block_b)

    return pl.pallas_call(
        kernel,
        out_shape=jax.ShapeDtypeStruct((B, S, D), jnp.float32),
        grid_spec=pl.GridSpec(
            grid=(B // block_b,),
            in_specs=[
                pl.BlockSpec(memory_space=pltpu.MemorySpace.SMEM),      # L: (B,) scalars
                pl.BlockSpec((block_b, S, D), lambda i: (i, 0, 0)),     # x (original layout)
                pl.BlockSpec((D, 3 * D), lambda i: (0, 0)),             # fused Wqkv (bf16)
                pl.BlockSpec((1, 3 * D), lambda i: (0, 0)),             # fused bias (f32)
                pl.BlockSpec((D, D), lambda i: (0, 0)),                 # head scatter (bf16)
                pl.BlockSpec((D, D), lambda i: (0, 0)),                 # W1 (bf16)
                pl.BlockSpec((D, D), lambda i: (0, 0)),                 # W2 (bf16)
            ],
            out_specs=pl.BlockSpec((block_b, S, D), lambda i: (i, 0, 0)),
        ),
        compiler_params=pltpu.CompilerParams(
            dimension_semantics=("parallel",),   # independent batch tiles -> megacore shard
            vmem_limit_bytes=vmem_limit,
        ),
    )(L, x, prepped["wqkv"], prepped["bqkv"], prepped["ws"], prepped["w1"], prepped["w2"])


# ----------------------------------------------------------------------------
# Pure-JAX f32 reference mirroring the PyTorch module exactly (verification)
# ----------------------------------------------------------------------------
def _ref_layer_norm(x, L):
    B, S, D = x.shape
    mean = (jnp.sum(x, axis=(1, 2)) / (L * D)).reshape(B, 1, 1)
    std = (jnp.sqrt(jnp.sum((x - mean) ** 2, axis=(1, 2))) / (L * D)).reshape(B, 1, 1)
    return (x - mean) / std


def _ref_forward(x, L, params, n_heads):
    B, S, D = x.shape
    dh = D // n_heads
    Q = x @ params["Wq"] + params["Bq"]
    K = x @ params["Wk"]
    V = x @ params["Wv"]
    Qs = Q.reshape(B, S, dh, n_heads)
    Ks = K.reshape(B, S, dh, n_heads)
    Vs = V.reshape(B, S, dh, n_heads)
    s = jnp.einsum("bidh,bjdh->bijh", Qs, Ks) / np.sqrt(D)
    p = jax.nn.softmax(s, axis=2)
    o = jnp.einsum("bijh,bjdh->bidh", p, Vs).reshape(B, S, D)
    x1 = _ref_layer_norm(o + x, L)
    h1 = x1 @ params["W1"]
    h1 = h1 * jax.nn.sigmoid(h1)
    x2 = _ref_layer_norm(h1 @ params["W2"] + x1, L)
    return x2


if __name__ == "__main__":
    # D multiple of 128 -> lane-dense operands/stores.  block_b=2 gives M=128
    # rows per matmul and 4 grid steps (>=2 per TensorCore on v7x); tune block_b
    # up (e.g. 4) on v6e/v7x when B is large enough to keep the grid deep.
    B, S, D, n_heads = 8, 64, 128, 4
    block_b = 2

    key = jax.random.PRNGKey(0)
    kx, kq, kbq, kk, kv, k1, k2 = jax.random.split(key, 7)

    x = jax.random.normal(kx, (B, S, D), dtype=jnp.float32)
    L = jnp.asarray([S, S - 8, S - 4, S, S - 16, S - 2, S, S - 12], dtype=jnp.float32)

    params = {
        "Wq": jax.random.normal(kq, (D, D), dtype=jnp.float32) / 100.0,
        "Bq": jax.random.normal(kbq, (1, D), dtype=jnp.float32) / 100.0,
        "Wk": jax.random.normal(kk, (D, D), dtype=jnp.float32) / 100.0,
        "Wv": jax.random.normal(kv, (D, D), dtype=jnp.float32) / 100.0,
        "W1": jax.random.normal(k1, (D, D), dtype=jnp.float32) / 100.0,
        "W2": jax.random.normal(k2, (D, D), dtype=jnp.float32) / 100.0,
    }

    prepped = prepare_params(params, n_heads)

    out = jax.block_until_ready(attn_block_pallas(x, L, prepped, n_heads, block_b))
    ref = jax.block_until_ready(_ref_forward(x, L, params, n_heads))

    out_np, ref_np = np.asarray(out), np.asarray(ref)
    # The reference layer_norm amplifies its input by ~sqrt(S*D) (outputs have
    # magnitude ~100), so with bf16 MXU operands the absolute tolerance is tied
    # to the output scale (2% of mean |ref|); measured error is ~10x below it.
    scale = float(np.mean(np.abs(ref_np)))
    np.testing.assert_allclose(out_np, ref_np, rtol=2e-2, atol=2e-2 * scale)

    print("KERNEL_OK")
</pallas_src>

<mosaic_0001>
module attributes {stable_mosaic.version = 11 : i64} {
  func.func @_attn_block_kernel(%arg0: i32, %arg1: memref<8xf32, #tpu.memory_space<smem>>, %arg2: memref<2x64x128xf32, #tpu.memory_space<vmem>>, %arg3: memref<128x384xbf16, #tpu.memory_space<vmem>>, %arg4: memref<1x384xf32, #tpu.memory_space<vmem>>, %arg5: memref<128x128xbf16, #tpu.memory_space<vmem>>, %arg6: memref<128x128xbf16, #tpu.memory_space<vmem>>, %arg7: memref<128x128xbf16, #tpu.memory_space<vmem>>, %arg8: memref<2x64x128xf32, #tpu.memory_space<vmem>>) attributes {dimension_semantics = [#tpu.dimension_semantics<parallel>], iteration_bounds = array<i64: 4>, scalar_prefetch = 0 : i64, scratch_operands = 0 : i64, tpu.core_type = #tpu.core_type<tc>, window_params = [{transform_indices = @transform_0, window_bounds = array<i64: 8>}, {transform_indices = @transform_1, window_bounds = array<i64: 2, 64, 128>}, {pipeline_mode = #tpu.pipeline_mode<synchronous>, transform_indices = @transform_2, window_bounds = array<i64: 128, 384>}, {pipeline_mode = #tpu.pipeline_mode<synchronous>, transform_indices = @transform_3, window_bounds = array<i64: 1, 384>}, {pipeline_mode = #tpu.pipeline_mode<synchronous>, transform_indices = @transform_4, window_bounds = array<i64: 128, 128>}, {pipeline_mode = #tpu.pipeline_mode<synchronous>, transform_indices = @transform_5, window_bounds = array<i64: 128, 128>}, {pipeline_mode = #tpu.pipeline_mode<synchronous>, transform_indices = @transform_6, window_bounds = array<i64: 128, 128>}, {transform_indices = @transform_7, window_bounds = array<i64: 2, 64, 128>}]} {
    %c2_i32 = arith.constant 2 : i32
    %0 = arith.muli %arg0, %c2_i32 : i32
    %c0 = arith.constant 0 : index
    %c0_0 = arith.constant 0 : index
    %c0_1 = arith.constant 0 : index
    %1 = vector.load %arg2[%c0, %c0_0, %c0_1] : memref<2x64x128xf32, #tpu.memory_space<vmem>>, vector<2x64x128xf32>
    %2 = vector.shape_cast %1 : vector<2x64x128xf32> to vector<128x128xf32>
    %3 = arith.truncf %2 : vector<128x128xf32> to vector<128x128xbf16>
    %c0_2 = arith.constant 0 : index
    %c0_3 = arith.constant 0 : index
    %4 = vector.load %arg3[%c0_2, %c0_3] : memref<128x384xbf16, #tpu.memory_space<vmem>>, vector<128x384xbf16>
    %cst = arith.constant dense<0.000000e+00> : vector<128x384xf32>
    %5 = tpu.matmul %3, %4, %cst {dimension_numbers = #tpu.dot_dimension_numbers<[1], [0], [0], [1], [0, 0, 1, 1], [], []>} : vector<128x128xbf16>, vector<128x384xbf16>, vector<128x384xf32> -> vector<128x384xf32>
    %c0_4 = arith.constant 0 : index
    %c0_5 = arith.constant 0 : index
    %6 = vector.load %arg4[%c0_4, %c0_5] : memref<1x384xf32, #tpu.memory_space<vmem>>, vector<1x384xf32>
    %7 = vector.broadcast %6 : vector<1x384xf32> to vector<128x384xf32>
    %8 = arith.addf %5, %7 : vector<128x384xf32>
    %9 = arith.truncf %8 : vector<128x384xf32> to vector<128x384xbf16>
    %10 = vector.extract_strided_slice %9 {offsets = [0, 0], sizes = [128, 128], strides = [1, 1]} : vector<128x384xbf16> to vector<128x128xbf16>
    %11 = vector.extract_strided_slice %9 {offsets = [0, 128], sizes = [128, 128], strides = [1, 1]} : vector<128x384xbf16> to vector<128x128xbf16>
    %12 = vector.extract_strided_slice %9 {offsets = [0, 256], sizes = [128, 128], strides = [1, 1]} : vector<128x384xbf16> to vector<128x128xbf16>
    %13 = vector.extract_strided_slice %1 {offsets = [0, 0, 0], sizes = [1, 64, 128], strides = [1, 1, 1]} : vector<2x64x128xf32> to vector<1x64x128xf32>
    %14 = vector.shape_cast %13 : vector<1x64x128xf32> to vector<64x128xf32>
    %15 = vector.extract_strided_slice %10 {offsets = [0, 0], sizes = [64, 32], strides = [1, 1]} : vector<128x128xbf16> to vector<64x32xbf16>
    %16 = vector.extract_strided_slice %11 {offsets = [0, 0], sizes = [64, 32], strides = [1, 1]} : vector<128x128xbf16> to vector<64x32xbf16>
    %17 = vector.extract_strided_slice %12 {offsets = [0, 0], sizes = [64, 32], strides = [1, 1]} : vector<128x128xbf16> to vector<64x32xbf16>
    %cst_6 = arith.constant dense<0.000000e+00> : vector<64x64xf32>
    %18 = tpu.matmul %15, %16, %cst_6 {dimension_numbers = #tpu.dot_dimension_numbers<[1], [1], [0], [0], [0, 0, 1, 0], [], []>} : vector<64x32xbf16>, vector<64x32xbf16>, vector<64x64xf32> -> vector<64x64xf32>
    %cst_7 = arith.constant dense<0xFF800000> : vector<64xf32>
    %19 = vector.multi_reduction <maximumf>, %18, %cst_7 [1] : vector<64x64xf32> to vector<64xf32>
    %20 = vector.shape_cast %19 : vector<64xf32> to vector<64x1xf32>
    %21 = vector.broadcast %20 : vector<64x1xf32> to vector<64x64xf32>
    %22 = arith.subf %18, %21 : vector<64x64xf32>
    %23 = math.exp %22 : vector<64x64xf32>
    %cst_8 = arith.constant dense<0.000000e+00> : vector<64xf32>
    %24 = vector.multi_reduction <add>, %23, %cst_8 [1] : vector<64x64xf32> to vector<64xf32>
    %25 = vector.shape_cast %24 : vector<64xf32> to vector<64x1xf32>
    %26 = tpu.reciprocal %25 {approx = true} : vector<64x1xf32> -> vector<64x1xf32>
    %27 = vector.broadcast %26 : vector<64x1xf32> to vector<64x64xf32>
    %28 = arith.mulf %23, %27 : vector<64x64xf32>
    %29 = arith.truncf %28 : vector<64x64xf32> to vector<64x64xbf16>
    %cst_9 = arith.constant dense<0.000000e+00> : vector<64x32xf32>
    %30 = tpu.matmul %29, %17, %cst_9 {dimension_numbers = #tpu.dot_dimension_numbers<[1], [0], [0], [1], [0, 0, 1, 1], [], []>} : vector<64x64xbf16>, vector<64x32xbf16>, vector<64x32xf32> -> vector<64x32xf32>
    %31 = arith.truncf %30 : vector<64x32xf32> to vector<64x32xbf16>
    %c0_10 = arith.constant 0 : index
    %c0_11 = arith.constant 0 : index
    %32 = vector.load %arg5[%c0_10, %c0_11] : memref<128x128xbf16, #tpu.memory_space<vmem>>, vector<32x128xbf16>
    %cst_12 = arith.constant dense<0.000000e+00> : vector<64x128xf32>
    %33 = tpu.matmul %31, %32, %cst_12 {dimension_numbers = #tpu.dot_dimension_numbers<[1], [0], [0], [1], [0, 0, 1, 1], [], []>} : vector<64x32xbf16>, vector<32x128xbf16>, vector<64x128xf32> -> vector<64x128xf32>
    %34 = arith.addf %14, %33 : vector<64x128xf32>
    %35 = vector.extract_strided_slice %10 {offsets = [0, 32], sizes = [64, 32], strides = [1, 1]} : vector<128x128xbf16> to vector<64x32xbf16>
    %36 = vector.extract_strided_slice %11 {offsets = [0, 32], sizes = [64, 32], strides = [1, 1]} : vector<128x128xbf16> to vector<64x32xbf16>
    %37 = vector.extract_strided_slice %12 {offsets = [0, 32], sizes = [64, 32], strides = [1, 1]} : vector<128x128xbf16> to vector<64x32xbf16>
    %cst_13 = arith.constant dense<0.000000e+00> : vector<64x64xf32>
    %38 = tpu.matmul %35, %36, %cst_13 {dimension_numbers = #tpu.dot_dimension_numbers<[1], [1], [0], [0], [0, 0, 1, 0], [], []>} : vector<64x32xbf16>, vector<64x32xbf16>, vector<64x64xf32> -> vector<64x64xf32>
    %cst_14 = arith.constant dense<0xFF800000> : vector<64xf32>
    %39 = vector.multi_reduction <maximumf>, %38, %cst_14 [1] : vector<64x64xf32> to vector<64xf32>
    %40 = vector.shape_cast %39 : vector<64xf32> to vector<64x1xf32>
    %41 = vector.broadcast %40 : vector<64x1xf32> to vector<64x64xf32>
    %42 = arith.subf %38, %41 : vector<64x64xf32>
    %43 = math.exp %42 : vector<64x64xf32>
    %cst_15 = arith.constant dense<0.000000e+00> : vector<64xf32>
    %44 = vector.multi_reduction <add>, %43, %cst_15 [1] : vector<64x64xf32> to vector<64xf32>
    %45 = vector.shape_cast %44 : vector<64xf32> to vector<64x1xf32>
    %46 = tpu.reciprocal %45 {approx = true} : vector<64x1xf32> -> vector<64x1xf32>
    %47 = vector.broadcast %46 : vector<64x1xf32> to vector<64x64xf32>
    %48 = arith.mulf %43, %47 : vector<64x64xf32>
    %49 = arith.truncf %48 : vector<64x64xf32> to vector<64x64xbf16>
    %cst_16 = arith.constant dense<0.000000e+00> : vector<64x32xf32>
    %50 = tpu.matmul %49, %37, %cst_16 {dimension_numbers = #tpu.dot_dimension_numbers<[1], [0], [0], [1], [0, 0, 1, 1], [], []>} : vector<64x64xbf16>, vector<64x32xbf16>, vector<64x32xf32> -> vector<64x32xf32>
    %51 = arith.truncf %50 : vector<64x32xf32> to vector<64x32xbf16>
    %c32 = arith.constant 32 : index
    %c0_17 = arith.constant 0 : index
    %52 = vector.load %arg5[%c32, %c0_17] : memref<128x128xbf16, #tpu.memory_space<vmem>>, vector<32x128xbf16>
    %cst_18 = arith.constant dense<0.000000e+00> : vector<64x128xf32>
    %53 = tpu.matmul %51, %52, %cst_18 {dimension_numbers = #tpu.dot_dimension_numbers<[1], [0], [0], [1], [0, 0, 1, 1], [], []>} : vector<64x32xbf16>, vector<32x128xbf16>, vector<64x128xf32> -> vector<64x128xf32>
    %54 = arith.addf %34, %53 : vector<64x128xf32>
    %55 = vector.extract_strided_slice %10 {offsets = [0, 64], sizes = [64, 32], strides = [1, 1]} : vector<128x128xbf16> to vector<64x32xbf16>
    %56 = vector.extract_strided_slice %11 {offsets = [0, 64], sizes = [64, 32], strides = [1, 1]} : vector<128x128xbf16> to vector<64x32xbf16>
    %57 = vector.extract_strided_slice %12 {offsets = [0, 64], sizes = [64, 32], strides = [1, 1]} : vector<128x128xbf16> to vector<64x32xbf16>
    %cst_19 = arith.constant dense<0.000000e+00> : vector<64x64xf32>
    %58 = tpu.matmul %55, %56, %cst_19 {dimension_numbers = #tpu.dot_dimension_numbers<[1], [1], [0], [0], [0, 0, 1, 0], [], []>} : vector<64x32xbf16>, vector<64x32xbf16>, vector<64x64xf32> -> vector<64x64xf32>
    %cst_20 = arith.constant dense<0xFF800000> : vector<64xf32>
    %59 = vector.multi_reduction <maximumf>, %58, %cst_20 [1] : vector<64x64xf32> to vector<64xf32>
    %60 = vector.shape_cast %59 : vector<64xf32> to vector<64x1xf32>
    %61 = vector.broadcast %60 : vector<64x1xf32> to vector<64x64xf32>
    %62 = arith.subf %58, %61 : vector<64x64xf32>
    %63 = math.exp %62 : vector<64x64xf32>
    %cst_21 = arith.constant dense<0.000000e+00> : vector<64xf32>
    %64 = vector.multi_reduction <add>, %63, %cst_21 [1] : vector<64x64xf32> to vector<64xf32>
    %65 = vector.shape_cast %64 : vector<64xf32> to vector<64x1xf32>
    %66 = tpu.reciprocal %65 {approx = true} : vector<64x1xf32> -> vector<64x1xf32>
    %67 = vector.broadcast %66 : vector<64x1xf32> to vector<64x64xf32>
    %68 = arith.mulf %63, %67 : vector<64x64xf32>
    %69 = arith.truncf %68 : vector<64x64xf32> to vector<64x64xbf16>
    %cst_22 = arith.constant dense<0.000000e+00> : vector<64x32xf32>
    %70 = tpu.matmul %69, %57, %cst_22 {dimension_numbers = #tpu.dot_dimension_numbers<[1], [0], [0], [1], [0, 0, 1, 1], [], []>} : vector<64x64xbf16>, vector<64x32xbf16>, vector<64x32xf32> -> vector<64x32xf32>
    %71 = arith.truncf %70 : vector<64x32xf32> to vector<64x32xbf16>
    %c64 = arith.constant 64 : index
    %c0_23 = arith.constant 0 : index
    %72 = vector.load %arg5[%c64, %c0_23] : memref<128x128xbf16, #tpu.memory_space<vmem>>, vector<32x128xbf16>
    %cst_24 = arith.constant dense<0.000000e+00> : vector<64x128xf32>
    %73 = tpu.matmul %71, %72, %cst_24 {dimension_numbers = #tpu.dot_dimension_numbers<[1], [0], [0], [1], [0, 0, 1, 1], [], []>} : vector<64x32xbf16>, vector<32x128xbf16>, vector<64x128xf32> -> vector<64x128xf32>
    %74 = arith.addf %54, %73 : vector<64x128xf32>
    %75 = vector.extract_strided_slice %10 {offsets = [0, 96], sizes = [64, 32], strides = [1, 1]} : vector<128x128xbf16> to vector<64x32xbf16>
    %76 = vector.extract_strided_slice %11 {offsets = [0, 96], sizes = [64, 32], strides = [1, 1]} : vector<128x128xbf16> to vector<64x32xbf16>
    %77 = vector.extract_strided_slice %12 {offsets = [0, 96], sizes = [64, 32], strides = [1, 1]} : vector<128x128xbf16> to vector<64x32xbf16>
    %cst_25 = arith.constant dense<0.000000e+00> : vector<64x64xf32>
    %78 = tpu.matmul %75, %76, %cst_25 {dimension_numbers = #tpu.dot_dimension_numbers<[1], [1], [0], [0], [0, 0, 1, 0], [], []>} : vector<64x32xbf16>, vector<64x32xbf16>, vector<64x64xf32> -> vector<64x64xf32>
    %cst_26 = arith.constant dense<0xFF800000> : vector<64xf32>
    %79 = vector.multi_reduction <maximumf>, %78, %cst_26 [1] : vector<64x64xf32> to vector<64xf32>
    %80 = vector.shape_cast %79 : vector<64xf32> to vector<64x1xf32>
    %81 = vector.broadcast %80 : vector<64x1xf32> to vector<64x64xf32>
    %82 = arith.subf %78, %81 : vector<64x64xf32>
    %83 = math.exp %82 : vector<64x64xf32>
    %cst_27 = arith.constant dense<0.000000e+00> : vector<64xf32>
    %84 = vector.multi_reduction <add>, %83, %cst_27 [1] : vector<64x64xf32> to vector<64xf32>
    %85 = vector.shape_cast %84 : vector<64xf32> to vector<64x1xf32>
    %86 = tpu.reciprocal %85 {approx = true} : vector<64x1xf32> -> vector<64x1xf32>
    %87 = vector.broadcast %86 : vector<64x1xf32> to vector<64x64xf32>
    %88 = arith.mulf %83, %87 : vector<64x64xf32>
    %89 = arith.truncf %88 : vector<64x64xf32> to vector<64x64xbf16>
    %cst_28 = arith.constant dense<0.000000e+00> : vector<64x32xf32>
    %90 = tpu.matmul %89, %77, %cst_28 {dimension_numbers = #tpu.dot_dimension_numbers<[1], [0], [0], [1], [0, 0, 1, 1], [], []>} : vector<64x64xbf16>, vector<64x32xbf16>, vector<64x32xf32> -> vector<64x32xf32>
    %91 = arith.truncf %90 : vector<64x32xf32> to vector<64x32xbf16>
    %c96 = arith.constant 96 : index
    %c0_29 = arith.constant 0 : index
    %92 = vector.load %arg5[%c96, %c0_29] : memref<128x128xbf16, #tpu.memory_space<vmem>>, vector<32x128xbf16>
    %cst_30 = arith.constant dense<0.000000e+00> : vector<64x128xf32>
    %93 = tpu.matmul %91, %92, %cst_30 {dimension_numbers = #tpu.dot_dimension_numbers<[1], [0], [0], [1], [0, 0, 1, 1], [], []>} : vector<64x32xbf16>, vector<32x128xbf16>, vector<64x128xf32> -> vector<64x128xf32>
    %94 = arith.addf %74, %93 : vector<64x128xf32>
    %95 = vector.extract_strided_slice %1 {offsets = [1, 0, 0], sizes = [1, 64, 128], strides = [1, 1, 1]} : vector<2x64x128xf32> to vector<1x64x128xf32>
    %96 = vector.shape_cast %95 : vector<1x64x128xf32> to vector<64x128xf32>
    %97 = vector.extract_strided_slice %10 {offsets = [64, 0], sizes = [64, 32], strides = [1, 1]} : vector<128x128xbf16> to vector<64x32xbf16>
    %98 = vector.extract_strided_slice %11 {offsets = [64, 0], sizes = [64, 32], strides = [1, 1]} : vector<128x128xbf16> to vector<64x32xbf16>
    %99 = vector.extract_strided_slice %12 {offsets = [64, 0], sizes = [64, 32], strides = [1, 1]} : vector<128x128xbf16> to vector<64x32xbf16>
    %cst_31 = arith.constant dense<0.000000e+00> : vector<64x64xf32>
    %100 = tpu.matmul %97, %98, %cst_31 {dimension_numbers = #tpu.dot_dimension_numbers<[1], [1], [0], [0], [0, 0, 1, 0], [], []>} : vector<64x32xbf16>, vector<64x32xbf16>, vector<64x64xf32> -> vector<64x64xf32>
    %cst_32 = arith.constant dense<0xFF800000> : vector<64xf32>
    %101 = vector.multi_reduction <maximumf>, %100, %cst_32 [1] : vector<64x64xf32> to vector<64xf32>
    %102 = vector.shape_cast %101 : vector<64xf32> to vector<64x1xf32>
    %103 = vector.broadcast %102 : vector<64x1xf32> to vector<64x64xf32>
    %104 = arith.subf %100, %103 : vector<64x64xf32>
    %105 = math.exp %104 : vector<64x64xf32>
    %cst_33 = arith.constant dense<0.000000e+00> : vector<64xf32>
    %106 = vector.multi_reduction <add>, %105, %cst_33 [1] : vector<64x64xf32> to vector<64xf32>
    %107 = vector.shape_cast %106 : vector<64xf32> to vector<64x1xf32>
    %108 = tpu.reciprocal %107 {approx = true} : vector<64x1xf32> -> vector<64x1xf32>
    %109 = vector.broadcast %108 : vector<64x1xf32> to vector<64x64xf32>
    %110 = arith.mulf %105, %109 : vector<64x64xf32>
    %111 = arith.truncf %110 : vector<64x64xf32> to vector<64x64xbf16>
    %cst_34 = arith.constant dense<0.000000e+00> : vector<64x32xf32>
    %112 = tpu.matmul %111, %99, %cst_34 {dimension_numbers = #tpu.dot_dimension_numbers<[1], [0], [0], [1], [0, 0, 1, 1], [], []>} : vector<64x64xbf16>, vector<64x32xbf16>, vector<64x32xf32> -> vector<64x32xf32>
    %113 = arith.truncf %112 : vector<64x32xf32> to vector<64x32xbf16>
    %c0_35 = arith.constant 0 : index
    %c0_36 = arith.constant 0 : index
    %114 = vector.load %arg5[%c0_35, %c0_36] : memref<128x128xbf16, #tpu.memory_space<vmem>>, vector<32x128xbf16>
    %cst_37 = arith.constant dense<0.000000e+00> : vector<64x128xf32>
    %115 = tpu.matmul %113, %114, %cst_37 {dimension_numbers = #tpu.dot_dimension_numbers<[1], [0], [0], [1], [0, 0, 1, 1], [], []>} : vector<64x32xbf16>, vector<32x128xbf16>, vector<64x128xf32> -> vector<64x128xf32>
    %116 = arith.addf %96, %115 : vector<64x128xf32>
    %117 = vector.extract_strided_slice %10 {offsets = [64, 32], sizes = [64, 32], strides = [1, 1]} : vector<128x128xbf16> to vector<64x32xbf16>
    %118 = vector.extract_strided_slice %11 {offsets = [64, 32], sizes = [64, 32], strides = [1, 1]} : vector<128x128xbf16> to vector<64x32xbf16>
    %119 = vector.extract_strided_slice %12 {offsets = [64, 32], sizes = [64, 32], strides = [1, 1]} : vector<128x128xbf16> to vector<64x32xbf16>
    %cst_38 = arith.constant dense<0.000000e+00> : vector<64x64xf32>
    %120 = tpu.matmul %117, %118, %cst_38 {dimension_numbers = #tpu.dot_dimension_numbers<[1], [1], [0], [0], [0, 0, 1, 0], [], []>} : vector<64x32xbf16>, vector<64x32xbf16>, vector<64x64xf32> -> vector<64x64xf32>
    %cst_39 = arith.constant dense<0xFF800000> : vector<64xf32>
    %121 = vector.multi_reduction <maximumf>, %120, %cst_39 [1] : vector<64x64xf32> to vector<64xf32>
    %122 = vector.shape_cast %121 : vector<64xf32> to vector<64x1xf32>
    %123 = vector.broadcast %122 : vector<64x1xf32> to vector<64x64xf32>
    %124 = arith.subf %120, %123 : vector<64x64xf32>
    %125 = math.exp %124 : vector<64x64xf32>
    %cst_40 = arith.constant dense<0.000000e+00> : vector<64xf32>
    %126 = vector.multi_reduction <add>, %125, %cst_40 [1] : vector<64x64xf32> to vector<64xf32>
    %127 = vector.shape_cast %126 : vector<64xf32> to vector<64x1xf32>
    %128 = tpu.reciprocal %127 {approx = true} : vector<64x1xf32> -> vector<64x1xf32>
    %129 = vector.broadcast %128 : vector<64x1xf32> to vector<64x64xf32>
    %130 = arith.mulf %125, %129 : vector<64x64xf32>
    %131 = arith.truncf %130 : vector<64x64xf32> to vector<64x64xbf16>
    %cst_41 = arith.constant dense<0.000000e+00> : vector<64x32xf32>
    %132 = tpu.matmul %131, %119, %cst_41 {dimension_numbers = #tpu.dot_dimension_numbers<[1], [0], [0], [1], [0, 0, 1, 1], [], []>} : vector<64x64xbf16>, vector<64x32xbf16>, vector<64x32xf32> -> vector<64x32xf32>
    %133 = arith.truncf %132 : vector<64x32xf32> to vector<64x32xbf16>
    %c32_42 = arith.constant 32 : index
    %c0_43 = arith.constant 0 : index
    %134 = vector.load %arg5[%c32_42, %c0_43] : memref<128x128xbf16, #tpu.memory_space<vmem>>, vector<32x128xbf16>
    %cst_44 = arith.constant dense<0.000000e+00> : vector<64x128xf32>
    %135 = tpu.matmul %133, %134, %cst_44 {dimension_numbers = #tpu.dot_dimension_numbers<[1], [0], [0], [1], [0, 0, 1, 1], [], []>} : vector<64x32xbf16>, vector<32x128xbf16>, vector<64x128xf32> -> vector<64x128xf32>
    %136 = arith.addf %116, %135 : vector<64x128xf32>
    %137 = vector.extract_strided_slice %10 {offsets = [64, 64], sizes = [64, 32], strides = [1, 1]} : vector<128x128xbf16> to vector<64x32xbf16>
    %138 = vector.extract_strided_slice %11 {offsets = [64, 64], sizes = [64, 32], strides = [1, 1]} : vector<128x128xbf16> to vector<64x32xbf16>
    %139 = vector.extract_strided_slice %12 {offsets = [64, 64], sizes = [64, 32], strides = [1, 1]} : vector<128x128xbf16> to vector<64x32xbf16>
    %cst_45 = arith.constant dense<0.000000e+00> : vector<64x64xf32>
    %140 = tpu.matmul %137, %138, %cst_45 {dimension_numbers = #tpu.dot_dimension_numbers<[1], [1], [0], [0], [0, 0, 1, 0], [], []>} : vector<64x32xbf16>, vector<64x32xbf16>, vector<64x64xf32> -> vector<64x64xf32>
    %cst_46 = arith.constant dense<0xFF800000> : vector<64xf32>
    %141 = vector.multi_reduction <maximumf>, %140, %cst_46 [1] : vector<64x64xf32> to vector<64xf32>
    %142 = vector.shape_cast %141 : vector<64xf32> to vector<64x1xf32>
    %143 = vector.broadcast %142 : vector<64x1xf32> to vector<64x64xf32>
    %144 = arith.subf %140, %143 : vector<64x64xf32>
    %145 = math.exp %144 : vector<64x64xf32>
    %cst_47 = arith.constant dense<0.000000e+00> : vector<64xf32>
    %146 = vector.multi_reduction <add>, %145, %cst_47 [1] : vector<64x64xf32> to vector<64xf32>
    %147 = vector.shape_cast %146 : vector<64xf32> to vector<64x1xf32>
    %148 = tpu.reciprocal %147 {approx = true} : vector<64x1xf32> -> vector<64x1xf32>
    %149 = vector.broadcast %148 : vector<64x1xf32> to vector<64x64xf32>
    %150 = arith.mulf %145, %149 : vector<64x64xf32>
    %151 = arith.truncf %150 : vector<64x64xf32> to vector<64x64xbf16>
    %cst_48 = arith.constant dense<0.000000e+00> : vector<64x32xf32>
    %152 = tpu.matmul %151, %139, %cst_48 {dimension_numbers = #tpu.dot_dimension_numbers<[1], [0], [0], [1], [0, 0, 1, 1], [], []>} : vector<64x64xbf16>, vector<64x32xbf16>, vector<64x32xf32> -> vector<64x32xf32>
    %153 = arith.truncf %152 : vector<64x32xf32> to vector<64x32xbf16>
    %c64_49 = arith.constant 64 : index
    %c0_50 = arith.constant 0 : index
    %154 = vector.load %arg5[%c64_49, %c0_50] : memref<128x128xbf16, #tpu.memory_space<vmem>>, vector<32x128xbf16>
    %cst_51 = arith.constant dense<0.000000e+00> : vector<64x128xf32>
    %155 = tpu.matmul %153, %154, %cst_51 {dimension_numbers = #tpu.dot_dimension_numbers<[1], [0], [0], [1], [0, 0, 1, 1], [], []>} : vector<64x32xbf16>, vector<32x128xbf16>, vector<64x128xf32> -> vector<64x128xf32>
    %156 = arith.addf %136, %155 : vector<64x128xf32>
    %157 = vector.extract_strided_slice %10 {offsets = [64, 96], sizes = [64, 32], strides = [1, 1]} : vector<128x128xbf16> to vector<64x32xbf16>
    %158 = vector.extract_strided_slice %11 {offsets = [64, 96], sizes = [64, 32], strides = [1, 1]} : vector<128x128xbf16> to vector<64x32xbf16>
    %159 = vector.extract_strided_slice %12 {offsets = [64, 96], sizes = [64, 32], strides = [1, 1]} : vector<128x128xbf16> to vector<64x32xbf16>
    %cst_52 = arith.constant dense<0.000000e+00> : vector<64x64xf32>
    %160 = tpu.matmul %157, %158, %cst_52 {dimension_numbers = #tpu.dot_dimension_numbers<[1], [1], [0], [0], [0, 0, 1, 0], [], []>} : vector<64x32xbf16>, vector<64x32xbf16>, vector<64x64xf32> -> vector<64x64xf32>
    %cst_53 = arith.constant dense<0xFF800000> : vector<64xf32>
    %161 = vector.multi_reduction <maximumf>, %160, %cst_53 [1] : vector<64x64xf32> to vector<64xf32>
    %162 = vector.shape_cast %161 : vector<64xf32> to vector<64x1xf32>
    %163 = vector.broadcast %162 : vector<64x1xf32> to vector<64x64xf32>
    %164 = arith.subf %160, %163 : vector<64x64xf32>
    %165 = math.exp %164 : vector<64x64xf32>
    %cst_54 = arith.constant dense<0.000000e+00> : vector<64xf32>
    %166 = vector.multi_reduction <add>, %165, %cst_54 [1] : vector<64x64xf32> to vector<64xf32>
    %167 = vector.shape_cast %166 : vector<64xf32> to vector<64x1xf32>
    %168 = tpu.reciprocal %167 {approx = true} : vector<64x1xf32> -> vector<64x1xf32>
    %169 = vector.broadcast %168 : vector<64x1xf32> to vector<64x64xf32>
    %170 = arith.mulf %165, %169 : vector<64x64xf32>
    %171 = arith.truncf %170 : vector<64x64xf32> to vector<64x64xbf16>
    %cst_55 = arith.constant dense<0.000000e+00> : vector<64x32xf32>
    %172 = tpu.matmul %171, %159, %cst_55 {dimension_numbers = #tpu.dot_dimension_numbers<[1], [0], [0], [1], [0, 0, 1, 1], [], []>} : vector<64x64xbf16>, vector<64x32xbf16>, vector<64x32xf32> -> vector<64x32xf32>
    %173 = arith.truncf %172 : vector<64x32xf32> to vector<64x32xbf16>
    %c96_56 = arith.constant 96 : index
    %c0_57 = arith.constant 0 : index
    %174 = vector.load %arg5[%c96_56, %c0_57] : memref<128x128xbf16, #tpu.memory_space<vmem>>, vector<32x128xbf16>
    %cst_58 = arith.constant dense<0.000000e+00> : vector<64x128xf32>
    %175 = tpu.matmul %173, %174, %cst_58 {dimension_numbers = #tpu.dot_dimension_numbers<[1], [0], [0], [1], [0, 0, 1, 1], [], []>} : vector<64x32xbf16>, vector<32x128xbf16>, vector<64x128xf32> -> vector<64x128xf32>
    %176 = arith.addf %156, %175 : vector<64x128xf32>
    %c0_i32 = arith.constant 0 : i32
    %177 = arith.addi %0, %c0_i32 : i32
    %178 = arith.index_cast %177 : i32 to index
    %179 = memref.load %arg1[%178] : memref<8xf32, #tpu.memory_space<smem>>
    %cst_59 = arith.constant 1.280000e+02 : f32
    %180 = arith.mulf %179, %cst_59 : f32
    %181 = vector.shape_cast %94 : vector<64x128xf32> to vector<1x64x128xf32>
    %cst_60 = arith.constant dense<0.000000e+00> : vector<1xf32>
    %182 = vector.multi_reduction <add>, %181, %cst_60 [1, 2] : vector<1x64x128xf32> to vector<1xf32>
    %183 = vector.shape_cast %182 : vector<1xf32> to vector<1x1x1xf32>
    %184 = vector.extract %183[0, 0, 0] : f32 from vector<1x1x1xf32>
    %185 = arith.divf %184, %180 : f32
    %186 = vector.broadcast %185 : f32 to vector<64x128xf32>
    %187 = arith.subf %94, %186 : vector<64x128xf32>
    %188 = arith.mulf %187, %187 : vector<64x128xf32>
    %189 = vector.shape_cast %188 : vector<64x128xf32> to vector<1x64x128xf32>
    %cst_61 = arith.constant dense<0.000000e+00> : vector<1xf32>
    %190 = vector.multi_reduction <add>, %189, %cst_61 [1, 2] : vector<1x64x128xf32> to vector<1xf32>
    %191 = vector.shape_cast %190 : vector<1xf32> to vector<1x1x1xf32>
    %192 = vector.extract %191[0, 0, 0] : f32 from vector<1x1x1xf32>
    %193 = math.sqrt %192 : f32
    %194 = arith.divf %180, %193 : f32
    %195 = vector.broadcast %194 : f32 to vector<64x128xf32>
    %196 = arith.mulf %187, %195 : vector<64x128xf32>
    %c1_i32 = arith.constant 1 : i32
    %197 = arith.addi %0, %c1_i32 : i32
    %198 = arith.index_cast %197 : i32 to index
    %199 = memref.load %arg1[%198] : memref<8xf32, #tpu.memory_space<smem>>
    %cst_62 = arith.constant 1.280000e+02 : f32
    %200 = arith.mulf %199, %cst_62 : f32
    %201 = vector.shape_cast %176 : vector<64x128xf32> to vector<1x64x128xf32>
    %cst_63 = arith.constant dense<0.000000e+00> : vector<1xf32>
    %202 = vector.multi_reduction <add>, %201, %cst_63 [1, 2] : vector<1x64x128xf32> to vector<1xf32>
    %203 = vector.shape_cast %202 : vector<1xf32> to vector<1x1x1xf32>
    %204 = vector.extract %203[0, 0, 0] : f32 from vector<1x1x1xf32>
    %205 = arith.divf %204, %200 : f32
    %206 = vector.broadcast %205 : f32 to vector<64x128xf32>
    %207 = arith.subf %176, %206 : vector<64x128xf32>
    %208 = arith.mulf %207, %207 : vector<64x128xf32>
    %209 = vector.shape_cast %208 : vector<64x128xf32> to vector<1x64x128xf32>
    %cst_64 = arith.constant dense<0.000000e+00> : vector<1xf32>
    %210 = vector.multi_reduction <add>, %209, %cst_64 [1, 2] : vector<1x64x128xf32> to vector<1xf32>
    %211 = vector.shape_cast %210 : vector<1xf32> to vector<1x1x1xf32>
    %212 = vector.extract %211[0, 0, 0] : f32 from vector<1x1x1xf32>
    %213 = math.sqrt %212 : f32
    %214 = arith.divf %200, %213 : f32
    %215 = vector.broadcast %214 : f32 to vector<64x128xf32>
    %216 = arith.mulf %207, %215 : vector<64x128xf32>
    %217 = tpu.concatenate %196, %216 in 0 : vector<64x128xf32>, vector<64x128xf32> -> vector<128x128xf32>
    %218 = arith.truncf %217 : vector<128x128xf32> to vector<128x128xbf16>
    %c0_65 = arith.constant 0 : index
    %c0_66 = arith.constant 0 : index
    %219 = vector.load %arg6[%c0_65, %c0_66] : memref<128x128xbf16, #tpu.memory_space<vmem>>, vector<128x128xbf16>
    %cst_67 = arith.constant dense<0.000000e+00> : vector<128x128xf32>
    %220 = tpu.matmul %218, %219, %cst_67 {dimension_numbers = #tpu.dot_dimension_numbers<[1], [0], [0], [1], [0, 0, 1, 1], [], []>} : vector<128x128xbf16>, vector<128x128xbf16>, vector<128x128xf32> -> vector<128x128xf32>
    %221 = arith.negf %220 : vector<128x128xf32>
    %222 = math.exp %221 : vector<128x128xf32>
    %cst_68 = arith.constant 1.000000e+00 : f32
    %223 = vector.broadcast %cst_68 : f32 to vector<128x128xf32>
    %224 = arith.addf %223, %222 : vector<128x128xf32>
    %225 = arith.divf %223, %224 : vector<128x128xf32>
    %226 = arith.mulf %220, %225 : vector<128x128xf32>
    %227 = arith.truncf %226 : vector<128x128xf32> to vector<128x128xbf16>
    %c0_69 = arith.constant 0 : index
    %c0_70 = arith.constant 0 : index
    %228 = vector.load %arg7[%c0_69, %c0_70] : memref<128x128xbf16, #tpu.memory_space<vmem>>, vector<128x128xbf16>
    %cst_71 = arith.constant dense<0.000000e+00> : vector<128x128xf32>
    %229 = tpu.matmul %227, %228, %cst_71 {dimension_numbers = #tpu.dot_dimension_numbers<[1], [0], [0], [1], [0, 0, 1, 1], [], []>} : vector<128x128xbf16>, vector<128x128xbf16>, vector<128x128xf32> -> vector<128x128xf32>
    %230 = arith.addf %229, %217 : vector<128x128xf32>
    %231 = vector.extract_strided_slice %230 {offsets = [0, 0], sizes = [64, 128], strides = [1, 1]} : vector<128x128xf32> to vector<64x128xf32>
    %c0_i32_72 = arith.constant 0 : i32
    %232 = arith.addi %0, %c0_i32_72 : i32
    %233 = arith.index_cast %232 : i32 to index
    %234 = memref.load %arg1[%233] : memref<8xf32, #tpu.memory_space<smem>>
    %cst_73 = arith.constant 1.280000e+02 : f32
    %235 = arith.mulf %234, %cst_73 : f32
    %236 = vector.shape_cast %231 : vector<64x128xf32> to vector<1x64x128xf32>
    %cst_74 = arith.constant dense<0.000000e+00> : vector<1xf32>
    %237 = vector.multi_reduction <add>, %236, %cst_74 [1, 2] : vector<1x64x128xf32> to vector<1xf32>
    %238 = vector.shape_cast %237 : vector<1xf32> to vector<1x1x1xf32>
    %239 = vector.extract %238[0, 0, 0] : f32 from vector<1x1x1xf32>
    %240 = arith.divf %239, %235 : f32
    %241 = vector.broadcast %240 : f32 to vector<64x128xf32>
    %242 = arith.subf %231, %241 : vector<64x128xf32>
    %243 = arith.mulf %242, %242 : vector<64x128xf32>
    %244 = vector.shape_cast %243 : vector<64x128xf32> to vector<1x64x128xf32>
    %cst_75 = arith.constant dense<0.000000e+00> : vector<1xf32>
    %245 = vector.multi_reduction <add>, %244, %cst_75 [1, 2] : vector<1x64x128xf32> to vector<1xf32>
    %246 = vector.shape_cast %245 : vector<1xf32> to vector<1x1x1xf32>
    %247 = vector.extract %246[0, 0, 0] : f32 from vector<1x1x1xf32>
    %248 = math.sqrt %247 : f32
    %249 = arith.divf %235, %248 : f32
    %250 = vector.broadcast %249 : f32 to vector<64x128xf32>
    %251 = arith.mulf %242, %250 : vector<64x128xf32>
    %c0_76 = arith.constant 0 : index
    %c0_77 = arith.constant 0 : index
    %c0_78 = arith.constant 0 : index
    %252 = vector.load %arg8[%c0_76, %c0_77, %c0_78] : memref<2x64x128xf32, #tpu.memory_space<vmem>>, vector<1x64x128xf32>
    %253 = vector.shape_cast %252 : vector<1x64x128xf32> to vector<64x128xf32>
    %254 = vector.shape_cast %251 : vector<64x128xf32> to vector<1x64x128xf32>
    tpu.vector_store %arg8[%c0_76, %c0_77, %c0_78], %254 {strides = array<i32>} : memref<2x64x128xf32, #tpu.memory_space<vmem>>, vector<1x64x128xf32>,
    %255 = vector.extract_strided_slice %230 {offsets = [64, 0], sizes = [64, 128], strides = [1, 1]} : vector<128x128xf32> to vector<64x128xf32>
    %c1_i32_79 = arith.constant 1 : i32
    %256 = arith.addi %0, %c1_i32_79 : i32
    %257 = arith.index_cast %256 : i32 to index
    %258 = memref.load %arg1[%257] : memref<8xf32, #tpu.memory_space<smem>>
    %cst_80 = arith.constant 1.280000e+02 : f32
    %259 = arith.mulf %258, %cst_80 : f32
    %260 = vector.shape_cast %255 : vector<64x128xf32> to vector<1x64x128xf32>
    %cst_81 = arith.constant dense<0.000000e+00> : vector<1xf32>
    %261 = vector.multi_reduction <add>, %260, %cst_81 [1, 2] : vector<1x64x128xf32> to vector<1xf32>
    %262 = vector.shape_cast %261 : vector<1xf32> to vector<1x1x1xf32>
    %263 = vector.extract %262[0, 0, 0] : f32 from vector<1x1x1xf32>
    %264 = arith.divf %263, %259 : f32
    %265 = vector.broadcast %264 : f32 to vector<64x128xf32>
    %266 = arith.subf %255, %265 : vector<64x128xf32>
    %267 = arith.mulf %266, %266 : vector<64x128xf32>
    %268 = vector.shape_cast %267 : vector<64x128xf32> to vector<1x64x128xf32>
    %cst_82 = arith.constant dense<0.000000e+00> : vector<1xf32>
    %269 = vector.multi_reduction <add>, %268, %cst_82 [1, 2] : vector<1x64x128xf32> to vector<1xf32>
    %270 = vector.shape_cast %269 : vector<1xf32> to vector<1x1x1xf32>
    %271 = vector.extract %270[0, 0, 0] : f32 from vector<1x1x1xf32>
    %272 = math.sqrt %271 : f32
    %273 = arith.divf %259, %272 : f32
    %274 = vector.broadcast %273 : f32 to vector<64x128xf32>
    %275 = arith.mulf %266, %274 : vector<64x128xf32>
    %c1 = arith.constant 1 : index
    %c0_83 = arith.constant 0 : index
    %c0_84 = arith.constant 0 : index
    %276 = vector.load %arg8[%c1, %c0_83, %c0_84] : memref<2x64x128xf32, #tpu.memory_space<vmem>>, vector<1x64x128xf32>
    %277 = vector.shape_cast %276 : vector<1x64x128xf32> to vector<64x128xf32>
    %278 = vector.shape_cast %275 : vector<64x128xf32> to vector<1x64x128xf32>
    tpu.vector_store %arg8[%c1, %c0_83, %c0_84], %278 {strides = array<i32>} : memref<2x64x128xf32, #tpu.memory_space<vmem>>, vector<1x64x128xf32>,
    return
  }
  func.func @transform_0(%arg0: i32) -> i32 {
    %c0_i32 = arith.constant 0 : i32
    %c0_i32_0 = arith.constant 0 : i32
    return %c0_i32 : i32
  }
  func.func @transform_1(%arg0: i32) -> (i32, i32, i32) {
    %c0_i32 = arith.constant 0 : i32
    %c0_i32_0 = arith.constant 0 : i32
    %c0_i32_1 = arith.constant 0 : i32
    return %arg0, %c0_i32, %c0_i32_0 : i32, i32, i32
  }
  func.func @transform_2(%arg0: i32) -> (i32, i32) {
    %c0_i32 = arith.constant 0 : i32
    %c0_i32_0 = arith.constant 0 : i32
    %c0_i32_1 = arith.constant 0 : i32
    return %c0_i32, %c0_i32_0 : i32, i32
  }
  func.func @transform_3(%arg0: i32) -> (i32, i32) {
    %c0_i32 = arith.constant 0 : i32
    %c0_i32_0 = arith.constant 0 : i32
    %c0_i32_1 = arith.constant 0 : i32
    return %c0_i32, %c0_i32_0 : i32, i32
  }
  func.func @transform_4(%arg0: i32) -> (i32, i32) {
    %c0_i32 = arith.constant 0 : i32
    %c0_i32_0 = arith.constant 0 : i32
    %c0_i32_1 = arith.constant 0 : i32
    return %c0_i32, %c0_i32_0 : i32, i32
  }
  func.func @transform_5(%arg0: i32) -> (i32, i32) {
    %c0_i32 = arith.constant 0 : i32
    %c0_i32_0 = arith.constant 0 : i32
    %c0_i32_1 = arith.constant 0 : i32
    return %c0_i32, %c0_i32_0 : i32, i32
  }
  func.func @transform_6(%arg0: i32) -> (i32, i32) {
    %c0_i32 = arith.constant 0 : i32
    %c0_i32_0 = arith.constant 0 : i32
    %c0_i32_1 = arith.constant 0 : i32
    return %c0_i32, %c0_i32_0 : i32, i32
  }
  func.func @transform_7(%arg0: i32) -> (i32, i32, i32) {
    %c0_i32 = arith.constant 0 : i32
    %c0_i32_0 = arith.constant 0 : i32
    %c0_i32_1 = arith.constant 0 : i32
    return %arg0, %c0_i32, %c0_i32_0 : i32, i32, i32
  }
}

</mosaic_0001>

<llo_original>
// kernel: attn_block_pallas.1
$region0: #{attn_block_pallas.1}
  #allocation0 [shape = 'u32[]', space=smem, size = 0x4, offset = 0x4, fixed_abs, tag = 'smem constant byte address 0x4 - core index']
  #allocation1 [shape = 'u32[144,128]{1,0:T(1,128)}', space=vmem, size = 0x12000, scoped, tag = 'internal scratch']
  %s0 = inlined_call_operand.vmem [shape: f32[8], index: 0, kind: input, shape index: {}]
  %s1 = inlined_call_operand.hbm [shape: f32[8,64,128], index: 1, kind: input, shape index: {}]
  %s2 = inlined_call_operand.hbm [shape: bf16[128,384], index: 2, kind: input, shape index: {}]
  %s3 = inlined_call_operand.vmem [shape: f32[1,384], index: 3, kind: input, shape index: {}]
  %s4 = inlined_call_operand.hbm [shape: bf16[128,128], index: 4, kind: input, shape index: {}]
  %s5 = inlined_call_operand.hbm [shape: bf16[128,128], index: 5, kind: input, shape index: {}]
  %s6 = inlined_call_operand.hbm [shape: bf16[128,128], index: 6, kind: input, shape index: {}]
  %s7 = inlined_call_operand.hbm [shape: f32[8,64,128], index: 7, kind: output, shape index: {}]
  %s8 = sld [smem:[#allocation0]]
  $region85: #{attn_block_pallas.1} parent=0
    _
  %s10 = ssub.s32 1, %s8
  %s11 = scalar_select 0, %s10, %s8
  $region1: #{attn_block_pallas.1} parent=0
    #allocation2 [shape = 'u8[512]{0}', space=smem, size = 0x200, scoped, tag = 'input window, operand 0, single buffered']
    #allocation3 [shape = 's32[2]{0}', space=sflag, size = 0x8, scoped, tag = 'scoped memory for attn_block_pallas.1']
    #allocation4 [shape = 's32[2]{0}', space=sflag, size = 0x8, scoped, tag = 'scoped memory for attn_block_pallas.1']
    #allocation5 [shape = 's32[2]{0}', space=sflag, size = 0x8, scoped, tag = 'scoped memory for attn_block_pallas.1']
    #allocation6 [shape = 'u8[131072]{0}', space=vmem, size = 0x20000, scoped, tag = 'input window, operand 1']
    #allocation7 [shape = 'u8[98304]{0}', space=vmem, size = 0x18000, scoped, tag = 'input window, operand 2, single buffered']
    #allocation8 [shape = 's32[1]{0}', space=sflag, size = 0x4, scoped, tag = 'scoped memory for attn_block_pallas.1']
    #allocation9 [shape = 'u8[32768]{0}', space=vmem, size = 0x8000, scoped, tag = 'input window, operand 4, single buffered']
    #allocation10 [shape = 'u8[32768]{0}', space=vmem, size = 0x8000, scoped, tag = 'input window, operand 5, single buffered']
    #allocation11 [shape = 's32[1]{0}', space=sflag, size = 0x4, scoped, tag = 'scoped memory for attn_block_pallas.1']
    #allocation12 [shape = 'u8[32768]{0}', space=vmem, size = 0x8000, scoped, tag = 'input window, operand 6, single buffered']
    #allocation13 [shape = 'u8[131072]{0}', space=vmem, size = 0x20000, scoped, tag = 'output window, operand 0']
    %12 = vsyncpa [#allocation5], 0
    %13 = vsyncpa [#allocation3], 0
    %s14 = scalar_lea.sflag [#allocation3], 1
    %15 = vsyncpa %s14, 0
    %16 = vsyncpa [#allocation8], 0
    %17 = vsyncpa [#allocation11], 0
    %18 = vsyncpa [#allocation4], 0
    %s19 = scalar_lea.sflag [#allocation4], 1
    %20 = vsyncpa %s19, 0
    loop: start=0, step=1, limit=6
    $region2: #{attn_block_pallas.1} parent=1 // loop_pre_header
      _
    $region3: #{attn_block_pallas.1} parent=1 // loop_header
      %s22 = sphi 0, %s26
      %p23 = scmp.ge.s32.totalorder %s22, 6
      %s30 = sphi 0, %s30
      %s32 = sphi 0, %s30
      %s33 = sphi 0, %s32
      %s47 = sphi 0, %s33
      %s53 = sphi 0, %s55
      %s56 = sphi 0, %s53
      %s57 = sphi 0, %s56
      %s73 = sphi 0, %s57
      %s77 = sphi 0, %s77
      %s79 = sphi 0, %s77
      %s80 = sphi 0, %s79
      %s94 = sphi 0, %s80
      %s98 = sphi 0, %s98
      %s100 = sphi 0, %s98
      %s101 = sphi 0, %s100
      %s115 = sphi 0, %s101
      %s119 = sphi 0, %s119
      %s121 = sphi 0, %s119
      %s122 = sphi 0, %s121
      %s136 = sphi 0, %s122
      %s140 = sphi 0, %s140
      %s142 = sphi 0, %s140
      %s143 = sphi 0, %s142
      %s157 = sphi 0, %s143
      %s161 = sphi 0, %s161
      %s163 = sphi 0, %s161
      %s164 = sphi 0, %s163
      %s178 = sphi 0, %s164
      %s184 = sphi 0, %s186
      %s187 = sphi 0, %s184
      %s188 = sphi 0, %s187
      %s204 = sphi 0, %s188
    $region4: #{attn_block_pallas.1} parent=1 // loop_header_branch
      %25 = sbr.rel (%p23) target = $region8
    $region5: #{attn_block_pallas.1} parent=1 // loop_body
      %s27 = ssub.s32 %s22, 1
      %s28 = ssub.s32 %s22, 2
      %s29 = sadd.s32 %s22, 1
      %s31 = sadd.s32 %s30, 1
      %p34 = scmp.eq.s32.totalorder %s22, 3
      %p35 = scmp.ne.s32.totalorder %s30, %s32
      %p36 = scmp.eq.s32.totalorder %s22, 0
      %p37 = por %p35, %p36
      %p38 = scmp.ne.s32.totalorder %s30, %s32
      %p39 = scmp.eq.s32.totalorder %s27, 3
      %p40 = por %p38, %p39
      %p41 = scmp.ne.s32.totalorder %s32, %s33
      %p42 = scmp.eq.s32.totalorder %s27, 0
      %p43 = por %p41, %p42
      %p44 = scmp.ne.s32.totalorder %s32, %s33
      %p45 = scmp.eq.s32.totalorder %s28, 3
      %p46 = por %p44, %p45
      %p48 = scmp.ne.s32.totalorder %s33, %s47
      %p49 = scmp.eq.s32.totalorder %s28, 0
      %p50 = por %p48, %p49
      %s51 = ssub.s32 %s22, %s29
      %p52 = scmp.eq.s32.totalorder %s51, 0
      %s54 = sadd.s32 %s53, 1
      %s55 = scalar_select %p52, %s53, %s54
      %p58 = pneg %p52
      %p59 = scmp.eq.s32.totalorder %s22, 3
      %p60 = por %p58, %p59
      %p61 = scmp.ne.s32.totalorder %s53, %s56
      %p62 = scmp.eq.s32.totalorder %s22, 0
      %p63 = por %p61, %p62
      %p64 = scmp.ne.s32.totalorder %s53, %s56
      %p65 = scmp.eq.s32.totalorder %s27, 3
      %p66 = por %p64, %p65
      %p67 = scmp.ne.s32.totalorder %s56, %s57
      %p68 = scmp.eq.s32.totalorder %s27, 0
      %p69 = por %p67, %p68
      %p70 = scmp.ne.s32.totalorder %s56, %s57
      %p71 = scmp.eq.s32.totalorder %s28, 3
      %p72 = por %p70, %p71
      %p74 = scmp.ne.s32.totalorder %s57, %s73
      %p75 = scmp.eq.s32.totalorder %s28, 0
      %p76 = por %p74, %p75
      %s78 = sadd.s32 %s77, 1
      %p81 = scmp.eq.s32.totalorder %s22, 3
      %p82 = scmp.ne.s32.totalorder %s77, %s79
      %p83 = scmp.eq.s32.totalorder %s22, 0
      %p84 = por %p82, %p83
      %p85 = scmp.ne.s32.totalorder %s77, %s79
      %p86 = scmp.eq.s32.totalorder %s27, 3
      %p87 = por %p85, %p86
      %p88 = scmp.ne.s32.totalorder %s79, %s80
      %p89 = scmp.eq.s32.totalorder %s27, 0
      %p90 = por %p88, %p89
      %p91 = scmp.ne.s32.totalorder %s79, %s80
      %p92 = scmp.eq.s32.totalorder %s28, 3
      %p93 = por %p91, %p92
      %p95 = scmp.ne.s32.totalorder %s80, %s94
      %p96 = scmp.eq.s32.totalorder %s28, 0
      %p97 = por %p95, %p96
      %s99 = sadd.s32 %s98, 1
      %p102 = scmp.eq.s32.totalorder %s22, 3
      %p103 = scmp.ne.s32.totalorder %s98, %s100
      %p104 = scmp.eq.s32.totalorder %s22, 0
      %p105 = por %p103, %p104
      %p106 = scmp.ne.s32.totalorder %s98, %s100
      %p107 = scmp.eq.s32.totalorder %s27, 3
      %p108 = por %p106, %p107
      %p109 = scmp.ne.s32.totalorder %s100, %s101
      %p110 = scmp.eq.s32.totalorder %s27, 0
      %p111 = por %p109, %p110
      %p112 = scmp.ne.s32.totalorder %s100, %s101
      %p113 = scmp.eq.s32.totalorder %s28, 3
      %p114 = por %p112, %p113
      %p116 = scmp.ne.s32.totalorder %s101, %s115
      %p117 = scmp.eq.s32.totalorder %s28, 0
      %p118 = por %p116, %p117
      %s120 = sadd.s32 %s119, 1
      %p123 = scmp.eq.s32.totalorder %s22, 3
      %p124 = scmp.ne.s32.totalorder %s119, %s121
      %p125 = scmp.eq.s32.totalorder %s22, 0
      %p126 = por %p124, %p125
      %p127 = scmp.ne.s32.totalorder %s119, %s121
      %p128 = scmp.eq.s32.totalorder %s27, 3
      %p129 = por %p127, %p128
      %p130 = scmp.ne.s32.totalorder %s121, %s122
      %p131 = scmp.eq.s32.totalorder %s27, 0
      %p132 = por %p130, %p131
      %p133 = scmp.ne.s32.totalorder %s121, %s122
      %p134 = scmp.eq.s32.totalorder %s28, 3
      %p135 = por %p133, %p134
      %p137 = scmp.ne.s32.totalorder %s122, %s136
      %p138 = scmp.eq.s32.totalorder %s28, 0
      %p139 = por %p137, %p138
      %s141 = sadd.s32 %s140, 1
      %p144 = scmp.eq.s32.totalorder %s22, 3
      %p145 = scmp.ne.s32.totalorder %s140, %s142
      %p146 = scmp.eq.s32.totalorder %s22, 0
      %p147 = por %p145, %p146
      %p148 = scmp.ne.s32.totalorder %s140, %s142
      %p149 = scmp.eq.s32.totalorder %s27, 3
      %p150 = por %p148, %p149
      %p151 = scmp.ne.s32.totalorder %s142, %s143
      %p152 = scmp.eq.s32.totalorder %s27, 0
      %p153 = por %p151, %p152
      %p154 = scmp.ne.s32.totalorder %s142, %s143
      %p155 = scmp.eq.s32.totalorder %s28, 3
      %p156 = por %p154, %p155
      %p158 = scmp.ne.s32.totalorder %s143, %s157
      %p159 = scmp.eq.s32.totalorder %s28, 0
      %p160 = por %p158, %p159
      %s162 = sadd.s32 %s161, 1
      %p165 = scmp.eq.s32.totalorder %s22, 3
      %p166 = scmp.ne.s32.totalorder %s161, %s163
      %p167 = scmp.eq.s32.totalorder %s22, 0
      %p168 = por %p166, %p167
      %p169 = scmp.ne.s32.totalorder %s161, %s163
      %p170 = scmp.eq.s32.totalorder %s27, 3
      %p171 = por %p169, %p170
      %p172 = scmp.ne.s32.totalorder %s163, %s164
      %p173 = scmp.eq.s32.totalorder %s27, 0
      %p174 = por %p172, %p173
      %p175 = scmp.ne.s32.totalorder %s163, %s164
      %p176 = scmp.eq.s32.totalorder %s28, 3
      %p177 = por %p175, %p176
      %p179 = scmp.ne.s32.totalorder %s164, %s178
      %p180 = scmp.eq.s32.totalorder %s28, 0
      %p181 = por %p179, %p180
      %s182 = ssub.s32 %s22, %s29
      %p183 = scmp.eq.s32.totalorder %s182, 0
      %s185 = sadd.s32 %s184, 1
      %s186 = scalar_select %p183, %s184, %s185
      %p189 = pneg %p183
      %p190 = scmp.eq.s32.totalorder %s22, 3
      %p191 = por %p189, %p190
      %p192 = scmp.ne.s32.totalorder %s184, %s187
      %p193 = scmp.eq.s32.totalorder %s22, 0
      %p194 = por %p192, %p193
      %p195 = scmp.ne.s32.totalorder %s184, %s187
      %p196 = scmp.eq.s32.totalorder %s27, 3
      %p197 = por %p195, %p196
      %p198 = scmp.ne.s32.totalorder %s187, %s188
      %p199 = scmp.eq.s32.totalorder %s27, 0
      %p200 = por %p198, %p199
      %p201 = scmp.ne.s32.totalorder %s187, %s188
      %p202 = scmp.eq.s32.totalorder %s28, 3
      %p203 = por %p201, %p202
      %p205 = scmp.ne.s32.totalorder %s188, %s204
      %p206 = scmp.eq.s32.totalorder %s28, 0
      %p207 = por %p205, %p206
      %p208 = scmp.le.s32.totalorder 1, %s22
      %p209 = scmp.lt.s32.totalorder %s22, 5
      %p210 = pnand %p208, %p209
      %p211 = pneg %p210
      // Predicated region
      $region9: #{attn_block_pallas.1} parent=5 // pred_check
        _
      $region10: #{attn_block_pallas.1} parent=5 // pred_check_branch
        %213 = sbr.rel (%p210) target = $region12
      $region11: #{attn_block_pallas.1} parent=5 // pred_region
        %s214 = ssub.s32 %s22, 1
        // Predicated region
        $region13: #{attn_block_pallas.1} parent=11 // pred_check
          %p215 = pneg %p43
        $region14: #{attn_block_pallas.1} parent=11 // pred_check_branch
          %217 = sbr.rel (%p215) target = $region16
        $region15: #{attn_block_pallas.1} parent=11 // pred_region
          %s219 = ssub.s32 16, 16
          %220 = vsyncadd [#allocation5], %s219
          %s222 = sshll.u32 %s0, 4
          %s223 = int_to_ptr.vmem [resolvable:$true] %s222
          %225 = dma.vmem_to_smem %s223, 16, [#allocation2], [#allocation5]
        $region16: #{attn_block_pallas.1} parent=11 // pred_fallthru
          _
        // Predicated region
        $region17: #{attn_block_pallas.1} parent=11 // pred_check
          %p226 = pneg %p90
        $region18: #{attn_block_pallas.1} parent=11 // pred_check_branch
          %228 = sbr.rel (%p226) target = $region20
        $region19: #{attn_block_pallas.1} parent=11 // pred_region
          %s230 = ssub.s32 3072, 3072
          %231 = vsyncadd [#allocation8], %s230
          %s232 = sshll.u32 [#allocation7], 4
          %s233 = int_to_ptr.vmem [resolvable:$true] %s232
          %238 = dma.hbm_to_vmem [thread:$0]  %s2, 3072, %s233, [#allocation8], 192, 192, 12
        $region20: #{attn_block_pallas.1} parent=11 // pred_fallthru
          _
        // Predicated region
        $region21: #{attn_block_pallas.1} parent=11 // pred_check
          %p239 = pneg %p111
        $region22: #{attn_block_pallas.1} parent=11 // pred_check_branch
          %241 = sbr.rel (%p239) target = $region24
        $region23: #{attn_block_pallas.1} parent=11 // pred_region
          _
        $region24: #{attn_block_pallas.1} parent=11 // pred_fallthru
          _
        // Predicated region
        $region25: #{attn_block_pallas.1} parent=11 // pred_check
          %p242 = pneg %p132
        $region26: #{attn_block_pallas.1} parent=11 // pred_check_branch
          %244 = sbr.rel (%p242) target = $region28
        $region27: #{attn_block_pallas.1} parent=11 // pred_region
          %s246 = ssub.s32 1024, 1024
          %247 = vsyncadd [#allocation8], %s246
          %s248 = sshll.u32 [#allocation9], 4
          %s249 = int_to_ptr.vmem [resolvable:$true] %s248
          %254 = dma.hbm_to_vmem [thread:$0]  %s4, 1024, %s249, [#allocation8], 64, 64, 4
        $region28: #{attn_block_pallas.1} parent=11 // pred_fallthru
          _
        // Predicated region
        $region29: #{attn_block_pallas.1} parent=11 // pred_check
          %p255 = pneg %p153
        $region30: #{attn_block_pallas.1} parent=11 // pred_check_branch
          %257 = sbr.rel (%p255) target = $region32
        $region31: #{attn_block_pallas.1} parent=11 // pred_region
          %s259 = ssub.s32 1024, 1024
          %260 = vsyncadd [#allocation11], %s259
          %s261 = sshll.u32 [#allocation10], 4
          %s262 = int_to_ptr.vmem [resolvable:$true] %s261
          %267 = dma.hbm_to_vmem [thread:$0]  %s5, 1024, %s262, [#allocation11], 64, 64, 4
        $region32: #{attn_block_pallas.1} parent=11 // pred_fallthru
          _
        // Predicated region
        $region33: #{attn_block_pallas.1} parent=11 // pred_check
          %p268 = pneg %p174
        $region34: #{attn_block_pallas.1} parent=11 // pred_check_branch
          %270 = sbr.rel (%p268) target = $region36
        $region35: #{attn_block_pallas.1} parent=11 // pred_region
          %s272 = ssub.s32 1024, 1024
          %273 = vsyncadd [#allocation11], %s272
          %s274 = sshll.u32 [#allocation12], 4
          %s275 = int_to_ptr.vmem [resolvable:$true] %s274
          %280 = dma.hbm_to_vmem [thread:$0]  %s6, 1024, %s275, [#allocation11], 64, 64, 4
        $region36: #{attn_block_pallas.1} parent=11 // pred_fallthru
          _
      $region12: #{attn_block_pallas.1} parent=5 // pred_fallthru
        _
      %p281 = scmp.lt.s32.totalorder %s22, 4
      // Predicated region
      $region37: #{attn_block_pallas.1} parent=5 // pred_check
        %p282 = pneg %p281
      $region38: #{attn_block_pallas.1} parent=5 // pred_check_branch
        %284 = sbr.rel (%p282) target = $region40
      $region39: #{attn_block_pallas.1} parent=5 // pred_region
        // Predicated region
        $region41: #{attn_block_pallas.1} parent=39 // pred_check
          %p285 = pneg %p63
        $region42: #{attn_block_pallas.1} parent=39 // pred_check_branch
          %287 = sbr.rel (%p285) target = $region44
        $region43: #{attn_block_pallas.1} parent=39 // pred_region
          %s288 = sand.u32 %s53, 1
          %s289 = scalar_lea.sflag [#allocation3], %s288
          %s290 = sand.u32 %s53, 1
          %s291 = smul.addr %s290, 128
          %s292 = scalar_lea.vmem [#allocation6], %s291
          %s293 = smul.u32 2, %s22
          %s295 = ssub.s32 2048, 2048
          %296 = vsyncadd %s289, %s295
          %s297 = smul.addr %s293, 8
          %s298 = smul.addr %s297, 128
          %s299 = scalar_lea.hbm %s1, %s298
          %s300 = sshll.u32 %s292, 4
          %s301 = int_to_ptr.vmem [resolvable:$true] %s300
          %306 = dma.hbm_to_vmem [thread:$0]  %s299, 2048, %s301, %s289, 128, 128, 8
        $region44: #{attn_block_pallas.1} parent=39 // pred_fallthru
          _
      $region40: #{attn_block_pallas.1} parent=5 // pred_fallthru
        _
      %p307 = scmp.le.s32.totalorder 1, %s22
      %p308 = scmp.lt.s32.totalorder %s22, 5
      %p309 = pnand %p307, %p308
      %p310 = pneg %p309
      // Predicated region
      $region45: #{attn_block_pallas.1} parent=5 // pred_check
        _
      $region46: #{attn_block_pallas.1} parent=5 // pred_check_branch
        %312 = sbr.rel (%p309) target = $region48
      $region47: #{attn_block_pallas.1} parent=5 // pred_region
        %s313 = ssub.s32 %s22, 1
        // Predicated region
        $region49: #{attn_block_pallas.1} parent=47 // pred_check
          %p314 = pneg %p43
        $region50: #{attn_block_pallas.1} parent=47 // pred_check_branch
          %316 = sbr.rel (%p314) target = $region52
        $region51: #{attn_block_pallas.1} parent=47 // pred_region
          %317 = dma.done [#allocation5], 16
        $region52: #{attn_block_pallas.1} parent=47 // pred_fallthru
          _
        %s318 = sand.u32 %s56, 1
        %s319 = scalar_lea.sflag [#allocation3], %s318
        %s320 = sand.u32 %s56, 1
        %s321 = smul.addr %s320, 128
        %s322 = scalar_lea.vmem [#allocation6], %s321
        // Predicated region
        $region53: #{attn_block_pallas.1} parent=47 // pred_check
          %p323 = pneg %p69
        $region54: #{attn_block_pallas.1} parent=47 // pred_check_branch
          %325 = sbr.rel (%p323) target = $region56
        $region55: #{attn_block_pallas.1} parent=47 // pred_region
          %326 = dma.done %s319, 2048
        $region56: #{attn_block_pallas.1} parent=47 // pred_fallthru
          _
        // Predicated region
        $region57: #{attn_block_pallas.1} parent=47 // pred_check
          %p327 = pneg %p90
        $region58: #{attn_block_pallas.1} parent=47 // pred_check_branch
          %329 = sbr.rel (%p327) target = $region60
        $region59: #{attn_block_pallas.1} parent=47 // pred_region
          %330 = dma.done [#allocation8], 3072
        $region60: #{attn_block_pallas.1} parent=47 // pred_fallthru
          _
        // Predicated region
        $region61: #{attn_block_pallas.1} parent=47 // pred_check
          %p331 = pneg %p132
        $region62: #{attn_block_pallas.1} parent=47 // pred_check_branch
          %333 = sbr.rel (%p331) target = $region64
        $region63: #{attn_block_pallas.1} parent=47 // pred_region
          %334 = dma.done [#allocation8], 1024
        $region64: #{attn_block_pallas.1} parent=47 // pred_fallthru
          _
        // Predicated region
        $region65: #{attn_block_pallas.1} parent=47 // pred_check
          %p335 = pneg %p153
        $region66: #{attn_block_pallas.1} parent=47 // pred_check_branch
          %337 = sbr.rel (%p335) target = $region68
        $region67: #{attn_block_pallas.1} parent=47 // pred_region
          %338 = dma.done [#allocation11], 1024
        $region68: #{attn_block_pallas.1} parent=47 // pred_fallthru
          _
        // Predicated region
        $region69: #{attn_block_pallas.1} parent=47 // pred_check
          %p339 = pneg %p174
        $region70: #{attn_block_pallas.1} parent=47 // pred_check_branch
          %341 = sbr.rel (%p339) target = $region72
        $region71: #{attn_block_pallas.1} parent=47 // pred_region
          %342 = dma.done [#allocation11], 1024
        $region72: #{attn_block_pallas.1} parent=47 // pred_fallthru
          _
        %343 = sfence
        %p344 = pneg %p43
        %p345 = pneg %p40
        %s346 = sand.u32 %s56, 1
        %s347 = scalar_lea.sflag [#allocation3], %s346
        %s348 = sand.u32 %s56, 1
        %s349 = smul.addr %s348, 128
        %s350 = scalar_lea.vmem [#allocation6], %s349
        %p351 = pneg %p69
        %p352 = pneg %p66
        %p353 = pneg %p90
        %p354 = pneg %p87
        %p355 = pneg %p111
        %p356 = pneg %p108
        %p357 = pneg %p132
        %p358 = pneg %p129
        %p359 = pneg %p153
        %p360 = pneg %p150
        %p361 = pneg %p174
        %p362 = pneg %p171
        %p363 = pneg %p200
        %p364 = pneg %p197
        %s365 = sand.u32 %s187, 1
        %s366 = scalar_lea.sflag [#allocation4], %s365
        %s367 = sand.u32 %s187, 1
        %s368 = smul.addr %s367, 128
        %s369 = scalar_lea.vmem [#allocation13], %s368
        %s370 = smul.u32 2, %s27
        %s371 = smul.u32 2, %s27
        %s373 = smul.u32 %s27, 2
        %v374 = vld [vmem:[%s322] sm:$0xff]
        %v375 = vld [vmem:[%s322 + $0x8] sm:$0xff]
        %v376 = vld [vmem:[%s322 + $0x10] sm:$0xff]
        %v377 = vld [vmem:[%s322 + $0x18] sm:$0xff]
        %v378 = vld [vmem:[%s322 + $0x20] sm:$0xff]
        %v379 = vld [vmem:[%s322 + $0x28] sm:$0xff]
        %v380 = vld [vmem:[%s322 + $0x30] sm:$0xff]
        %v381 = vld [vmem:[%s322 + $0x38] sm:$0xff]
        %v382 = vld [vmem:[%s322 + $0x40] sm:$0xff]
        %v383 = vld [vmem:[%s322 + $0x48] sm:$0xff]
        %v384 = vld [vmem:[%s322 + $0x50] sm:$0xff]
        %v385 = vld [vmem:[%s322 + $0x58] sm:$0xff]
        %v386 = vld [vmem:[%s322 + $0x60] sm:$0xff]
        %v387 = vld [vmem:[%s322 + $0x68] sm:$0xff]
        %v388 = vld [vmem:[%s322 + $0x70] sm:$0xff]
        %v389 = vld [vmem:[%s322 + $0x78] sm:$0xff]
        %v390 = vpack.c.bf16 %v375, %v374
        %v391 = vpack.c.bf16 %v377, %v376
        %v392 = vpack.c.bf16 %v379, %v378
        %v393 = vpack.c.bf16 %v381, %v380
        %v394 = vpack.c.bf16 %v383, %v382
        %v395 = vpack.c.bf16 %v385, %v384
        %v396 = vpack.c.bf16 %v387, %v386
        %v397 = vpack.c.bf16 %v389, %v388
        %v398 = vld [vmem:[#allocation7] sm:$0xff]
        %v399 = vld [vmem:[#allocation7 + $0x8] sm:$0xf]
        %v400 = vld [vmem:[#allocation7 + $0xc] sm:$0xff]
        %v401 = vld [vmem:[#allocation7 + $0x14] sm:$0xf]
        %v402 = vld [vmem:[#allocation7 + $0x18] sm:$0xff]
        %v403 = vld [vmem:[#allocation7 + $0x20] sm:$0xf]
        %v404 = vld [vmem:[#allocation7 + $0x24] sm:$0xff]
        %v405 = vld [vmem:[#allocation7 + $0x2c] sm:$0xf]
        %v406 = vld [vmem:[#allocation7 + $0x30] sm:$0xff]
        %v407 = vld [vmem:[#allocation7 + $0x38] sm:$0xf]
        %v408 = vld [vmem:[#allocation7 + $0x3c] sm:$0xff]
        %v409 = vld [vmem:[#allocation7 + $0x44] sm:$0xf]
        %v410 = vld [vmem:[#allocation7 + $0x48] sm:$0xff]
        %v411 = vld [vmem:[#allocation7 + $0x50] sm:$0xf]
        %v412 = vld [vmem:[#allocation7 + $0x54] sm:$0xff]
        %v413 = vld [vmem:[#allocation7 + $0x5c] sm:$0xf]
        %v414 = vld [vmem:[#allocation7 + $0x60] sm:$0xff]
        %v415 = vld [vmem:[#allocation7 + $0x68] sm:$0xf]
        %v416 = vld [vmem:[#allocation7 + $0x6c] sm:$0xff]
        %v417 = vld [vmem:[#allocation7 + $0x74] sm:$0xf]
        %v418 = vld [vmem:[#allocation7 + $0x78] sm:$0xff]
        %v419 = vld [vmem:[#allocation7 + $0x80] sm:$0xf]
        %v420 = vld [vmem:[#allocation7 + $0x84] sm:$0xff]
        %v421 = vld [vmem:[#allocation7 + $0x8c] sm:$0xf]
        %v422 = vld [vmem:[#allocation7 + $0x90] sm:$0xff]
        %v423 = vld [vmem:[#allocation7 + $0x98] sm:$0xf]
        %v424 = vld [vmem:[#allocation7 + $0x9c] sm:$0xff]
        %v425 = vld [vmem:[#allocation7 + $0xa4] sm:$0xf]
        %v426 = vld [vmem:[#allocation7 + $0xa8] sm:$0xff]
        %v427 = vld [vmem:[#allocation7 + $0xb0] sm:$0xf]
        %v428 = vld [vmem:[#allocation7 + $0xb4] sm:$0xff]
        %v429 = vld [vmem:[#allocation7 + $0xbc] sm:$0xf]
        %v430 = vld [vmem:[%s3] sm:$0x7]
        %v432 = vlaneseq
        %v433 = vshrl.u32 %v432, 7
        %v434 = vsub.s32 0, %v433
        %v435 = vrot.slane %v430, %v434
        %v436 = vlaneseq
        %v437 = vshrl.u32 %v436, 7
        %v438 = vsub.s32 1, %v437
        %v439 = vrot.slane %v430, %v438
        %v440 = vlaneseq
        %v441 = vshrl.u32 %v440, 7
        %v442 = vsub.s32 2, %v441
        %v443 = vrot.slane %v430, %v442
        %v479 = vunpack.c.l.b16 %v398
        %v480 = vunpack.c.h.b16 %v398
        %v481 = vunpack.c.l.b16 %v399
        %v482 = vunpack.c.l.b16 %v400
        %v483 = vunpack.c.h.b16 %v400
        %v484 = vunpack.c.l.b16 %v401
        %v485 = vunpack.c.l.b16 %v402
        %v486 = vunpack.c.h.b16 %v402
        %v487 = vunpack.c.l.b16 %v403
        %v488 = vunpack.c.l.b16 %v404
        %v489 = vunpack.c.h.b16 %v404
        %v490 = vunpack.c.l.b16 %v405
        %v491 = vunpack.c.l.b16 %v406
        %v492 = vunpack.c.h.b16 %v406
        %v493 = vunpack.c.l.b16 %v407
        %v494 = vunpack.c.l.b16 %v408
        %v495 = vunpack.c.h.b16 %v408
        %v496 = vunpack.c.l.b16 %v409
        %v497 = vunpack.c.l.b16 %v410
        %v498 = vunpack.c.h.b16 %v410
        %v499 = vunpack.c.l.b16 %v411
        %v500 = vunpack.c.l.b16 %v412
        %v501 = vunpack.c.h.b16 %v412
        %v502 = vunpack.c.l.b16 %v413
        %v503 = vunpack.c.l.b16 %v414
        %v504 = vunpack.c.h.b16 %v414
        %v505 = vunpack.c.l.b16 %v415
        %v506 = vunpack.c.l.b16 %v416
        %v507 = vunpack.c.h.b16 %v416
        %v508 = vunpack.c.l.b16 %v417
        %v509 = vunpack.c.l.b16 %v418
        %v510 = vunpack.c.h.b16 %v418
        %v511 = vunpack.c.l.b16 %v419
        %v512 = vunpack.c.l.b16 %v420
        %v513 = vunpack.c.h.b16 %v420
        %v514 = vunpack.c.l.b16 %v421
        %v515 = vunpack.c.l.b16 %v422
        %v516 = vunpack.c.h.b16 %v422
        %v517 = vunpack.c.l.b16 %v423
        %v518 = vunpack.c.l.b16 %v424
        %v519 = vunpack.c.h.b16 %v424
        %v520 = vunpack.c.l.b16 %v425
        %v521 = vunpack.c.l.b16 %v426
        %v522 = vunpack.c.h.b16 %v426
        %v523 = vunpack.c.l.b16 %v427
        %v524 = vunpack.c.l.b16 %v428
        %v525 = vunpack.c.h.b16 %v428
        %v526 = vunpack.c.l.b16 %v429
        %v527 = vpack.c.b16 %v482, %v479
        %v528 = vpack.c.b16 %v483, %v480
        %v529 = vpack.c.b16 %v484, %v481
        %v530 = vpack.c.b16 %v488, %v485
        %v531 = vpack.c.b16 %v489, %v486
        %v532 = vpack.c.b16 %v490, %v487
        %v533 = vpack.c.b16 %v494, %v491
        %v534 = vpack.c.b16 %v495, %v492
        %v535 = vpack.c.b16 %v496, %v493
        %v536 = vpack.c.b16 %v500, %v497
        %v537 = vpack.c.b16 %v501, %v498
        %v538 = vpack.c.b16 %v502, %v499
        %v539 = vpack.c.b16 %v506, %v503
        %v540 = vpack.c.b16 %v507, %v504
        %v541 = vpack.c.b16 %v508, %v505
        %v542 = vpack.c.b16 %v512, %v509
        %v543 = vpack.c.b16 %v513, %v510
        %v544 = vpack.c.b16 %v514, %v511
        %v545 = vpack.c.b16 %v518, %v515
        %v546 = vpack.c.b16 %v519, %v516
        %v547 = vpack.c.b16 %v520, %v517
        %v548 = vpack.c.b16 %v524, %v521
        %v549 = vpack.c.b16 %v525, %v522
        %v550 = vpack.c.b16 %v526, %v523
        %575 = vmatprep.subr.bf16.mxu0 %v528
        %576 = vmatpush1.bf16.msra.mxu0 %v527
        %577 = vmatprep.subr.bf16.mxu0 %v531
        %578 = vmatpush1.bf16.msra.mxu0 %v530
        %579 = vmatprep.subr.bf16.mxu0 %v534
        %580 = vmatpush1.bf16.msra.mxu0 %v533
        %581 = vmatprep.subr.bf16.mxu0 %v537
        %582 = vmatpush1.bf16.msra.mxu0 %v536
        %583 = vmatprep.subr.bf16.mxu0 %v540
        %584 = vmatpush1.bf16.msra.mxu0 %v539
        %585 = vmatprep.subr.bf16.mxu0 %v543
        %586 = vmatpush1.bf16.msra.mxu0 %v542
        %587 = vmatprep.subr.bf16.mxu0 %v546
        %588 = vmatpush1.bf16.msra.mxu0 %v545
        %589 = vmatprep.subr.bf16.mxu0 %v549
        %590 = vmatpush1.bf16.msra.mxu0 %v548
        %591 = vmatprep.subr.bf16.mxu0 0
        %592 = vmatpush1.bf16.msra.mxu0 0
        %593 = vmatprep.subr.bf16.mxu0 0
        %594 = vmatpush1.bf16.msra.mxu0 0
        %595 = vmatprep.subr.bf16.mxu0 0
        %596 = vmatpush1.bf16.msra.mxu0 0
        %597 = vmatprep.subr.bf16.mxu0 0
        %598 = vmatpush1.bf16.msra.mxu0 0
        %599 = vmatprep.subr.bf16.mxu0 0
        %600 = vmatpush1.bf16.msra.mxu0 0
        %601 = vmatprep.subr.bf16.mxu0 0
        %602 = vmatpush1.bf16.msra.mxu0 0
        %603 = vmatprep.subr.bf16.mxu0 0
        %604 = vmatpush1.bf16.msra.mxu0 0
        %605 = vmatprep.subr.bf16.mxu0 0
        %606 = vmatpush1.bf16.msra.mxu0 0
        %607 = vmatprep.mubr.bf16.mxu0 0
        %608 = vmatmul.mubr.bf16.gmra.mrb[0].mxu0 %v390
        %v609 = vpop.f32.mrb[0].mxu0
        %v610 = vadd.f32 %v435, %v609
        %v611 = vpop.f32.mrb[0].mxu0
        %v612 = vadd.f32 %v439, %v611
        %v613 = vpop.f32.mrb[0].mxu0
        %v614 = vadd.f32 %v435, %v613
        %v615 = vpop.f32.mrb[0].mxu0
        %v616 = vadd.f32 %v439, %v615
        %617 = vmatprep.mubr.bf16.mxu0 0
        %618 = vmatmul.mubr.bf16.gmra.mrb[0].mxu0 %v391
        %v619 = vpop.f32.mrb[0].mxu0
        %v620 = vadd.f32 %v435, %v619
        %v621 = vpop.f32.mrb[0].mxu0
        %v622 = vadd.f32 %v439, %v621
        %v623 = vpop.f32.mrb[0].mxu0
        %v624 = vadd.f32 %v435, %v623
        %v625 = vpop.f32.mrb[0].mxu0
        %v626 = vadd.f32 %v439, %v625
        %627 = vmatprep.mubr.bf16.mxu0 0
        %628 = vmatmul.mubr.bf16.gmra.mrb[0].mxu0 %v392
        %v629 = vpop.f32.mrb[0].mxu0
        %v630 = vadd.f32 %v435, %v629
        %v631 = vpop.f32.mrb[0].mxu0
        %v632 = vadd.f32 %v439, %v631
        %v633 = vpop.f32.mrb[0].mxu0
        %v634 = vadd.f32 %v435, %v633
        %v635 = vpop.f32.mrb[0].mxu0
        %v636 = vadd.f32 %v439, %v635
        %637 = vmatprep.mubr.bf16.mxu0 0
        %638 = vmatmul.mubr.bf16.gmra.mrb[0].mxu0 %v393
        %v639 = vpop.f32.mrb[0].mxu0
        %v640 = vadd.f32 %v435, %v639
        %v641 = vpop.f32.mrb[0].mxu0
        %v642 = vadd.f32 %v439, %v641
        %v643 = vpop.f32.mrb[0].mxu0
        %v644 = vadd.f32 %v435, %v643
        %v645 = vpop.f32.mrb[0].mxu0
        %v646 = vadd.f32 %v439, %v645
        %647 = vmatprep.mubr.bf16.mxu0 0
        %648 = vmatmul.mubr.bf16.gmra.mrb[0].mxu0 %v394
        %v649 = vpop.f32.mrb[0].mxu0
        %v650 = vadd.f32 %v435, %v649
        %v651 = vpop.f32.mrb[0].mxu0
        %v652 = vadd.f32 %v439, %v651
        %v653 = vpop.f32.mrb[0].mxu0
        %v654 = vadd.f32 %v435, %v653
        %v655 = vpop.f32.mrb[0].mxu0
        %v656 = vadd.f32 %v439, %v655
        %657 = vmatprep.mubr.bf16.mxu0 0
        %658 = vmatmul.mubr.bf16.gmra.mrb[0].mxu0 %v395
        %v659 = vpop.f32.mrb[0].mxu0
        %v660 = vadd.f32 %v435, %v659
        %v661 = vpop.f32.mrb[0].mxu0
        %v662 = vadd.f32 %v439, %v661
        %v663 = vpop.f32.mrb[0].mxu0
        %v664 = vadd.f32 %v435, %v663
        %v665 = vpop.f32.mrb[0].mxu0
        %v666 = vadd.f32 %v439, %v665
        %667 = vmatprep.mubr.bf16.mxu0 0
        %668 = vmatmul.mubr.bf16.gmra.mrb[0].mxu0 %v396
        %v669 = vpop.f32.mrb[0].mxu0
        %v670 = vadd.f32 %v435, %v669
        %v671 = vpop.f32.mrb[0].mxu0
        %v672 = vadd.f32 %v439, %v671
        %v673 = vpop.f32.mrb[0].mxu0
        %v674 = vadd.f32 %v435, %v673
        %v675 = vpop.f32.mrb[0].mxu0
        %v676 = vadd.f32 %v439, %v675
        %677 = vmatprep.mubr.bf16.mxu0 0
        %678 = vmatmul.mubr.bf16.gmra.mrb[0].mxu0 %v397
        %v679 = vpop.f32.mrb[0].mxu0
        %v680 = vadd.f32 %v435, %v679
        %v681 = vpop.f32.mrb[0].mxu0
        %v682 = vadd.f32 %v439, %v681
        %v683 = vpop.f32.mrb[0].mxu0
        %v684 = vadd.f32 %v435, %v683
        %v685 = vpop.f32.mrb[0].mxu0
        %v686 = vadd.f32 %v439, %v685
        %687 = vdwg.mxu0
        %688 = vmatprep.subr.bf16.mxu0 0
        %689 = vmatpush1.bf16.msra.mxu0 %v529
        %690 = vmatprep.subr.bf16.mxu0 0
        %691 = vmatpush1.bf16.msra.mxu0 %v532
        %692 = vmatprep.subr.bf16.mxu0 0
        %693 = vmatpush1.bf16.msra.mxu0 %v535
        %694 = vmatprep.subr.bf16.mxu0 0
        %695 = vmatpush1.bf16.msra.mxu0 %v538
        %696 = vmatprep.subr.bf16.mxu0 0
        %697 = vmatpush1.bf16.msra.mxu0 %v541
        %698 = vmatprep.subr.bf16.mxu0 0
        %699 = vmatpush1.bf16.msra.mxu0 %v544
        %700 = vmatprep.subr.bf16.mxu0 0
        %701 = vmatpush1.bf16.msra.mxu0 %v547
        %702 = vmatprep.subr.bf16.mxu0 0
        %703 = vmatpush1.bf16.msra.mxu0 %v550
        %704 = vmatprep.subr.bf16.mxu0 0
        %705 = vmatpush1.bf16.msra.mxu0 0
        %706 = vmatprep.subr.bf16.mxu0 0
        %707 = vmatpush1.bf16.msra.mxu0 0
        %708 = vmatprep.subr.bf16.mxu0 0
        %709 = vmatpush1.bf16.msra.mxu0 0
        %710 = vmatprep.subr.bf16.mxu0 0
        %711 = vmatpush1.bf16.msra.mxu0 0
        %712 = vmatprep.subr.bf16.mxu0 0
        %713 = vmatpush1.bf16.msra.mxu0 0
        %714 = vmatprep.subr.bf16.mxu0 0
        %715 = vmatpush1.bf16.msra.mxu0 0
        %716 = vmatprep.subr.bf16.mxu0 0
        %717 = vmatpush1.bf16.msra.mxu0 0
        %718 = vmatprep.subr.bf16.mxu0 0
        %719 = vmatpush1.bf16.msra.mxu0 0
        %720 = vmatprep.mubr.bf16.mxu0 0
        %721 = vmatmul.mubr.bf16.gmra.mrb[0].mxu0 %v390
        %v722 = vpop.f32.mrb[0].mxu0
        %v723 = vadd.f32 %v443, %v722
        %v724 = vpop.f32.mrb[0].mxu0
        %v725 = vpop.f32.mrb[0].mxu0
        %v726 = vadd.f32 %v443, %v725
        %v727 = vpop.f32.mrb[0].mxu0
        %728 = vmatprep.mubr.bf16.mxu0 0
        %729 = vmatmul.mubr.bf16.gmra.mrb[0].mxu0 %v391
        %v730 = vpop.f32.mrb[0].mxu0
        %v731 = vadd.f32 %v443, %v730
        %v732 = vpop.f32.mrb[0].mxu0
        %v733 = vpop.f32.mrb[0].mxu0
        %v734 = vadd.f32 %v443, %v733
        %v735 = vpop.f32.mrb[0].mxu0
        %736 = vmatprep.mubr.bf16.mxu0 0
        %737 = vmatmul.mubr.bf16.gmra.mrb[0].mxu0 %v392
        %v738 = vpop.f32.mrb[0].mxu0
        %v739 = vadd.f32 %v443, %v738
        %v740 = vpop.f32.mrb[0].mxu0
        %v741 = vpop.f32.mrb[0].mxu0
        %v742 = vadd.f32 %v443, %v741
        %v743 = vpop.f32.mrb[0].mxu0
        %744 = vmatprep.mubr.bf16.mxu0 0
        %745 = vmatmul.mubr.bf16.gmra.mrb[0].mxu0 %v393
        %v746 = vpop.f32.mrb[0].mxu0
        %v747 = vadd.f32 %v443, %v746
        %v748 = vpop.f32.mrb[0].mxu0
        %v749 = vpop.f32.mrb[0].mxu0
        %v750 = vadd.f32 %v443, %v749
        %v751 = vpop.f32.mrb[0].mxu0
        %752 = vmatprep.mubr.bf16.mxu0 0
        %753 = vmatmul.mubr.bf16.gmra.mrb[0].mxu0 %v394
        %v754 = vpop.f32.mrb[0].mxu0
        %v755 = vadd.f32 %v443, %v754
        %v756 = vpop.f32.mrb[0].mxu0
        %v757 = vpop.f32.mrb[0].mxu0
        %v758 = vadd.f32 %v443, %v757
        %v759 = vpop.f32.mrb[0].mxu0
        %760 = vmatprep.mubr.bf16.mxu0 0
        %761 = vmatmul.mubr.bf16.gmra.mrb[0].mxu0 %v395
        %v762 = vpop.f32.mrb[0].mxu0
        %v763 = vadd.f32 %v443, %v762
        %v764 = vpop.f32.mrb[0].mxu0
        %v765 = vpop.f32.mrb[0].mxu0
        %v766 = vadd.f32 %v443, %v765
        %v767 = vpop.f32.mrb[0].mxu0
        %768 = vmatprep.mubr.bf16.mxu0 0
        %769 = vmatmul.mubr.bf16.gmra.mrb[0].mxu0 %v396
        %v770 = vpop.f32.mrb[0].mxu0
        %v771 = vadd.f32 %v443, %v770
        %v772 = vpop.f32.mrb[0].mxu0
        %v773 = vpop.f32.mrb[0].mxu0
        %v774 = vadd.f32 %v443, %v773
        %v775 = vpop.f32.mrb[0].mxu0
        %776 = vmatprep.mubr.bf16.mxu0 0
        %777 = vmatmul.mubr.bf16.gmra.mrb[0].mxu0 %v397
        %v778 = vpop.f32.mrb[0].mxu0
        %v779 = vadd.f32 %v443, %v778
        %v780 = vpop.f32.mrb[0].mxu0
        %v781 = vpop.f32.mrb[0].mxu0
        %v782 = vadd.f32 %v443, %v781
        %v783 = vpop.f32.mrb[0].mxu0
        %784 = vdwg.mxu0
        %v785 = vpack.c.bf16 %v614, %v610
        %v786 = vpack.c.bf16 %v616, %v612
        %v787 = vpack.c.bf16 %v726, %v723
        %v788 = vpack.c.bf16 %v624, %v620
        %v789 = vpack.c.bf16 %v626, %v622
        %v790 = vpack.c.bf16 %v734, %v731
        %v791 = vpack.c.bf16 %v634, %v630
        %v792 = vpack.c.bf16 %v636, %v632
        %v793 = vpack.c.bf16 %v742, %v739
        %v794 = vpack.c.bf16 %v644, %v640
        %v795 = vpack.c.bf16 %v646, %v642
        %v796 = vpack.c.bf16 %v750, %v747
        %v797 = vpack.c.bf16 %v654, %v650
        %v798 = vpack.c.bf16 %v656, %v652
        %v799 = vpack.c.bf16 %v758, %v755
        %v800 = vpack.c.bf16 %v664, %v660
        %v801 = vpack.c.bf16 %v666, %v662
        %v802 = vpack.c.bf16 %v766, %v763
        %v803 = vpack.c.bf16 %v674, %v670
        %v804 = vpack.c.bf16 %v676, %v672
        %v805 = vpack.c.bf16 %v774, %v771
        %v806 = vpack.c.bf16 %v684, %v680
        %v807 = vpack.c.bf16 %v686, %v682
        %v808 = vpack.c.bf16 %v782, %v779
        %vm809 = vcmask 261120
        %v811 = vsel %vm809, %v785, 0
        %v814 = vsel %vm809, %v788, 0
        %v817 = vsel %vm809, %v791, 0
        %v820 = vsel %vm809, %v794, 0
        %v823 = vsel %vm809, %v786, 0
        %v826 = vsel %vm809, %v789, 0
        %v829 = vsel %vm809, %v792, 0
        %v832 = vsel %vm809, %v795, 0
        %834 = vmatprep.subr.bf16.mxu0 0
        %835 = vmatpush1.bf16.xpose.msra.mxu0 %v823
        %836 = vmatprep.subr.bf16.mxu0 0
        %837 = vmatpush1.bf16.xpose.msra.mxu0 %v826
        %838 = vmatprep.subr.bf16.mxu0 0
        %839 = vmatpush1.bf16.xpose.msra.mxu0 %v829
        %840 = vmatprep.subr.bf16.mxu0 0
        %841 = vmatpush1.bf16.xpose.msra.mxu0 %v832
        %842 = vmatprep.subr.bf16.mxu0 0
        %843 = vmatpush1.bf16.xpose.msra.mxu0 0
        %844 = vmatprep.subr.bf16.mxu0 0
        %845 = vmatpush1.bf16.xpose.msra.mxu0 0
        %846 = vmatprep.subr.bf16.mxu0 0
        %847 = vmatpush1.bf16.xpose.msra.mxu0 0
        %848 = vmatprep.subr.bf16.mxu0 0
        %849 = vmatpush1.bf16.xpose.msra.mxu0 0
        %850 = vmatprep.subr.bf16.mxu0 0
        %851 = vmatpush1.bf16.xpose.msra.mxu0 0
        %852 = vmatprep.subr.bf16.mxu0 0
        %853 = vmatpush1.bf16.xpose.msra.mxu0 0
        %854 = vmatprep.subr.bf16.mxu0 0
        %855 = vmatpush1.bf16.xpose.msra.mxu0 0
        %856 = vmatprep.subr.bf16.mxu0 0
        %857 = vmatpush1.bf16.xpose.msra.mxu0 0
        %858 = vmatprep.subr.bf16.mxu0 0
        %859 = vmatpush1.bf16.xpose.msra.mxu0 0
        %860 = vmatprep.subr.bf16.mxu0 0
        %861 = vmatpush1.bf16.xpose.msra.mxu0 0
        %862 = vmatprep.subr.bf16.mxu0 0
        %863 = vmatpush1.bf16.xpose.msra.mxu0 0
        %864 = vmatprep.subr.bf16.mxu0 0
        %865 = vmatpush1.bf16.xpose.msra.mxu0 0
        %866 = vmatprep.mubr.bf16.mxu0 0
        %867 = vmatmul.mubr.bf16.gmra.mrb[0].mxu0 %v811
        %v868 = vpop.f32.mrb[0].mxu0
        %v869 = vadd.f32 0.0, %v868
        %v870 = vpop.f32.mrb[0].mxu0
        %v871 = vpop.f32.mrb[0].mxu0
        %v872 = vadd.f32 0.0, %v871
        %v873 = vpop.f32.mrb[0].mxu0
        %874 = vmatprep.mubr.bf16.mxu0 0
        %875 = vmatmul.mubr.bf16.gmra.mrb[0].mxu0 %v814
        %v876 = vpop.f32.mrb[0].mxu0
        %v877 = vadd.f32 0.0, %v876
        %v878 = vpop.f32.mrb[0].mxu0
        %v879 = vpop.f32.mrb[0].mxu0
        %v880 = vadd.f32 0.0, %v879
        %v881 = vpop.f32.mrb[0].mxu0
        %882 = vmatprep.mubr.bf16.mxu0 0
        %883 = vmatmul.mubr.bf16.gmra.mrb[0].mxu0 %v817
        %v884 = vpop.f32.mrb[0].mxu0
        %v885 = vadd.f32 0.0, %v884
        %v886 = vpop.f32.mrb[0].mxu0
        %v887 = vpop.f32.mrb[0].mxu0
        %v888 = vadd.f32 0.0, %v887
        %v889 = vpop.f32.mrb[0].mxu0
        %890 = vmatprep.mubr.bf16.mxu0 0
        %891 = vmatmul.mubr.bf16.gmra.mrb[0].mxu0 %v820
        %v892 = vpop.f32.mrb[0].mxu0
        %v893 = vadd.f32 0.0, %v892
        %v894 = vpop.f32.mrb[0].mxu0
        %v895 = vpop.f32.mrb[0].mxu0
        %v896 = vadd.f32 0.0, %v895
        %v897 = vpop.f32.mrb[0].mxu0
        %898 = vdwg.mxu0
        %vm899 = vcmask 523264
        %v900 = vsel %vm899, %v869, -inf
        %901 = vmax.xlane.f32.xlu0 %v900
        %v902 = vpop.xlane.xlu0 %901
        %v903 = vsel %vm899, %v872, -inf
        %904 = vmax.xlane.f32.xlu0 %v903
        %v905 = vpop.xlane.xlu0 %904
        %v906 = vsel %vm899, %v877, -inf
        %907 = vmax.xlane.f32.xlu0 %v906
        %v908 = vpop.xlane.xlu0 %907
        %v909 = vsel %vm899, %v880, -inf
        %910 = vmax.xlane.f32.xlu0 %v909
        %v911 = vpop.xlane.xlu0 %910
        %v912 = vsel %vm899, %v885, -inf
        %913 = vmax.xlane.f32.xlu0 %v912
        %v914 = vpop.xlane.xlu0 %913
        %v915 = vsel %vm899, %v888, -inf
        %916 = vmax.xlane.f32.xlu0 %v915
        %v917 = vpop.xlane.xlu0 %916
        %v918 = vsel %vm899, %v893, -inf
        %919 = vmax.xlane.f32.xlu0 %v918
        %v920 = vpop.xlane.xlu0 %919
        %v921 = vsel %vm899, %v896, -inf
        %922 = vmax.xlane.f32.xlu0 %v921
        %v923 = vpop.xlane.xlu0 %922
        %v924 = vsub.f32 %v869, %v902
        %v925 = vsub.f32 %v872, %v905
        %v926 = vsub.f32 %v877, %v908
        %v927 = vsub.f32 %v880, %v911
        %v928 = vsub.f32 %v885, %v914
        %v929 = vsub.f32 %v888, %v917
        %v930 = vsub.f32 %v893, %v920
        %v931 = vsub.f32 %v896, %v923
        %v932 = vmul.f32 %v924, 1.442695
        %v933 = vpow.pop %v932
        %v934 = vmul.f32 %v925, 1.442695
        %v935 = vpow.pop %v934
        %v936 = vmul.f32 %v926, 1.442695
        %v937 = vpow.pop %v936
        %v938 = vmul.f32 %v927, 1.442695
        %v939 = vpow.pop %v938
        %v940 = vmul.f32 %v928, 1.442695
        %v941 = vpow.pop %v940
        %v942 = vmul.f32 %v929, 1.442695
        %v943 = vpow.pop %v942
        %v944 = vmul.f32 %v930, 1.442695
        %v945 = vpow.pop %v944
        %v946 = vmul.f32 %v931, 1.442695
        %v947 = vpow.pop %v946
        %v948 = vsel %vm899, %v933, 0.0
        %949 = vadd.xlane.f32.xlu0 %v948
        %v950 = vpop.xlane.xlu0 %949
        %v951 = vsel %vm899, %v935, 0.0
        %952 = vadd.xlane.f32.xlu0 %v951
        %v953 = vpop.xlane.xlu0 %952
        %v954 = vsel %vm899, %v937, 0.0
        %955 = vadd.xlane.f32.xlu0 %v954
        %v956 = vpop.xlane.xlu0 %955
        %v957 = vsel %vm899, %v939, 0.0
        %958 = vadd.xlane.f32.xlu0 %v957
        %v959 = vpop.xlane.xlu0 %958
        %v960 = vsel %vm899, %v941, 0.0
        %961 = vadd.xlane.f32.xlu0 %v960
        %v962 = vpop.xlane.xlu0 %961
        %v963 = vsel %vm899, %v943, 0.0
        %964 = vadd.xlane.f32.xlu0 %v963
        %v965 = vpop.xlane.xlu0 %964
        %v966 = vsel %vm899, %v945, 0.0
        %967 = vadd.xlane.f32.xlu0 %v966
        %v968 = vpop.xlane.xlu0 %967
        %v969 = vsel %vm899, %v947, 0.0
        %970 = vadd.xlane.f32.xlu0 %v969
        %v971 = vpop.xlane.xlu0 %970
        %v972 = vrcp.pop %v950
        %v973 = vrcp.pop %v953
        %v974 = vrcp.pop %v956
        %v975 = vrcp.pop %v959
        %v976 = vrcp.pop %v962
        %v977 = vrcp.pop %v965
        %v978 = vrcp.pop %v968
        %v979 = vrcp.pop %v971
        %v980 = vmul.f32 %v933, %v972
        %v981 = vmul.f32 %v935, %v973
        %v982 = vmul.f32 %v937, %v974
        %v983 = vmul.f32 %v939, %v975
        %v984 = vmul.f32 %v941, %v976
        %v985 = vmul.f32 %v943, %v977
        %v986 = vmul.f32 %v945, %v978
        %v987 = vmul.f32 %v947, %v979
        %v988 = vpack.c.bf16 %v981, %v980
        %v989 = vpack.c.bf16 %v983, %v982
        %v990 = vpack.c.bf16 %v985, %v984
        %v991 = vpack.c.bf16 %v987, %v986
        %v993 = vsel %vm899, %v988, 0
        %v996 = vsel %vm899, %v989, 0
        %v999 = vsel %vm899, %v990, 0
        %v1002 = vsel %vm899, %v991, 0
        %1004 = vmatprep.subr.bf16.mxu0 0
        %1005 = vmatpush1.bf16.msra.mxu0 %v787
        %1006 = vmatprep.subr.bf16.mxu0 0
        %1007 = vmatpush1.bf16.msra.mxu0 %v790
        %1008 = vmatprep.subr.bf16.mxu0 0
        %1009 = vmatpush1.bf16.msra.mxu0 %v793
        %1010 = vmatprep.subr.bf16.mxu0 0
        %1011 = vmatpush1.bf16.msra.mxu0 %v796
        %1012 = vmatprep.subr.bf16.mxu0 0
        %1013 = vmatpush1.bf16.msra.mxu0 0
        %1014 = vmatprep.subr.bf16.mxu0 0
        %1015 = vmatpush1.bf16.msra.mxu0 0
        %1016 = vmatprep.subr.bf16.mxu0 0
        %1017 = vmatpush1.bf16.msra.mxu0 0
        %1018 = vmatprep.subr.bf16.mxu0 0
        %1019 = vmatpush1.bf16.msra.mxu0 0
        %1020 = vmatprep.subr.bf16.mxu0 0
        %1021 = vmatpush1.bf16.msra.mxu0 0
        %1022 = vmatprep.subr.bf16.mxu0 0
        %1023 = vmatpush1.bf16.msra.mxu0 0
        %1024 = vmatprep.subr.bf16.mxu0 0
        %1025 = vmatpush1.bf16.msra.mxu0 0
        %1026 = vmatprep.subr.bf16.mxu0 0
        %1027 = vmatpush1.bf16.msra.mxu0 0
        %1028 = vmatprep.subr.bf16.mxu0 0
        %1029 = vmatpush1.bf16.msra.mxu0 0
        %1030 = vmatprep.subr.bf16.mxu0 0
        %1031 = vmatpush1.bf16.msra.mxu0 0
        %1032 = vmatprep.subr.bf16.mxu0 0
        %1033 = vmatpush1.bf16.msra.mxu0 0
        %1034 = vmatprep.subr.bf16.mxu0 0
        %1035 = vmatpush1.bf16.msra.mxu0 0
        %1036 = vmatprep.mubr.bf16.mxu0 0
        %1037 = vmatmul.mubr.bf16.gmra.mrb[0].mxu0 %v993
        %v1038 = vpop.f32.mrb[0].mxu0
        %v1039 = vadd.f32 0.0, %v1038
        %v1040 = vpop.f32.mrb[0].mxu0
        %v1041 = vpop.f32.mrb[0].mxu0
        %v1042 = vadd.f32 0.0, %v1041
        %v1043 = vpop.f32.mrb[0].mxu0
        %1044 = vmatprep.mubr.bf16.mxu0 0
        %1045 = vmatmul.mubr.bf16.gmra.mrb[0].mxu0 %v996
        %v1046 = vpop.f32.mrb[0].mxu0
        %v1047 = vadd.f32 0.0, %v1046
        %v1048 = vpop.f32.mrb[0].mxu0
        %v1049 = vpop.f32.mrb[0].mxu0
        %v1050 = vadd.f32 0.0, %v1049
        %v1051 = vpop.f32.mrb[0].mxu0
        %1052 = vmatprep.mubr.bf16.mxu0 0
        %1053 = vmatmul.mubr.bf16.gmra.mrb[0].mxu0 %v999
        %v1054 = vpop.f32.mrb[0].mxu0
        %v1055 = vadd.f32 0.0, %v1054
        %v1056 = vpop.f32.mrb[0].mxu0
        %v1057 = vpop.f32.mrb[0].mxu0
        %v1058 = vadd.f32 0.0, %v1057
        %v1059 = vpop.f32.mrb[0].mxu0
        %1060 = vmatprep.mubr.bf16.mxu0 0
        %1061 = vmatmul.mubr.bf16.gmra.mrb[0].mxu0 %v1002
        %v1062 = vpop.f32.mrb[0].mxu0
        %v1063 = vadd.f32 0.0, %v1062
        %v1064 = vpop.f32.mrb[0].mxu0
        %v1065 = vpop.f32.mrb[0].mxu0
        %v1066 = vadd.f32 0.0, %v1065
        %v1067 = vpop.f32.mrb[0].mxu0
        %1068 = vdwg.mxu0
        %v1069 = vpack.c.bf16 %v1042, %v1039
        %v1070 = vpack.c.bf16 %v1050, %v1047
        %v1071 = vpack.c.bf16 %v1058, %v1055
        %v1072 = vpack.c.bf16 %v1066, %v1063
        %v1073 = vld [vmem:[#allocation9] sm:$0xf]
        %v1074 = vld [vmem:[#allocation9 + $0x4] sm:$0xf]
        %v1075 = vld [vmem:[#allocation9 + $0x8] sm:$0xf]
        %v1076 = vld [vmem:[#allocation9 + $0xc] sm:$0xf]
        %v1081 = vunpack.c.l.b16 %v1073
        %v1082 = vunpack.c.l.b16 %v1074
        %v1083 = vunpack.c.l.b16 %v1075
        %v1084 = vunpack.c.l.b16 %v1076
        %v1085 = vpack.c.b16 %v1082, %v1081
        %v1086 = vpack.c.b16 %v1084, %v1083
        %v1090 = vsel %vm809, %v1069, 0
        %v1093 = vsel %vm809, %v1070, 0
        %v1096 = vsel %vm809, %v1071, 0
        %v1099 = vsel %vm809, %v1072, 0
        %1101 = vmatprep.subr.bf16.mxu0 0
        %1102 = vmatpush1.bf16.msra.mxu0 %v1085
        %1103 = vmatprep.subr.bf16.mxu0 0
        %1104 = vmatpush1.bf16.msra.mxu0 %v1086
        %1105 = vmatprep.subr.bf16.mxu0 0
        %1106 = vmatpush1.bf16.msra.mxu0 0
        %1107 = vmatprep.subr.bf16.mxu0 0
        %1108 = vmatpush1.bf16.msra.mxu0 0
        %1109 = vmatprep.subr.bf16.mxu0 0
        %1110 = vmatpush1.bf16.msra.mxu0 0
        %1111 = vmatprep.subr.bf16.mxu0 0
        %1112 = vmatpush1.bf16.msra.mxu0 0
        %1113 = vmatprep.subr.bf16.mxu0 0
        %1114 = vmatpush1.bf16.msra.mxu0 0
        %1115 = vmatprep.subr.bf16.mxu0 0
        %1116 = vmatpush1.bf16.msra.mxu0 0
        %1117 = vmatprep.subr.bf16.mxu0 0
        %1118 = vmatpush1.bf16.msra.mxu0 0
        %1119 = vmatprep.subr.bf16.mxu0 0
        %1120 = vmatpush1.bf16.msra.mxu0 0
        %1121 = vmatprep.subr.bf16.mxu0 0
        %1122 = vmatpush1.bf16.msra.mxu0 0
        %1123 = vmatprep.subr.bf16.mxu0 0
        %1124 = vmatpush1.bf16.msra.mxu0 0
        %1125 = vmatprep.subr.bf16.mxu0 0
        %1126 = vmatpush1.bf16.msra.mxu0 0
        %1127 = vmatprep.subr.bf16.mxu0 0
        %1128 = vmatpush1.bf16.msra.mxu0 0
        %1129 = vmatprep.subr.bf16.mxu0 0
        %1130 = vmatpush1.bf16.msra.mxu0 0
        %1131 = vmatprep.subr.bf16.mxu0 0
        %1132 = vmatpush1.bf16.msra.mxu0 0
        %1133 = vmatprep.mubr.bf16.mxu0 0
        %1134 = vmatmul.mubr.bf16.gmra.mrb[0].mxu0 %v1090
        %v1135 = vpop.f32.mrb[0].mxu0
        %v1136 = vadd.f32 0.0, %v1135
        %v1137 = vpop.f32.mrb[0].mxu0
        %v1138 = vpop.f32.mrb[0].mxu0
        %v1139 = vadd.f32 0.0, %v1138
        %v1140 = vpop.f32.mrb[0].mxu0
        %1141 = vmatprep.mubr.bf16.mxu0 0
        %1142 = vmatmul.mubr.bf16.gmra.mrb[0].mxu0 %v1093
        %v1143 = vpop.f32.mrb[0].mxu0
        %v1144 = vadd.f32 0.0, %v1143
        %v1145 = vpop.f32.mrb[0].mxu0
        %v1146 = vpop.f32.mrb[0].mxu0
        %v1147 = vadd.f32 0.0, %v1146
        %v1148 = vpop.f32.mrb[0].mxu0
        %1149 = vmatprep.mubr.bf16.mxu0 0
        %1150 = vmatmul.mubr.bf16.gmra.mrb[0].mxu0 %v1096
        %v1151 = vpop.f32.mrb[0].mxu0
        %v1152 = vadd.f32 0.0, %v1151
        %v1153 = vpop.f32.mrb[0].mxu0
        %v1154 = vpop.f32.mrb[0].mxu0
        %v1155 = vadd.f32 0.0, %v1154
        %v1156 = vpop.f32.mrb[0].mxu0
        %1157 = vmatprep.mubr.bf16.mxu0 0
        %1158 = vmatmul.mubr.bf16.gmra.mrb[0].mxu0 %v1099
        %v1159 = vpop.f32.mrb[0].mxu0
        %v1160 = vadd.f32 0.0, %v1159
        %v1161 = vpop.f32.mrb[0].mxu0
        %v1162 = vpop.f32.mrb[0].mxu0
        %v1163 = vadd.f32 0.0, %v1162
        %v1164 = vpop.f32.mrb[0].mxu0
        %1165 = vdwg.mxu0
        %v1166 = vadd.f32 %v374, %v1136
        %v1167 = vadd.f32 %v375, %v1139
        %v1168 = vadd.f32 %v376, %v1144
        %v1169 = vadd.f32 %v377, %v1147
        %v1170 = vadd.f32 %v378, %v1152
        %v1171 = vadd.f32 %v379, %v1155
        %v1172 = vadd.f32 %v380, %v1160
        %v1173 = vadd.f32 %v381, %v1163
        %1178 = vrot.lane.b32.xlu0 %v785, 96
        %v1179 = vpop.permute.xlu0 %1178
        %1180 = vrot.lane.b32.xlu0 %v788, 96
        %v1181 = vpop.permute.xlu0 %1180
        %1182 = vrot.lane.b32.xlu0 %v791, 96
        %v1183 = vpop.permute.xlu0 %1182
        %1184 = vrot.lane.b32.xlu0 %v794, 96
        %v1185 = vpop.permute.xlu0 %1184
        %1190 = vrot.lane.b32.xlu0 %v786, 96
        %v1191 = vpop.permute.xlu0 %1190
        %1192 = vrot.lane.b32.xlu0 %v789, 96
        %v1193 = vpop.permute.xlu0 %1192
        %1194 = vrot.lane.b32.xlu0 %v792, 96
        %v1195 = vpop.permute.xlu0 %1194
        %1196 = vrot.lane.b32.xlu0 %v795, 96
        %v1197 = vpop.permute.xlu0 %1196
        %v1199 = vsel %vm809, %v1179, 0
        %v1202 = vsel %vm809, %v1181, 0
        %v1205 = vsel %vm809, %v1183, 0
        %v1208 = vsel %vm809, %v1185, 0
        %v1211 = vsel %vm809, %v1191, 0
        %v1214 = vsel %vm809, %v1193, 0
        %v1217 = vsel %vm809, %v1195, 0
        %v1220 = vsel %vm809, %v1197, 0
        %1222 = vmatprep.subr.bf16.mxu0 0
        %1223 = vmatpush1.bf16.xpose.msra.mxu0 %v1211
        %1224 = vmatprep.subr.bf16.mxu0 0
        %1225 = vmatpush1.bf16.xpose.msra.mxu0 %v1214
        %1226 = vmatprep.subr.bf16.mxu0 0
        %1227 = vmatpush1.bf16.xpose.msra.mxu0 %v1217
        %1228 = vmatprep.subr.bf16.mxu0 0
        %1229 = vmatpush1.bf16.xpose.msra.mxu0 %v1220
        %1230 = vmatprep.subr.bf16.mxu0 0
        %1231 = vmatpush1.bf16.xpose.msra.mxu0 0
        %1232 = vmatprep.subr.bf16.mxu0 0
        %1233 = vmatpush1.bf16.xpose.msra.mxu0 0
        %1234 = vmatprep.subr.bf16.mxu0 0
        %1235 = vmatpush1.bf16.xpose.msra.mxu0 0
        %1236 = vmatprep.subr.bf16.mxu0 0
        %1237 = vmatpush1.bf16.xpose.msra.mxu0 0
        %1238 = vmatprep.subr.bf16.mxu0 0
        %1239 = vmatpush1.bf16.xpose.msra.mxu0 0
        %1240 = vmatprep.subr.bf16.mxu0 0
        %1241 = vmatpush1.bf16.xpose.msra.mxu0 0
        %1242 = vmatprep.subr.bf16.mxu0 0
        %1243 = vmatpush1.bf16.xpose.msra.mxu0 0
        %1244 = vmatprep.subr.bf16.mxu0 0
        %1245 = vmatpush1.bf16.xpose.msra.mxu0 0
        %1246 = vmatprep.subr.bf16.mxu0 0
        %1247 = vmatpush1.bf16.xpose.msra.mxu0 0
        %1248 = vmatprep.subr.bf16.mxu0 0
        %1249 = vmatpush1.bf16.xpose.msra.mxu0 0
        %1250 = vmatprep.subr.bf16.mxu0 0
        %1251 = vmatpush1.bf16.xpose.msra.mxu0 0
        %1252 = vmatprep.subr.bf16.mxu0 0
        %1253 = vmatpush1.bf16.xpose.msra.mxu0 0
        %1254 = vmatprep.mubr.bf16.mxu0 0
        %1255 = vmatmul.mubr.bf16.gmra.mrb[0].mxu0 %v1199
        %v1256 = vpop.f32.mrb[0].mxu0
        %v1257 = vadd.f32 0.0, %v1256
        %v1258 = vpop.f32.mrb[0].mxu0
        %v1259 = vpop.f32.mrb[0].mxu0
        %v1260 = vadd.f32 0.0, %v1259
        %v1261 = vpop.f32.mrb[0].mxu0
        %1262 = vmatprep.mubr.bf16.mxu0 0
        %1263 = vmatmul.mubr.bf16.gmra.mrb[0].mxu0 %v1202
        %v1264 = vpop.f32.mrb[0].mxu0
        %v1265 = vadd.f32 0.0, %v1264
        %v1266 = vpop.f32.mrb[0].mxu0
        %v1267 = vpop.f32.mrb[0].mxu0
        %v1268 = vadd.f32 0.0, %v1267
        %v1269 = vpop.f32.mrb[0].mxu0
        %1270 = vmatprep.mubr.bf16.mxu0 0
        %1271 = vmatmul.mubr.bf16.gmra.mrb[0].mxu0 %v1205
        %v1272 = vpop.f32.mrb[0].mxu0
        %v1273 = vadd.f32 0.0, %v1272
        %v1274 = vpop.f32.mrb[0].mxu0
        %v1275 = vpop.f32.mrb[0].mxu0
        %v1276 = vadd.f32 0.0, %v1275
        %v1277 = vpop.f32.mrb[0].mxu0
        %1278 = vmatprep.mubr.bf16.mxu0 0
        %1279 = vmatmul.mubr.bf16.gmra.mrb[0].mxu0 %v1208
        %v1280 = vpop.f32.mrb[0].mxu0
        %v1281 = vadd.f32 0.0, %v1280
        %v1282 = vpop.f32.mrb[0].mxu0
        %v1283 = vpop.f32.mrb[0].mxu0
        %v1284 = vadd.f32 0.0, %v1283
        %v1285 = vpop.f32.mrb[0].mxu0
        %1286 = vdwg.mxu0
        %v1287 = vsel %vm899, %v1257, -inf
        %1288 = vmax.xlane.f32.xlu0 %v1287
        %v1289 = vpop.xlane.xlu0 %1288
        %v1290 = vsel %vm899, %v1260, -inf
        %1291 = vmax.xlane.f32.xlu0 %v1290
        %v1292 = vpop.xlane.xlu0 %1291
        %v1293 = vsel %vm899, %v1265, -inf
        %1294 = vmax.xlane.f32.xlu0 %v1293
        %v1295 = vpop.xlane.xlu0 %1294
        %v1296 = vsel %vm899, %v1268, -inf
        %1297 = vmax.xlane.f32.xlu0 %v1296
        %v1298 = vpop.xlane.xlu0 %1297
        %v1299 = vsel %vm899, %v1273, -inf
        %1300 = vmax.xlane.f32.xlu0 %v1299
        %v1301 = vpop.xlane.xlu0 %1300
        %v1302 = vsel %vm899, %v1276, -inf
        %1303 = vmax.xlane.f32.xlu0 %v1302
        %v1304 = vpop.xlane.xlu0 %1303
        %v1305 = vsel %vm899, %v1281, -inf
        %1306 = vmax.xlane.f32.xlu0 %v1305
        %v1307 = vpop.xlane.xlu0 %1306
        %v1308 = vsel %vm899, %v1284, -inf
        %1309 = vmax.xlane.f32.xlu0 %v1308
        %v1310 = vpop.xlane.xlu0 %1309
        %v1311 = vsub.f32 %v1257, %v1289
        %v1312 = vsub.f32 %v1260, %v1292
        %v1313 = vsub.f32 %v1265, %v1295
        %v1314 = vsub.f32 %v1268, %v1298
        %v1315 = vsub.f32 %v1273, %v1301
        %v1316 = vsub.f32 %v1276, %v1304
        %v1317 = vsub.f32 %v1281, %v1307
        %v1318 = vsub.f32 %v1284, %v1310
        %v1319 = vmul.f32 %v1311, 1.442695
        %v1320 = vpow.pop %v1319
        %v1321 = vmul.f32 %v1312, 1.442695
        %v1322 = vpow.pop %v1321
        %v1323 = vmul.f32 %v1313, 1.442695
        %v1324 = vpow.pop %v1323
        %v1325 = vmul.f32 %v1314, 1.442695
        %v1326 = vpow.pop %v1325
        %v1327 = vmul.f32 %v1315, 1.442695
        %v1328 = vpow.pop %v1327
        %v1329 = vmul.f32 %v1316, 1.442695
        %v1330 = vpow.pop %v1329
        %v1331 = vmul.f32 %v1317, 1.442695
        %v1332 = vpow.pop %v1331
        %v1333 = vmul.f32 %v1318, 1.442695
        %v1334 = vpow.pop %v1333
        %v1335 = vsel %vm899, %v1320, 0.0
        %1336 = vadd.xlane.f32.xlu0 %v1335
        %v1337 = vpop.xlane.xlu0 %1336
        %v1338 = vsel %vm899, %v1322, 0.0
        %1339 = vadd.xlane.f32.xlu0 %v1338
        %v1340 = vpop.xlane.xlu0 %1339
        %v1341 = vsel %vm899, %v1324, 0.0
        %1342 = vadd.xlane.f32.xlu0 %v1341
        %v1343 = vpop.xlane.xlu0 %1342
        %v1344 = vsel %vm899, %v1326, 0.0
        %1345 = vadd.xlane.f32.xlu0 %v1344
        %v1346 = vpop.xlane.xlu0 %1345
        %v1347 = vsel %vm899, %v1328, 0.0
        %1348 = vadd.xlane.f32.xlu0 %v1347
        %v1349 = vpop.xlane.xlu0 %1348
        %v1350 = vsel %vm899, %v1330, 0.0
        %1351 = vadd.xlane.f32.xlu0 %v1350
        %v1352 = vpop.xlane.xlu0 %1351
        %v1353 = vsel %vm899, %v1332, 0.0
        %1354 = vadd.xlane.f32.xlu0 %v1353
        %v1355 = vpop.xlane.xlu0 %1354
        %v1356 = vsel %vm899, %v1334, 0.0
        %1357 = vadd.xlane.f32.xlu0 %v1356
        %v1358 = vpop.xlane.xlu0 %1357
        %v1359 = vrcp.pop %v1337
        %v1360 = vrcp.pop %v1340
        %v1361 = vrcp.pop %v1343
        %v1362 = vrcp.pop %v1346
        %v1363 = vrcp.pop %v1349
        %v1364 = vrcp.pop %v1352
        %v1365 = vrcp.pop %v1355
        %v1366 = vrcp.pop %v1358
        %v1367 = vmul.f32 %v1320, %v1359
        %v1368 = vmul.f32 %v1322, %v1360
        %v1369 = vmul.f32 %v1324, %v1361
        %v1370 = vmul.f32 %v1326, %v1362
        %v1371 = vmul.f32 %v1328, %v1363
        %v1372 = vmul.f32 %v1330, %v1364
        %v1373 = vmul.f32 %v1332, %v1365
        %v1374 = vmul.f32 %v1334, %v1366
        %v1375 = vpack.c.bf16 %v1368, %v1367
        %v1376 = vpack.c.bf16 %v1370, %v1369
        %v1377 = vpack.c.bf16 %v1372, %v1371
        %v1378 = vpack.c.bf16 %v1374, %v1373
        %1383 = vrot.lane.b32.xlu0 %v787, 96
        %v1384 = vpop.permute.xlu0 %1383
        %1385 = vrot.lane.b32.xlu0 %v790, 96
        %v1386 = vpop.permute.xlu0 %1385
        %1387 = vrot.lane.b32.xlu0 %v793, 96
        %v1388 = vpop.permute.xlu0 %1387
        %1389 = vrot.lane.b32.xlu0 %v796, 96
        %v1390 = vpop.permute.xlu0 %1389
        %v1396 = vsel %vm899, %v1375, 0
        %v1399 = vsel %vm899, %v1376, 0
        %v1402 = vsel %vm899, %v1377, 0
        %v1405 = vsel %vm899, %v1378, 0
        %1407 = vmatprep.subr.bf16.mxu0 0
        %1408 = vmatpush1.bf16.msra.mxu0 %v1384
        %1409 = vmatprep.subr.bf16.mxu0 0
        %1410 = vmatpush1.bf16.msra.mxu0 %v1386
        %1411 = vmatprep.subr.bf16.mxu0 0
        %1412 = vmatpush1.bf16.msra.mxu0 %v1388
        %1413 = vmatprep.subr.bf16.mxu0 0
        %1414 = vmatpush1.bf16.msra.mxu0 %v1390
        %1415 = vmatprep.subr.bf16.mxu0 0
        %1416 = vmatpush1.bf16.msra.mxu0 0
        %1417 = vmatprep.subr.bf16.mxu0 0
        %1418 = vmatpush1.bf16.msra.mxu0 0
        %1419 = vmatprep.subr.bf16.mxu0 0
        %1420 = vmatpush1.bf16.msra.mxu0 0
        %1421 = vmatprep.subr.bf16.mxu0 0
        %1422 = vmatpush1.bf16.msra.mxu0 0
        %1423 = vmatprep.subr.bf16.mxu0 0
        %1424 = vmatpush1.bf16.msra.mxu0 0
        %1425 = vmatprep.subr.bf16.mxu0 0
        %1426 = vmatpush1.bf16.msra.mxu0 0
        %1427 = vmatprep.subr.bf16.mxu0 0
        %1428 = vmatpush1.bf16.msra.mxu0 0
        %1429 = vmatprep.subr.bf16.mxu0 0
        %1430 = vmatpush1.bf16.msra.mxu0 0
        %1431 = vmatprep.subr.bf16.mxu0 0
        %1432 = vmatpush1.bf16.msra.mxu0 0
        %1433 = vmatprep.subr.bf16.mxu0 0
        %1434 = vmatpush1.bf16.msra.mxu0 0
        %1435 = vmatprep.subr.bf16.mxu0 0
        %1436 = vmatpush1.bf16.msra.mxu0 0
        %1437 = vmatprep.subr.bf16.mxu0 0
        %1438 = vmatpush1.bf16.msra.mxu0 0
        %1439 = vmatprep.mubr.bf16.mxu0 0
        %1440 = vmatmul.mubr.bf16.gmra.mrb[0].mxu0 %v1396
        %v1441 = vpop.f32.mrb[0].mxu0
        %v1442 = vadd.f32 0.0, %v1441
        %v1443 = vpop.f32.mrb[0].mxu0
        %v1444 = vpop.f32.mrb[0].mxu0
        %v1445 = vadd.f32 0.0, %v1444
        %v1446 = vpop.f32.mrb[0].mxu0
        %1447 = vmatprep.mubr.bf16.mxu0 0
        %1448 = vmatmul.mubr.bf16.gmra.mrb[0].mxu0 %v1399
        %v1449 = vpop.f32.mrb[0].mxu0
        %v1450 = vadd.f32 0.0, %v1449
        %v1451 = vpop.f32.mrb[0].mxu0
        %v1452 = vpop.f32.mrb[0].mxu0
        %v1453 = vadd.f32 0.0, %v1452
        %v1454 = vpop.f32.mrb[0].mxu0
        %1455 = vmatprep.mubr.bf16.mxu0 0
        %1456 = vmatmul.mubr.bf16.gmra.mrb[0].mxu0 %v1402
        %v1457 = vpop.f32.mrb[0].mxu0
        %v1458 = vadd.f32 0.0, %v1457
        %v1459 = vpop.f32.mrb[0].mxu0
        %v1460 = vpop.f32.mrb[0].mxu0
        %v1461 = vadd.f32 0.0, %v1460
        %v1462 = vpop.f32.mrb[0].mxu0
        %1463 = vmatprep.mubr.bf16.mxu0 0
        %1464 = vmatmul.mubr.bf16.gmra.mrb[0].mxu0 %v1405
        %v1465 = vpop.f32.mrb[0].mxu0
        %v1466 = vadd.f32 0.0, %v1465
        %v1467 = vpop.f32.mrb[0].mxu0
        %v1468 = vpop.f32.mrb[0].mxu0
        %v1469 = vadd.f32 0.0, %v1468
        %v1470 = vpop.f32.mrb[0].mxu0
        %1471 = vdwg.mxu0
        %v1472 = vpack.c.bf16 %v1445, %v1442
        %v1473 = vpack.c.bf16 %v1453, %v1450
        %v1474 = vpack.c.bf16 %v1461, %v1458
        %v1475 = vpack.c.bf16 %v1469, %v1466
        %v1476 = vld [vmem:[#allocation9 + $0x10] sm:$0xf]
        %v1477 = vld [vmem:[#allocation9 + $0x14] sm:$0xf]
        %v1478 = vld [vmem:[#allocation9 + $0x18] sm:$0xf]
        %v1479 = vld [vmem:[#allocation9 + $0x1c] sm:$0xf]
        %v1484 = vunpack.c.l.b16 %v1476
        %v1485 = vunpack.c.l.b16 %v1477
        %v1486 = vunpack.c.l.b16 %v1478
        %v1487 = vunpack.c.l.b16 %v1479
        %v1488 = vpack.c.b16 %v1485, %v1484
        %v1489 = vpack.c.b16 %v1487, %v1486
        %v1493 = vsel %vm809, %v1472, 0
        %v1496 = vsel %vm809, %v1473, 0
        %v1499 = vsel %vm809, %v1474, 0
        %v1502 = vsel %vm809, %v1475, 0
        %1504 = vmatprep.subr.bf16.mxu0 0
        %1505 = vmatpush1.bf16.msra.mxu0 %v1488
        %1506 = vmatprep.subr.bf16.mxu0 0
        %1507 = vmatpush1.bf16.msra.mxu0 %v1489
        %1508 = vmatprep.subr.bf16.mxu0 0
        %1509 = vmatpush1.bf16.msra.mxu0 0
        %1510 = vmatprep.subr.bf16.mxu0 0
        %1511 = vmatpush1.bf16.msra.mxu0 0
        %1512 = vmatprep.subr.bf16.mxu0 0
        %1513 = vmatpush1.bf16.msra.mxu0 0
        %1514 = vmatprep.subr.bf16.mxu0 0
        %1515 = vmatpush1.bf16.msra.mxu0 0
        %1516 = vmatprep.subr.bf16.mxu0 0
        %1517 = vmatpush1.bf16.msra.mxu0 0
        %1518 = vmatprep.subr.bf16.mxu0 0
        %1519 = vmatpush1.bf16.msra.mxu0 0
        %1520 = vmatprep.subr.bf16.mxu0 0
        %1521 = vmatpush1.bf16.msra.mxu0 0
        %1522 = vmatprep.subr.bf16.mxu0 0
        %1523 = vmatpush1.bf16.msra.mxu0 0
        %1524 = vmatprep.subr.bf16.mxu0 0
        %1525 = vmatpush1.bf16.msra.mxu0 0
        %1526 = vmatprep.subr.bf16.mxu0 0
        %1527 = vmatpush1.bf16.msra.mxu0 0
        %1528 = vmatprep.subr.bf16.mxu0 0
        %1529 = vmatpush1.bf16.msra.mxu0 0
        %1530 = vmatprep.subr.bf16.mxu0 0
        %1531 = vmatpush1.bf16.msra.mxu0 0
        %1532 = vmatprep.subr.bf16.mxu0 0
        %1533 = vmatpush1.bf16.msra.mxu0 0
        %1534 = vmatprep.subr.bf16.mxu0 0
        %1535 = vmatpush1.bf16.msra.mxu0 0
        %1536 = vmatprep.mubr.bf16.mxu0 0
        %1537 = vmatmul.mubr.bf16.gmra.mrb[0].mxu0 %v1493
        %v1538 = vpop.f32.mrb[0].mxu0
        %v1539 = vadd.f32 0.0, %v1538
        %v1540 = vpop.f32.mrb[0].mxu0
        %v1541 = vpop.f32.mrb[0].mxu0
        %v1542 = vadd.f32 0.0, %v1541
        %v1543 = vpop.f32.mrb[0].mxu0
        %1544 = vmatprep.mubr.bf16.mxu0 0
        %1545 = vmatmul.mubr.bf16.gmra.mrb[0].mxu0 %v1496
        %v1546 = vpop.f32.mrb[0].mxu0
        %v1547 = vadd.f32 0.0, %v1546
        %v1548 = vpop.f32.mrb[0].mxu0
        %v1549 = vpop.f32.mrb[0].mxu0
        %v1550 = vadd.f32 0.0, %v1549
        %v1551 = vpop.f32.mrb[0].mxu0
        %1552 = vmatprep.mubr.bf16.mxu0 0
        %1553 = vmatmul.mubr.bf16.gmra.mrb[0].mxu0 %v1499
        %v1554 = vpop.f32.mrb[0].mxu0
        %v1555 = vadd.f32 0.0, %v1554
        %v1556 = vpop.f32.mrb[0].mxu0
        %v1557 = vpop.f32.mrb[0].mxu0
        %v1558 = vadd.f32 0.0, %v1557
        %v1559 = vpop.f32.mrb[0].mxu0
        %1560 = vmatprep.mubr.bf16.mxu0 0
        %1561 = vmatmul.mubr.bf16.gmra.mrb[0].mxu0 %v1502
        %v1562 = vpop.f32.mrb[0].mxu0
        %v1563 = vadd.f32 0.0, %v1562
        %v1564 = vpop.f32.mrb[0].mxu0
        %v1565 = vpop.f32.mrb[0].mxu0
        %v1566 = vadd.f32 0.0, %v1565
        %v1567 = vpop.f32.mrb[0].mxu0
        %1568 = vdwg.mxu0
        %v1569 = vadd.f32 %v1166, %v1539
        %v1570 = vadd.f32 %v1167, %v1542
        %v1571 = vadd.f32 %v1168, %v1547
        %v1572 = vadd.f32 %v1169, %v1550
        %v1573 = vadd.f32 %v1170, %v1555
        %v1574 = vadd.f32 %v1171, %v1558
        %v1575 = vadd.f32 %v1172, %v1563
        %v1576 = vadd.f32 %v1173, %v1566
        %1577 = vrot.lane.b32.xlu0 %v785, 64
        %v1578 = vpop.permute.xlu0 %1577
        %1579 = vrot.lane.b32.xlu0 %v788, 64
        %v1580 = vpop.permute.xlu0 %1579
        %1581 = vrot.lane.b32.xlu0 %v791, 64
        %v1582 = vpop.permute.xlu0 %1581
        %1583 = vrot.lane.b32.xlu0 %v794, 64
        %v1584 = vpop.permute.xlu0 %1583
        %1585 = vrot.lane.b32.xlu0 %v786, 64
        %v1586 = vpop.permute.xlu0 %1585
        %1587 = vrot.lane.b32.xlu0 %v789, 64
        %v1588 = vpop.permute.xlu0 %1587
        %1589 = vrot.lane.b32.xlu0 %v792, 64
        %v1590 = vpop.permute.xlu0 %1589
        %1591 = vrot.lane.b32.xlu0 %v795, 64
        %v1592 = vpop.permute.xlu0 %1591
        %v1594 = vsel %vm809, %v1578, 0
        %v1597 = vsel %vm809, %v1580, 0
        %v1600 = vsel %vm809, %v1582, 0
        %v1603 = vsel %vm809, %v1584, 0
        %v1606 = vsel %vm809, %v1586, 0
        %v1609 = vsel %vm809, %v1588, 0
        %v1612 = vsel %vm809, %v1590, 0
        %v1615 = vsel %vm809, %v1592, 0
        %1617 = vmatprep.subr.bf16.mxu0 0
        %1618 = vmatpush1.bf16.xpose.msra.mxu0 %v1606
        %1619 = vmatprep.subr.bf16.mxu0 0
        %1620 = vmatpush1.bf16.xpose.msra.mxu0 %v1609
        %1621 = vmatprep.subr.bf16.mxu0 0
        %1622 = vmatpush1.bf16.xpose.msra.mxu0 %v1612
        %1623 = vmatprep.subr.bf16.mxu0 0
        %1624 = vmatpush1.bf16.xpose.msra.mxu0 %v1615
        %1625 = vmatprep.subr.bf16.mxu0 0
        %1626 = vmatpush1.bf16.xpose.msra.mxu0 0
        %1627 = vmatprep.subr.bf16.mxu0 0
        %1628 = vmatpush1.bf16.xpose.msra.mxu0 0
        %1629 = vmatprep.subr.bf16.mxu0 0
        %1630 = vmatpush1.bf16.xpose.msra.mxu0 0
        %1631 = vmatprep.subr.bf16.mxu0 0
        %1632 = vmatpush1.bf16.xpose.msra.mxu0 0
        %1633 = vmatprep.subr.bf16.mxu0 0
        %1634 = vmatpush1.bf16.xpose.msra.mxu0 0
        %1635 = vmatprep.subr.bf16.mxu0 0
        %1636 = vmatpush1.bf16.xpose.msra.mxu0 0
        %1637 = vmatprep.subr.bf16.mxu0 0
        %1638 = vmatpush1.bf16.xpose.msra.mxu0 0
        %1639 = vmatprep.subr.bf16.mxu0 0
        %1640 = vmatpush1.bf16.xpose.msra.mxu0 0
        %1641 = vmatprep.subr.bf16.mxu0 0
        %1642 = vmatpush1.bf16.xpose.msra.mxu0 0
        %1643 = vmatprep.subr.bf16.mxu0 0
        %1644 = vmatpush1.bf16.xpose.msra.mxu0 0
        %1645 = vmatprep.subr.bf16.mxu0 0
        %1646 = vmatpush1.bf16.xpose.msra.mxu0 0
        %1647 = vmatprep.subr.bf16.mxu0 0
        %1648 = vmatpush1.bf16.xpose.msra.mxu0 0
        %1649 = vmatprep.mubr.bf16.mxu0 0
        %1650 = vmatmul.mubr.bf16.gmra.mrb[0].mxu0 %v1594
        %v1651 = vpop.f32.mrb[0].mxu0
        %v1652 = vadd.f32 0.0, %v1651
        %v1653 = vpop.f32.mrb[0].mxu0
        %v1654 = vpop.f32.mrb[0].mxu0
        %v1655 = vadd.f32 0.0, %v1654
        %v1656 = vpop.f32.mrb[0].mxu0
        %1657 = vmatprep.mubr.bf16.mxu0 0
        %1658 = vmatmul.mubr.bf16.gmra.mrb[0].mxu0 %v1597
        %v1659 = vpop.f32.mrb[0].mxu0
        %v1660 = vadd.f32 0.0, %v1659
        %v1661 = vpop.f32.mrb[0].mxu0
        %v1662 = vpop.f32.mrb[0].mxu0
        %v1663 = vadd.f32 0.0, %v1662
        %v1664 = vpop.f32.mrb[0].mxu0
        %1665 = vmatprep.mubr.bf16.mxu0 0
        %1666 = vmatmul.mubr.bf16.gmra.mrb[0].mxu0 %v1600
        %v1667 = vpop.f32.mrb[0].mxu0
        %v1668 = vadd.f32 0.0, %v1667
        %v1669 = vpop.f32.mrb[0].mxu0
        %v1670 = vpop.f32.mrb[0].mxu0
        %v1671 = vadd.f32 0.0, %v1670
        %v1672 = vpop.f32.mrb[0].mxu0
        %1673 = vmatprep.mubr.bf16.mxu0 0
        %1674 = vmatmul.mubr.bf16.gmra.mrb[0].mxu0 %v1603
        %v1675 = vpop.f32.mrb[0].mxu0
        %v1676 = vadd.f32 0.0, %v1675
        %v1677 = vpop.f32.mrb[0].mxu0
        %v1678 = vpop.f32.mrb[0].mxu0
        %v1679 = vadd.f32 0.0, %v1678
        %v1680 = vpop.f32.mrb[0].mxu0
        %1681 = vdwg.mxu0
        %v1682 = vsel %vm899, %v1652, -inf
        %1683 = vmax.xlane.f32.xlu0 %v1682
        %v1684 = vpop.xlane.xlu0 %1683
        %v1685 = vsel %vm899, %v1655, -inf
        %1686 = vmax.xlane.f32.xlu0 %v1685
        %v1687 = vpop.xlane.xlu0 %1686
        %v1688 = vsel %vm899, %v1660, -inf
        %1689 = vmax.xlane.f32.xlu0 %v1688
        %v1690 = vpop.xlane.xlu0 %1689
        %v1691 = vsel %vm899, %v1663, -inf
        %1692 = vmax.xlane.f32.xlu0 %v1691
        %v1693 = vpop.xlane.xlu0 %1692
        %v1694 = vsel %vm899, %v1668, -inf
        %1695 = vmax.xlane.f32.xlu0 %v1694
        %v1696 = vpop.xlane.xlu0 %1695
        %v1697 = vsel %vm899, %v1671, -inf
        %1698 = vmax.xlane.f32.xlu0 %v1697
        %v1699 = vpop.xlane.xlu0 %1698
        %v1700 = vsel %vm899, %v1676, -inf
        %1701 = vmax.xlane.f32.xlu0 %v1700
        %v1702 = vpop.xlane.xlu0 %1701
        %v1703 = vsel %vm899, %v1679, -inf
        %1704 = vmax.xlane.f32.xlu0 %v1703
        %v1705 = vpop.xlane.xlu0 %1704
        %v1706 = vsub.f32 %v1652, %v1684
        %v1707 = vsub.f32 %v1655, %v1687
        %v1708 = vsub.f32 %v1660, %v1690
        %v1709 = vsub.f32 %v1663, %v1693
        %v1710 = vsub.f32 %v1668, %v1696
        %v1711 = vsub.f32 %v1671, %v1699
        %v1712 = vsub.f32 %v1676, %v1702
        %v1713 = vsub.f32 %v1679, %v1705
        %v1714 = vmul.f32 %v1706, 1.442695
        %v1715 = vpow.pop %v1714
        %v1716 = vmul.f32 %v1707, 1.442695
        %v1717 = vpow.pop %v1716
        %v1718 = vmul.f32 %v1708, 1.442695
        %v1719 = vpow.pop %v1718
        %v1720 = vmul.f32 %v1709, 1.442695
        %v1721 = vpow.pop %v1720
        %v1722 = vmul.f32 %v1710, 1.442695
        %v1723 = vpow.pop %v1722
        %v1724 = vmul.f32 %v1711, 1.442695
        %v1725 = vpow.pop %v1724
        %v1726 = vmul.f32 %v1712, 1.442695
        %v1727 = vpow.pop %v1726
        %v1728 = vmul.f32 %v1713, 1.442695
        %v1729 = vpow.pop %v1728
        %v1730 = vsel %vm899, %v1715, 0.0
        %1731 = vadd.xlane.f32.xlu0 %v1730
        %v1732 = vpop.xlane.xlu0 %1731
        %v1733 = vsel %vm899, %v1717, 0.0
        %1734 = vadd.xlane.f32.xlu0 %v1733
        %v1735 = vpop.xlane.xlu0 %1734
        %v1736 = vsel %vm899, %v1719, 0.0
        %1737 = vadd.xlane.f32.xlu0 %v1736
        %v1738 = vpop.xlane.xlu0 %1737
        %v1739 = vsel %vm899, %v1721, 0.0
        %1740 = vadd.xlane.f32.xlu0 %v1739
        %v1741 = vpop.xlane.xlu0 %1740
        %v1742 = vsel %vm899, %v1723, 0.0
        %1743 = vadd.xlane.f32.xlu0 %v1742
        %v1744 = vpop.xlane.xlu0 %1743
        %v1745 = vsel %vm899, %v1725, 0.0
        %1746 = vadd.xlane.f32.xlu0 %v1745
        %v1747 = vpop.xlane.xlu0 %1746
        %v1748 = vsel %vm899, %v1727, 0.0
        %1749 = vadd.xlane.f32.xlu0 %v1748
        %v1750 = vpop.xlane.xlu0 %1749
        %v1751 = vsel %vm899, %v1729, 0.0
        %1752 = vadd.xlane.f32.xlu0 %v1751
        %v1753 = vpop.xlane.xlu0 %1752
        %v1754 = vrcp.pop %v1732
        %v1755 = vrcp.pop %v1735
        %v1756 = vrcp.pop %v1738
        %v1757 = vrcp.pop %v1741
        %v1758 = vrcp.pop %v1744
        %v1759 = vrcp.pop %v1747
        %v1760 = vrcp.pop %v1750
        %v1761 = vrcp.pop %v1753
        %v1762 = vmul.f32 %v1715, %v1754
        %v1763 = vmul.f32 %v1717, %v1755
        %v1764 = vmul.f32 %v1719, %v1756
        %v1765 = vmul.f32 %v1721, %v1757
        %v1766 = vmul.f32 %v1723, %v1758
        %v1767 = vmul.f32 %v1725, %v1759
        %v1768 = vmul.f32 %v1727, %v1760
        %v1769 = vmul.f32 %v1729, %v1761
        %v1770 = vpack.c.bf16 %v1763, %v1762
        %v1771 = vpack.c.bf16 %v1765, %v1764
        %v1772 = vpack.c.bf16 %v1767, %v1766
        %v1773 = vpack.c.bf16 %v1769, %v1768
        %1774 = vrot.lane.b32.xlu0 %v787, 64
        %v1775 = vpop.permute.xlu0 %1774
        %1776 = vrot.lane.b32.xlu0 %v790, 64
        %v1777 = vpop.permute.xlu0 %1776
        %1778 = vrot.lane.b32.xlu0 %v793, 64
        %v1779 = vpop.permute.xlu0 %1778
        %1780 = vrot.lane.b32.xlu0 %v796, 64
        %v1781 = vpop.permute.xlu0 %1780
        %v1787 = vsel %vm899, %v1770, 0
        %v1790 = vsel %vm899, %v1771, 0
        %v1793 = vsel %vm899, %v1772, 0
        %v1796 = vsel %vm899, %v1773, 0
        %1798 = vmatprep.subr.bf16.mxu0 0
        %1799 = vmatpush1.bf16.msra.mxu0 %v1775
        %1800 = vmatprep.subr.bf16.mxu0 0
        %1801 = vmatpush1.bf16.msra.mxu0 %v1777
        %1802 = vmatprep.subr.bf16.mxu0 0
        %1803 = vmatpush1.bf16.msra.mxu0 %v1779
        %1804 = vmatprep.subr.bf16.mxu0 0
        %1805 = vmatpush1.bf16.msra.mxu0 %v1781
        %1806 = vmatprep.subr.bf16.mxu0 0
        %1807 = vmatpush1.bf16.msra.mxu0 0
        %1808 = vmatprep.subr.bf16.mxu0 0
        %1809 = vmatpush1.bf16.msra.mxu0 0
        %1810 = vmatprep.subr.bf16.mxu0 0
        %1811 = vmatpush1.bf16.msra.mxu0 0
        %1812 = vmatprep.subr.bf16.mxu0 0
        %1813 = vmatpush1.bf16.msra.mxu0 0
        %1814 = vmatprep.subr.bf16.mxu0 0
        %1815 = vmatpush1.bf16.msra.mxu0 0
        %1816 = vmatprep.subr.bf16.mxu0 0
        %1817 = vmatpush1.bf16.msra.mxu0 0
        %1818 = vmatprep.subr.bf16.mxu0 0
        %1819 = vmatpush1.bf16.msra.mxu0 0
        %1820 = vmatprep.subr.bf16.mxu0 0
        %1821 = vmatpush1.bf16.msra.mxu0 0
        %1822 = vmatprep.subr.bf16.mxu0 0
        %1823 = vmatpush1.bf16.msra.mxu0 0
        %1824 = vmatprep.subr.bf16.mxu0 0
        %1825 = vmatpush1.bf16.msra.mxu0 0
        %1826 = vmatprep.subr.bf16.mxu0 0
        %1827 = vmatpush1.bf16.msra.mxu0 0
        %1828 = vmatprep.subr.bf16.mxu0 0
        %1829 = vmatpush1.bf16.msra.mxu0 0
        %1830 = vmatprep.mubr.bf16.mxu0 0
        %1831 = vmatmul.mubr.bf16.gmra.mrb[0].mxu0 %v1787
        %v1832 = vpop.f32.mrb[0].mxu0
        %v1833 = vadd.f32 0.0, %v1832
        %v1834 = vpop.f32.mrb[0].mxu0
        %v1835 = vpop.f32.mrb[0].mxu0
        %v1836 = vadd.f32 0.0, %v1835
        %v1837 = vpop.f32.mrb[0].mxu0
        %1838 = vmatprep.mubr.bf16.mxu0 0
        %1839 = vmatmul.mubr.bf16.gmra.mrb[0].mxu0 %v1790
        %v1840 = vpop.f32.mrb[0].mxu0
        %v1841 = vadd.f32 0.0, %v1840
        %v1842 = vpop.f32.mrb[0].mxu0
        %v1843 = vpop.f32.mrb[0].mxu0
        %v1844 = vadd.f32 0.0, %v1843
        %v1845 = vpop.f32.mrb[0].mxu0
        %1846 = vmatprep.mubr.bf16.mxu0 0
        %1847 = vmatmul.mubr.bf16.gmra.mrb[0].mxu0 %v1793
        %v1848 = vpop.f32.mrb[0].mxu0
        %v1849 = vadd.f32 0.0, %v1848
        %v1850 = vpop.f32.mrb[0].mxu0
        %v1851 = vpop.f32.mrb[0].mxu0
        %v1852 = vadd.f32 0.0, %v1851
        %v1853 = vpop.f32.mrb[0].mxu0
        %1854 = vmatprep.mubr.bf16.mxu0 0
        %1855 = vmatmul.mubr.bf16.gmra.mrb[0].mxu0 %v1796
        %v1856 = vpop.f32.mrb[0].mxu0
        %v1857 = vadd.f32 0.0, %v1856
        %v1858 = vpop.f32.mrb[0].mxu0
        %v1859 = vpop.f32.mrb[0].mxu0
        %v1860 = vadd.f32 0.0, %v1859
        %v1861 = vpop.f32.mrb[0].mxu0
        %1862 = vdwg.mxu0
        %v1863 = vpack.c.bf16 %v1836, %v1833
        %v1864 = vpack.c.bf16 %v1844, %v1841
        %v1865 = vpack.c.bf16 %v1852, %v1849
        %v1866 = vpack.c.bf16 %v1860, %v1857
        %v1867 = vld [vmem:[#allocation9 + $0x20] sm:$0xf]
        %v1868 = vld [vmem:[#allocation9 + $0x24] sm:$0xf]
        %v1869 = vld [vmem:[#allocation9 + $0x28] sm:$0xf]
        %v1870 = vld [vmem:[#allocation9 + $0x2c] sm:$0xf]
        %v1875 = vunpack.c.l.b16 %v1867
        %v1876 = vunpack.c.l.b16 %v1868
        %v1877 = vunpack.c.l.b16 %v1869
        %v1878 = vunpack.c.l.b16 %v1870
        %v1879 = vpack.c.b16 %v1876, %v1875
        %v1880 = vpack.c.b16 %v1878, %v1877
        %v1884 = vsel %vm809, %v1863, 0
        %v1887 = vsel %vm809, %v1864, 0
        %v1890 = vsel %vm809, %v1865, 0
        %v1893 = vsel %vm809, %v1866, 0
        %1895 = vmatprep.subr.bf16.mxu0 0
        %1896 = vmatpush1.bf16.msra.mxu0 %v1879
        %1897 = vmatprep.subr.bf16.mxu0 0
        %1898 = vmatpush1.bf16.msra.mxu0 %v1880
        %1899 = vmatprep.subr.bf16.mxu0 0
        %1900 = vmatpush1.bf16.msra.mxu0 0
        %1901 = vmatprep.subr.bf16.mxu0 0
        %1902 = vmatpush1.bf16.msra.mxu0 0
        %1903 = vmatprep.subr.bf16.mxu0 0
        %1904 = vmatpush1.bf16.msra.mxu0 0
        %1905 = vmatprep.subr.bf16.mxu0 0
        %1906 = vmatpush1.bf16.msra.mxu0 0
        %1907 = vmatprep.subr.bf16.mxu0 0
        %1908 = vmatpush1.bf16.msra.mxu0 0
        %1909 = vmatprep.subr.bf16.mxu0 0
        %1910 = vmatpush1.bf16.msra.mxu0 0
        %1911 = vmatprep.subr.bf16.mxu0 0
        %1912 = vmatpush1.bf16.msra.mxu0 0
        %1913 = vmatprep.subr.bf16.mxu0 0
        %1914 = vmatpush1.bf16.msra.mxu0 0
        %1915 = vmatprep.subr.bf16.mxu0 0
        %1916 = vmatpush1.bf16.msra.mxu0 0
        %1917 = vmatprep.subr.bf16.mxu0 0
        %1918 = vmatpush1.bf16.msra.mxu0 0
        %1919 = vmatprep.subr.bf16.mxu0 0
        %1920 = vmatpush1.bf16.msra.mxu0 0
        %1921 = vmatprep.subr.bf16.mxu0 0
        %1922 = vmatpush1.bf16.msra.mxu0 0
        %1923 = vmatprep.subr.bf16.mxu0 0
        %1924 = vmatpush1.bf16.msra.mxu0 0
        %1925 = vmatprep.subr.bf16.mxu0 0
        %1926 = vmatpush1.bf16.msra.mxu0 0
        %1927 = vmatprep.mubr.bf16.mxu0 0
        %1928 = vmatmul.mubr.bf16.gmra.mrb[0].mxu0 %v1884
        %v1929 = vpop.f32.mrb[0].mxu0
        %v1930 = vadd.f32 0.0, %v1929
        %v1931 = vpop.f32.mrb[0].mxu0
        %v1932 = vpop.f32.mrb[0].mxu0
        %v1933 = vadd.f32 0.0, %v1932
        %v1934 = vpop.f32.mrb[0].mxu0
        %1935 = vmatprep.mubr.bf16.mxu0 0
        %1936 = vmatmul.mubr.bf16.gmra.mrb[0].mxu0 %v1887
        %v1937 = vpop.f32.mrb[0].mxu0
        %v1938 = vadd.f32 0.0, %v1937
        %v1939 = vpop.f32.mrb[0].mxu0
        %v1940 = vpop.f32.mrb[0].mxu0
        %v1941 = vadd.f32 0.0, %v1940
        %v1942 = vpop.f32.mrb[0].mxu0
        %1943 = vmatprep.mubr.bf16.mxu0 0
        %1944 = vmatmul.mubr.bf16.gmra.mrb[0].mxu0 %v1890
        %v1945 = vpop.f32.mrb[0].mxu0
        %v1946 = vadd.f32 0.0, %v1945
        %v1947 = vpop.f32.mrb[0].mxu0
        %v1948 = vpop.f32.mrb[0].mxu0
        %v1949 = vadd.f32 0.0, %v1948
        %v1950 = vpop.f32.mrb[0].mxu0
        %1951 = vmatprep.mubr.bf16.mxu0 0
        %1952 = vmatmul.mubr.bf16.gmra.mrb[0].mxu0 %v1893
        %v1953 = vpop.f32.mrb[0].mxu0
        %v1954 = vadd.f32 0.0, %v1953
        %v1955 = vpop.f32.mrb[0].mxu0
        %v1956 = vpop.f32.mrb[0].mxu0
        %v1957 = vadd.f32 0.0, %v1956
        %v1958 = vpop.f32.mrb[0].mxu0
        %1959 = vdwg.mxu0
        %v1960 = vadd.f32 %v1569, %v1930
        %v1961 = vadd.f32 %v1570, %v1933
        %v1962 = vadd.f32 %v1571, %v1938
        %v1963 = vadd.f32 %v1572, %v1941
        %v1964 = vadd.f32 %v1573, %v1946
        %v1965 = vadd.f32 %v1574, %v1949
        %v1966 = vadd.f32 %v1575, %v1954
        %v1967 = vadd.f32 %v1576, %v1957
        %1968 = vrot.lane.b32.xlu0 %v785, 32
        %v1969 = vpop.permute.xlu0 %1968
        %1970 = vrot.lane.b32.xlu0 %v788, 32
        %v1971 = vpop.permute.xlu0 %1970
        %1972 = vrot.lane.b32.xlu0 %v791, 32
        %v1973 = vpop.permute.xlu0 %1972
        %1974 = vrot.lane.b32.xlu0 %v794, 32
        %v1975 = vpop.permute.xlu0 %1974
        %1976 = vrot.lane.b32.xlu0 %v786, 32
        %v1977 = vpop.permute.xlu0 %1976
        %1978 = vrot.lane.b32.xlu0 %v789, 32
        %v1979 = vpop.permute.xlu0 %1978
        %1980 = vrot.lane.b32.xlu0 %v792, 32
        %v1981 = vpop.permute.xlu0 %1980
        %1982 = vrot.lane.b32.xlu0 %v795, 32
        %v1983 = vpop.permute.xlu0 %1982
        %v1985 = vsel %vm809, %v1969, 0
        %v1988 = vsel %vm809, %v1971, 0
        %v1991 = vsel %vm809, %v1973, 0
        %v1994 = vsel %vm809, %v1975, 0
        %v1997 = vsel %vm809, %v1977, 0
        %v2000 = vsel %vm809, %v1979, 0
        %v2003 = vsel %vm809, %v1981, 0
        %v2006 = vsel %vm809, %v1983, 0
        %2008 = vmatprep.subr.bf16.mxu0 0
        %2009 = vmatpush1.bf16.xpose.msra.mxu0 %v1997
        %2010 = vmatprep.subr.bf16.mxu0 0
        %2011 = vmatpush1.bf16.xpose.msra.mxu0 %v2000
        %2012 = vmatprep.subr.bf16.mxu0 0
        %2013 = vmatpush1.bf16.xpose.msra.mxu0 %v2003
        %2014 = vmatprep.subr.bf16.mxu0 0
        %2015 = vmatpush1.bf16.xpose.msra.mxu0 %v2006
        %2016 = vmatprep.subr.bf16.mxu0 0
        %2017 = vmatpush1.bf16.xpose.msra.mxu0 0
        %2018 = vmatprep.subr.bf16.mxu0 0
        %2019 = vmatpush1.bf16.xpose.msra.mxu0 0
        %2020 = vmatprep.subr.bf16.mxu0 0
        %2021 = vmatpush1.bf16.xpose.msra.mxu0 0
        %2022 = vmatprep.subr.bf16.mxu0 0
        %2023 = vmatpush1.bf16.xpose.msra.mxu0 0
        %2024 = vmatprep.subr.bf16.mxu0 0
        %2025 = vmatpush1.bf16.xpose.msra.mxu0 0
        %2026 = vmatprep.subr.bf16.mxu0 0
        %2027 = vmatpush1.bf16.xpose.msra.mxu0 0
        %2028 = vmatprep.subr.bf16.mxu0 0
        %2029 = vmatpush1.bf16.xpose.msra.mxu0 0
        %2030 = vmatprep.subr.bf16.mxu0 0
        %2031 = vmatpush1.bf16.xpose.msra.mxu0 0
        %2032 = vmatprep.subr.bf16.mxu0 0
        %2033 = vmatpush1.bf16.xpose.msra.mxu0 0
        %2034 = vmatprep.subr.bf16.mxu0 0
        %2035 = vmatpush1.bf16.xpose.msra.mxu0 0
        %2036 = vmatprep.subr.bf16.mxu0 0
        %2037 = vmatpush1.bf16.xpose.msra.mxu0 0
        %2038 = vmatprep.subr.bf16.mxu0 0
        %2039 = vmatpush1.bf16.xpose.msra.mxu0 0
        %2040 = vmatprep.mubr.bf16.mxu0 0
        %2041 = vmatmul.mubr.bf16.gmra.mrb[0].mxu0 %v1985
        %v2042 = vpop.f32.mrb[0].mxu0
        %v2043 = vadd.f32 0.0, %v2042
        %v2044 = vpop.f32.mrb[0].mxu0
        %v2045 = vpop.f32.mrb[0].mxu0
        %v2046 = vadd.f32 0.0, %v2045
        %v2047 = vpop.f32.mrb[0].mxu0
        %2048 = vmatprep.mubr.bf16.mxu0 0
        %2049 = vmatmul.mubr.bf16.gmra.mrb[0].mxu0 %v1988
        %v2050 = vpop.f32.mrb[0].mxu0
        %v2051 = vadd.f32 0.0, %v2050
        %v2052 = vpop.f32.mrb[0].mxu0
        %v2053 = vpop.f32.mrb[0].mxu0
        %v2054 = vadd.f32 0.0, %v2053
        %v2055 = vpop.f32.mrb[0].mxu0
        %2056 = vmatprep.mubr.bf16.mxu0 0
        %2057 = vmatmul.mubr.bf16.gmra.mrb[0].mxu0 %v1991
        %v2058 = vpop.f32.mrb[0].mxu0
        %v2059 = vadd.f32 0.0, %v2058
        %v2060 = vpop.f32.mrb[0].mxu0
        %v2061 = vpop.f32.mrb[0].mxu0
        %v2062 = vadd.f32 0.0, %v2061
        %v2063 = vpop.f32.mrb[0].mxu0
        %2064 = vmatprep.mubr.bf16.mxu0 0
        %2065 = vmatmul.mubr.bf16.gmra.mrb[0].mxu0 %v1994
        %v2066 = vpop.f32.mrb[0].mxu0
        %v2067 = vadd.f32 0.0, %v2066
        %v2068 = vpop.f32.mrb[0].mxu0
        %v2069 = vpop.f32.mrb[0].mxu0
        %v2070 = vadd.f32 0.0, %v2069
        %v2071 = vpop.f32.mrb[0].mxu0
        %2072 = vdwg.mxu0
        %v2073 = vsel %vm899, %v2043, -inf
        %2074 = vmax.xlane.f32.xlu0 %v2073
        %v2075 = vpop.xlane.xlu0 %2074
        %v2076 = vsel %vm899, %v2046, -inf
        %2077 = vmax.xlane.f32.xlu0 %v2076
        %v2078 = vpop.xlane.xlu0 %2077
        %v2079 = vsel %vm899, %v2051, -inf
        %2080 = vmax.xlane.f32.xlu0 %v2079
        %v2081 = vpop.xlane.xlu0 %2080
        %v2082 = vsel %vm899, %v2054, -inf
        %2083 = vmax.xlane.f32.xlu0 %v2082
        %v2084 = vpop.xlane.xlu0 %2083
        %v2085 = vsel %vm899, %v2059, -inf
        %2086 = vmax.xlane.f32.xlu0 %v2085
        %v2087 = vpop.xlane.xlu0 %2086
        %v2088 = vsel %vm899, %v2062, -inf
        %2089 = vmax.xlane.f32.xlu0 %v2088
        %v2090 = vpop.xlane.xlu0 %2089
        %v2091 = vsel %vm899, %v2067, -inf
        %2092 = vmax.xlane.f32.xlu0 %v2091
        %v2093 = vpop.xlane.xlu0 %2092
        %v2094 = vsel %vm899, %v2070, -inf
        %2095 = vmax.xlane.f32.xlu0 %v2094
        %v2096 = vpop.xlane.xlu0 %2095
        %v2097 = vsub.f32 %v2043, %v2075
        %v2098 = vsub.f32 %v2046, %v2078
        %v2099 = vsub.f32 %v2051, %v2081
        %v2100 = vsub.f32 %v2054, %v2084
        %v2101 = vsub.f32 %v2059, %v2087
        %v2102 = vsub.f32 %v2062, %v2090
        %v2103 = vsub.f32 %v2067, %v2093
        %v2104 = vsub.f32 %v2070, %v2096
        %v2105 = vmul.f32 %v2097, 1.442695
        %v2106 = vpow.pop %v2105
        %v2107 = vmul.f32 %v2098, 1.442695
        %v2108 = vpow.pop %v2107
        %v2109 = vmul.f32 %v2099, 1.442695
        %v2110 = vpow.pop %v2109
        %v2111 = vmul.f32 %v2100, 1.442695
        %v2112 = vpow.pop %v2111
        %v2113 = vmul.f32 %v2101, 1.442695
        %v2114 = vpow.pop %v2113
        %v2115 = vmul.f32 %v2102, 1.442695
        %v2116 = vpow.pop %v2115
        %v2117 = vmul.f32 %v2103, 1.442695
        %v2118 = vpow.pop %v2117
        %v2119 = vmul.f32 %v2104, 1.442695
        %v2120 = vpow.pop %v2119
        %v2121 = vsel %vm899, %v2106, 0.0
        %2122 = vadd.xlane.f32.xlu0 %v2121
        %v2123 = vpop.xlane.xlu0 %2122
        %v2124 = vsel %vm899, %v2108, 0.0
        %2125 = vadd.xlane.f32.xlu0 %v2124
        %v2126 = vpop.xlane.xlu0 %2125
        %v2127 = vsel %vm899, %v2110, 0.0
        %2128 = vadd.xlane.f32.xlu0 %v2127
        %v2129 = vpop.xlane.xlu0 %2128
        %v2130 = vsel %vm899, %v2112, 0.0
        %2131 = vadd.xlane.f32.xlu0 %v2130
        %v2132 = vpop.xlane.xlu0 %2131
        %v2133 = vsel %vm899, %v2114, 0.0
        %2134 = vadd.xlane.f32.xlu0 %v2133
        %v2135 = vpop.xlane.xlu0 %2134
        %v2136 = vsel %vm899, %v2116, 0.0
        %2137 = vadd.xlane.f32.xlu0 %v2136
        %v2138 = vpop.xlane.xlu0 %2137
        %v2139 = vsel %vm899, %v2118, 0.0
        %2140 = vadd.xlane.f32.xlu0 %v2139
        %v2141 = vpop.xlane.xlu0 %2140
        %v2142 = vsel %vm899, %v2120, 0.0
        %2143 = vadd.xlane.f32.xlu0 %v2142
        %v2144 = vpop.xlane.xlu0 %2143
        %v2145 = vrcp.pop %v2123
        %v2146 = vrcp.pop %v2126
        %v2147 = vrcp.pop %v2129
        %v2148 = vrcp.pop %v2132
        %v2149 = vrcp.pop %v2135
        %v2150 = vrcp.pop %v2138
        %v2151 = vrcp.pop %v2141
        %v2152 = vrcp.pop %v2144
        %v2153 = vmul.f32 %v2106, %v2145
        %v2154 = vmul.f32 %v2108, %v2146
        %v2155 = vmul.f32 %v2110, %v2147
        %v2156 = vmul.f32 %v2112, %v2148
        %v2157 = vmul.f32 %v2114, %v2149
        %v2158 = vmul.f32 %v2116, %v2150
        %v2159 = vmul.f32 %v2118, %v2151
        %v2160 = vmul.f32 %v2120, %v2152
        %v2161 = vpack.c.bf16 %v2154, %v2153
        %v2162 = vpack.c.bf16 %v2156, %v2155
        %v2163 = vpack.c.bf16 %v2158, %v2157
        %v2164 = vpack.c.bf16 %v2160, %v2159
        %2165 = vrot.lane.b32.xlu0 %v787, 32
        %v2166 = vpop.permute.xlu0 %2165
        %2167 = vrot.lane.b32.xlu0 %v790, 32
        %v2168 = vpop.permute.xlu0 %2167
        %2169 = vrot.lane.b32.xlu0 %v793, 32
        %v2170 = vpop.permute.xlu0 %2169
        %2171 = vrot.lane.b32.xlu0 %v796, 32
        %v2172 = vpop.permute.xlu0 %2171
        %v2178 = vsel %vm899, %v2161, 0
        %v2181 = vsel %vm899, %v2162, 0
        %v2184 = vsel %vm899, %v2163, 0
        %v2187 = vsel %vm899, %v2164, 0
        %2189 = vmatprep.subr.bf16.mxu0 0
        %2190 = vmatpush1.bf16.msra.mxu0 %v2166
        %2191 = vmatprep.subr.bf16.mxu0 0
        %2192 = vmatpush1.bf16.msra.mxu0 %v2168
        %2193 = vmatprep.subr.bf16.mxu0 0
        %2194 = vmatpush1.bf16.msra.mxu0 %v2170
        %2195 = vmatprep.subr.bf16.mxu0 0
        %2196 = vmatpush1.bf16.msra.mxu0 %v2172
        %2197 = vmatprep.subr.bf16.mxu0 0
        %2198 = vmatpush1.bf16.msra.mxu0 0
        %2199 = vmatprep.subr.bf16.mxu0 0
        %2200 = vmatpush1.bf16.msra.mxu0 0
        %2201 = vmatprep.subr.bf16.mxu0 0
        %2202 = vmatpush1.bf16.msra.mxu0 0
        %2203 = vmatprep.subr.bf16.mxu0 0
        %2204 = vmatpush1.bf16.msra.mxu0 0
        %2205 = vmatprep.subr.bf16.mxu0 0
        %2206 = vmatpush1.bf16.msra.mxu0 0
        %2207 = vmatprep.subr.bf16.mxu0 0
        %2208 = vmatpush1.bf16.msra.mxu0 0
        %2209 = vmatprep.subr.bf16.mxu0 0
        %2210 = vmatpush1.bf16.msra.mxu0 0
        %2211 = vmatprep.subr.bf16.mxu0 0
        %2212 = vmatpush1.bf16.msra.mxu0 0
        %2213 = vmatprep.subr.bf16.mxu0 0
        %2214 = vmatpush1.bf16.msra.mxu0 0
        %2215 = vmatprep.subr.bf16.mxu0 0
        %2216 = vmatpush1.bf16.msra.mxu0 0
        %2217 = vmatprep.subr.bf16.mxu0 0
        %2218 = vmatpush1.bf16.msra.mxu0 0
        %2219 = vmatprep.subr.bf16.mxu0 0
        %2220 = vmatpush1.bf16.msra.mxu0 0
        %2221 = vmatprep.mubr.bf16.mxu0 0
        %2222 = vmatmul.mubr.bf16.gmra.mrb[0].mxu0 %v2178
        %v2223 = vpop.f32.mrb[0].mxu0
        %v2224 = vadd.f32 0.0, %v2223
        %v2225 = vpop.f32.mrb[0].mxu0
        %v2226 = vpop.f32.mrb[0].mxu0
        %v2227 = vadd.f32 0.0, %v2226
        %v2228 = vpop.f32.mrb[0].mxu0
        %2229 = vmatprep.mubr.bf16.mxu0 0
        %2230 = vmatmul.mubr.bf16.gmra.mrb[0].mxu0 %v2181
        %v2231 = vpop.f32.mrb[0].mxu0
        %v2232 = vadd.f32 0.0, %v2231
        %v2233 = vpop.f32.mrb[0].mxu0
        %v2234 = vpop.f32.mrb[0].mxu0
        %v2235 = vadd.f32 0.0, %v2234
        %v2236 = vpop.f32.mrb[0].mxu0
        %2237 = vmatprep.mubr.bf16.mxu0 0
        %2238 = vmatmul.mubr.bf16.gmra.mrb[0].mxu0 %v2184
        %v2239 = vpop.f32.mrb[0].mxu0
        %v2240 = vadd.f32 0.0, %v2239
        %v2241 = vpop.f32.mrb[0].mxu0
        %v2242 = vpop.f32.mrb[0].mxu0
        %v2243 = vadd.f32 0.0, %v2242
        %v2244 = vpop.f32.mrb[0].mxu0
        %2245 = vmatprep.mubr.bf16.mxu0 0
        %2246 = vmatmul.mubr.bf16.gmra.mrb[0].mxu0 %v2187
        %v2247 = vpop.f32.mrb[0].mxu0
        %v2248 = vadd.f32 0.0, %v2247
        %v2249 = vpop.f32.mrb[0].mxu0
        %v2250 = vpop.f32.mrb[0].mxu0
        %v2251 = vadd.f32 0.0, %v2250
        %v2252 = vpop.f32.mrb[0].mxu0
        %2253 = vdwg.mxu0
        %v2254 = vpack.c.bf16 %v2227, %v2224
        %v2255 = vpack.c.bf16 %v2235, %v2232
        %v2256 = vpack.c.bf16 %v2243, %v2240
        %v2257 = vpack.c.bf16 %v2251, %v2248
        %v2258 = vld [vmem:[#allocation9 + $0x30] sm:$0xf]
        %v2259 = vld [vmem:[#allocation9 + $0x34] sm:$0xf]
        %v2260 = vld [vmem:[#allocation9 + $0x38] sm:$0xf]
        %v2261 = vld [vmem:[#allocation9 + $0x3c] sm:$0xf]
        %v2266 = vunpack.c.l.b16 %v2258
        %v2267 = vunpack.c.l.b16 %v2259
        %v2268 = vunpack.c.l.b16 %v2260
        %v2269 = vunpack.c.l.b16 %v2261
        %v2270 = vpack.c.b16 %v2267, %v2266
        %v2271 = vpack.c.b16 %v2269, %v2268
        %v2275 = vsel %vm809, %v2254, 0
        %v2278 = vsel %vm809, %v2255, 0
        %v2281 = vsel %vm809, %v2256, 0
        %v2284 = vsel %vm809, %v2257, 0
        %2286 = vmatprep.subr.bf16.mxu0 0
        %2287 = vmatpush1.bf16.msra.mxu0 %v2270
        %2288 = vmatprep.subr.bf16.mxu0 0
        %2289 = vmatpush1.bf16.msra.mxu0 %v2271
        %2290 = vmatprep.subr.bf16.mxu0 0
        %2291 = vmatpush1.bf16.msra.mxu0 0
        %2292 = vmatprep.subr.bf16.mxu0 0
        %2293 = vmatpush1.bf16.msra.mxu0 0
        %2294 = vmatprep.subr.bf16.mxu0 0
        %2295 = vmatpush1.bf16.msra.mxu0 0
        %2296 = vmatprep.subr.bf16.mxu0 0
        %2297 = vmatpush1.bf16.msra.mxu0 0
        %2298 = vmatprep.subr.bf16.mxu0 0
        %2299 = vmatpush1.bf16.msra.mxu0 0
        %2300 = vmatprep.subr.bf16.mxu0 0
        %2301 = vmatpush1.bf16.msra.mxu0 0
        %2302 = vmatprep.subr.bf16.mxu0 0
        %2303 = vmatpush1.bf16.msra.mxu0 0
        %2304 = vmatprep.subr.bf16.mxu0 0
        %2305 = vmatpush1.bf16.msra.mxu0 0
        %2306 = vmatprep.subr.bf16.mxu0 0
        %2307 = vmatpush1.bf16.msra.mxu0 0
        %2308 = vmatprep.subr.bf16.mxu0 0
        %2309 = vmatpush1.bf16.msra.mxu0 0
        %2310 = vmatprep.subr.bf16.mxu0 0
        %2311 = vmatpush1.bf16.msra.mxu0 0
        %2312 = vmatprep.subr.bf16.mxu0 0
        %2313 = vmatpush1.bf16.msra.mxu0 0
        %2314 = vmatprep.subr.bf16.mxu0 0
        %2315 = vmatpush1.bf16.msra.mxu0 0
        %2316 = vmatprep.subr.bf16.mxu0 0
        %2317 = vmatpush1.bf16.msra.mxu0 0
        %2318 = vmatprep.mubr.bf16.mxu0 0
        %2319 = vmatmul.mubr.bf16.gmra.mrb[0].mxu0 %v2275
        %v2320 = vpop.f32.mrb[0].mxu0
        %v2321 = vadd.f32 0.0, %v2320
        %v2322 = vpop.f32.mrb[0].mxu0
        %v2323 = vpop.f32.mrb[0].mxu0
        %v2324 = vadd.f32 0.0, %v2323
        %v2325 = vpop.f32.mrb[0].mxu0
        %2326 = vmatprep.mubr.bf16.mxu0 0
        %2327 = vmatmul.mubr.bf16.gmra.mrb[0].mxu0 %v2278
        %v2328 = vpop.f32.mrb[0].mxu0
        %v2329 = vadd.f32 0.0, %v2328
        %v2330 = vpop.f32.mrb[0].mxu0
        %v2331 = vpop.f32.mrb[0].mxu0
        %v2332 = vadd.f32 0.0, %v2331
        %v2333 = vpop.f32.mrb[0].mxu0
        %2334 = vmatprep.mubr.bf16.mxu0 0
        %2335 = vmatmul.mubr.bf16.gmra.mrb[0].mxu0 %v2281
        %v2336 = vpop.f32.mrb[0].mxu0
        %v2337 = vadd.f32 0.0, %v2336
        %v2338 = vpop.f32.mrb[0].mxu0
        %v2339 = vpop.f32.mrb[0].mxu0
        %v2340 = vadd.f32 0.0, %v2339
        %v2341 = vpop.f32.mrb[0].mxu0
        %2342 = vmatprep.mubr.bf16.mxu0 0
        %2343 = vmatmul.mubr.bf16.gmra.mrb[0].mxu0 %v2284
        %v2344 = vpop.f32.mrb[0].mxu0
        %v2345 = vadd.f32 0.0, %v2344
        %v2346 = vpop.f32.mrb[0].mxu0
        %v2347 = vpop.f32.mrb[0].mxu0
        %v2348 = vadd.f32 0.0, %v2347
        %v2349 = vpop.f32.mrb[0].mxu0
        %2350 = vdwg.mxu0
        %v2351 = vadd.f32 %v1960, %v2321
        %v2352 = vadd.f32 %v1961, %v2324
        %v2353 = vadd.f32 %v1962, %v2329
        %v2354 = vadd.f32 %v1963, %v2332
        %v2355 = vadd.f32 %v1964, %v2337
        %v2356 = vadd.f32 %v1965, %v2340
        %v2357 = vadd.f32 %v1966, %v2345
        %v2358 = vadd.f32 %v1967, %v2348
        %v2360 = vsel %vm809, %v797, 0
        %v2363 = vsel %vm809, %v800, 0
        %v2366 = vsel %vm809, %v803, 0
        %v2369 = vsel %vm809, %v806, 0
        %v2372 = vsel %vm809, %v798, 0
        %v2375 = vsel %vm809, %v801, 0
        %v2378 = vsel %vm809, %v804, 0
        %v2381 = vsel %vm809, %v807, 0
        %2383 = vmatprep.subr.bf16.mxu0 0
        %2384 = vmatpush1.bf16.xpose.msra.mxu0 %v2372
        %2385 = vmatprep.subr.bf16.mxu0 0
        %2386 = vmatpush1.bf16.xpose.msra.mxu0 %v2375
        %2387 = vmatprep.subr.bf16.mxu0 0
        %2388 = vmatpush1.bf16.xpose.msra.mxu0 %v2378
        %2389 = vmatprep.subr.bf16.mxu0 0
        %2390 = vmatpush1.bf16.xpose.msra.mxu0 %v2381
        %2391 = vmatprep.subr.bf16.mxu0 0
        %2392 = vmatpush1.bf16.xpose.msra.mxu0 0
        %2393 = vmatprep.subr.bf16.mxu0 0
        %2394 = vmatpush1.bf16.xpose.msra.mxu0 0
        %2395 = vmatprep.subr.bf16.mxu0 0
        %2396 = vmatpush1.bf16.xpose.msra.mxu0 0
        %2397 = vmatprep.subr.bf16.mxu0 0
        %2398 = vmatpush1.bf16.xpose.msra.mxu0 0
        %2399 = vmatprep.subr.bf16.mxu0 0
        %2400 = vmatpush1.bf16.xpose.msra.mxu0 0
        %2401 = vmatprep.subr.bf16.mxu0 0
        %2402 = vmatpush1.bf16.xpose.msra.mxu0 0
        %2403 = vmatprep.subr.bf16.mxu0 0
        %2404 = vmatpush1.bf16.xpose.msra.mxu0 0
        %2405 = vmatprep.subr.bf16.mxu0 0
        %2406 = vmatpush1.bf16.xpose.msra.mxu0 0
        %2407 = vmatprep.subr.bf16.mxu0 0
        %2408 = vmatpush1.bf16.xpose.msra.mxu0 0
        %2409 = vmatprep.subr.bf16.mxu0 0
        %2410 = vmatpush1.bf16.xpose.msra.mxu0 0
        %2411 = vmatprep.subr.bf16.mxu0 0
        %2412 = vmatpush1.bf16.xpose.msra.mxu0 0
        %2413 = vmatprep.subr.bf16.mxu0 0
        %2414 = vmatpush1.bf16.xpose.msra.mxu0 0
        %2415 = vmatprep.mubr.bf16.mxu0 0
        %2416 = vmatmul.mubr.bf16.gmra.mrb[0].mxu0 %v2360
        %v2417 = vpop.f32.mrb[0].mxu0
        %v2418 = vadd.f32 0.0, %v2417
        %v2419 = vpop.f32.mrb[0].mxu0
        %v2420 = vpop.f32.mrb[0].mxu0
        %v2421 = vadd.f32 0.0, %v2420
        %v2422 = vpop.f32.mrb[0].mxu0
        %2423 = vmatprep.mubr.bf16.mxu0 0
        %2424 = vmatmul.mubr.bf16.gmra.mrb[0].mxu0 %v2363
        %v2425 = vpop.f32.mrb[0].mxu0
        %v2426 = vadd.f32 0.0, %v2425
        %v2427 = vpop.f32.mrb[0].mxu0
        %v2428 = vpop.f32.mrb[0].mxu0
        %v2429 = vadd.f32 0.0, %v2428
        %v2430 = vpop.f32.mrb[0].mxu0
        %2431 = vmatprep.mubr.bf16.mxu0 0
        %2432 = vmatmul.mubr.bf16.gmra.mrb[0].mxu0 %v2366
        %v2433 = vpop.f32.mrb[0].mxu0
        %v2434 = vadd.f32 0.0, %v2433
        %v2435 = vpop.f32.mrb[0].mxu0
        %v2436 = vpop.f32.mrb[0].mxu0
        %v2437 = vadd.f32 0.0, %v2436
        %v2438 = vpop.f32.mrb[0].mxu0
        %2439 = vmatprep.mubr.bf16.mxu0 0
        %2440 = vmatmul.mubr.bf16.gmra.mrb[0].mxu0 %v2369
        %v2441 = vpop.f32.mrb[0].mxu0
        %v2442 = vadd.f32 0.0, %v2441
        %v2443 = vpop.f32.mrb[0].mxu0
        %v2444 = vpop.f32.mrb[0].mxu0
        %v2445 = vadd.f32 0.0, %v2444
        %v2446 = vpop.f32.mrb[0].mxu0
        %2447 = vdwg.mxu0
        %v2448 = vsel %vm899, %v2418, -inf
        %2449 = vmax.xlane.f32.xlu0 %v2448
        %v2450 = vpop.xlane.xlu0 %2449
        %v2451 = vsel %vm899, %v2421, -inf
        %2452 = vmax.xlane.f32.xlu0 %v2451
        %v2453 = vpop.xlane.xlu0 %2452
        %v2454 = vsel %vm899, %v2426, -inf
        %2455 = vmax.xlane.f32.xlu0 %v2454
        %v2456 = vpop.xlane.xlu0 %2455
        %v2457 = vsel %vm899, %v2429, -inf
        %2458 = vmax.xlane.f32.xlu0 %v2457
        %v2459 = vpop.xlane.xlu0 %2458
        %v2460 = vsel %vm899, %v2434, -inf
        %2461 = vmax.xlane.f32.xlu0 %v2460
        %v2462 = vpop.xlane.xlu0 %2461
        %v2463 = vsel %vm899, %v2437, -inf
        %2464 = vmax.xlane.f32.xlu0 %v2463
        %v2465 = vpop.xlane.xlu0 %2464
        %v2466 = vsel %vm899, %v2442, -inf
        %2467 = vmax.xlane.f32.xlu0 %v2466
        %v2468 = vpop.xlane.xlu0 %2467
        %v2469 = vsel %vm899, %v2445, -inf
        %2470 = vmax.xlane.f32.xlu0 %v2469
        %v2471 = vpop.xlane.xlu0 %2470
        %v2472 = vsub.f32 %v2418, %v2450
        %v2473 = vsub.f32 %v2421, %v2453
        %v2474 = vsub.f32 %v2426, %v2456
        %v2475 = vsub.f32 %v2429, %v2459
        %v2476 = vsub.f32 %v2434, %v2462
        %v2477 = vsub.f32 %v2437, %v2465
        %v2478 = vsub.f32 %v2442, %v2468
        %v2479 = vsub.f32 %v2445, %v2471
        %v2480 = vmul.f32 %v2472, 1.442695
        %v2481 = vpow.pop %v2480
        %v2482 = vmul.f32 %v2473, 1.442695
        %v2483 = vpow.pop %v2482
        %v2484 = vmul.f32 %v2474, 1.442695
        %v2485 = vpow.pop %v2484
        %v2486 = vmul.f32 %v2475, 1.442695
        %v2487 = vpow.pop %v2486
        %v2488 = vmul.f32 %v2476, 1.442695
        %v2489 = vpow.pop %v2488
        %v2490 = vmul.f32 %v2477, 1.442695
        %v2491 = vpow.pop %v2490
        %v2492 = vmul.f32 %v2478, 1.442695
        %v2493 = vpow.pop %v2492
        %v2494 = vmul.f32 %v2479, 1.442695
        %v2495 = vpow.pop %v2494
        %v2496 = vsel %vm899, %v2481, 0.0
        %2497 = vadd.xlane.f32.xlu0 %v2496
        %v2498 = vpop.xlane.xlu0 %2497
        %v2499 = vsel %vm899, %v2483, 0.0
        %2500 = vadd.xlane.f32.xlu0 %v2499
        %v2501 = vpop.xlane.xlu0 %2500
        %v2502 = vsel %vm899, %v2485, 0.0
        %2503 = vadd.xlane.f32.xlu0 %v2502
        %v2504 = vpop.xlane.xlu0 %2503
        %v2505 = vsel %vm899, %v2487, 0.0
        %2506 = vadd.xlane.f32.xlu0 %v2505
        %v2507 = vpop.xlane.xlu0 %2506
        %v2508 = vsel %vm899, %v2489, 0.0
        %2509 = vadd.xlane.f32.xlu0 %v2508
        %v2510 = vpop.xlane.xlu0 %2509
        %v2511 = vsel %vm899, %v2491, 0.0
        %2512 = vadd.xlane.f32.xlu0 %v2511
        %v2513 = vpop.xlane.xlu0 %2512
        %v2514 = vsel %vm899, %v2493, 0.0
        %2515 = vadd.xlane.f32.xlu0 %v2514
        %v2516 = vpop.xlane.xlu0 %2515
        %v2517 = vsel %vm899, %v2495, 0.0
        %2518 = vadd.xlane.f32.xlu0 %v2517
        %v2519 = vpop.xlane.xlu0 %2518
        %v2520 = vrcp.pop %v2498
        %v2521 = vrcp.pop %v2501
        %v2522 = vrcp.pop %v2504
        %v2523 = vrcp.pop %v2507
        %v2524 = vrcp.pop %v2510
        %v2525 = vrcp.pop %v2513
        %v2526 = vrcp.pop %v2516
        %v2527 = vrcp.pop %v2519
        %v2528 = vmul.f32 %v2481, %v2520
        %v2529 = vmul.f32 %v2483, %v2521
        %v2530 = vmul.f32 %v2485, %v2522
        %v2531 = vmul.f32 %v2487, %v2523
        %v2532 = vmul.f32 %v2489, %v2524
        %v2533 = vmul.f32 %v2491, %v2525
        %v2534 = vmul.f32 %v2493, %v2526
        %v2535 = vmul.f32 %v2495, %v2527
        %v2536 = vpack.c.bf16 %v2529, %v2528
        %v2537 = vpack.c.bf16 %v2531, %v2530
        %v2538 = vpack.c.bf16 %v2533, %v2532
        %v2539 = vpack.c.bf16 %v2535, %v2534
        %v2541 = vsel %vm899, %v2536, 0
        %v2544 = vsel %vm899, %v2537, 0
        %v2547 = vsel %vm899, %v2538, 0
        %v2550 = vsel %vm899, %v2539, 0
        %2552 = vmatprep.subr.bf16.mxu0 0
        %2553 = vmatpush1.bf16.msra.mxu0 %v799
        %2554 = vmatprep.subr.bf16.mxu0 0
        %2555 = vmatpush1.bf16.msra.mxu0 %v802
        %2556 = vmatprep.subr.bf16.mxu0 0
        %2557 = vmatpush1.bf16.msra.mxu0 %v805
        %2558 = vmatprep.subr.bf16.mxu0 0
        %2559 = vmatpush1.bf16.msra.mxu0 %v808
        %2560 = vmatprep.subr.bf16.mxu0 0
        %2561 = vmatpush1.bf16.msra.mxu0 0
        %2562 = vmatprep.subr.bf16.mxu0 0
        %2563 = vmatpush1.bf16.msra.mxu0 0
        %2564 = vmatprep.subr.bf16.mxu0 0
        %2565 = vmatpush1.bf16.msra.mxu0 0
        %2566 = vmatprep.subr.bf16.mxu0 0
        %2567 = vmatpush1.bf16.msra.mxu0 0
        %2568 = vmatprep.subr.bf16.mxu0 0
        %2569 = vmatpush1.bf16.msra.mxu0 0
        %2570 = vmatprep.subr.bf16.mxu0 0
        %2571 = vmatpush1.bf16.msra.mxu0 0
        %2572 = vmatprep.subr.bf16.mxu0 0
        %2573 = vmatpush1.bf16.msra.mxu0 0
        %2574 = vmatprep.subr.bf16.mxu0 0
        %2575 = vmatpush1.bf16.msra.mxu0 0
        %2576 = vmatprep.subr.bf16.mxu0 0
        %2577 = vmatpush1.bf16.msra.mxu0 0
        %2578 = vmatprep.subr.bf16.mxu0 0
        %2579 = vmatpush1.bf16.msra.mxu0 0
        %2580 = vmatprep.subr.bf16.mxu0 0
        %2581 = vmatpush1.bf16.msra.mxu0 0
        %2582 = vmatprep.subr.bf16.mxu0 0
        %2583 = vmatpush1.bf16.msra.mxu0 0
        %2584 = vmatprep.mubr.bf16.mxu0 0
        %2585 = vmatmul.mubr.bf16.gmra.mrb[0].mxu0 %v2541
        %v2586 = vpop.f32.mrb[0].mxu0
        %v2587 = vadd.f32 0.0, %v2586
        %v2588 = vpop.f32.mrb[0].mxu0
        %v2589 = vpop.f32.mrb[0].mxu0
        %v2590 = vadd.f32 0.0, %v2589
        %v2591 = vpop.f32.mrb[0].mxu0
        %2592 = vmatprep.mubr.bf16.mxu0 0
        %2593 = vmatmul.mubr.bf16.gmra.mrb[0].mxu0 %v2544
        %v2594 = vpop.f32.mrb[0].mxu0
        %v2595 = vadd.f32 0.0, %v2594
        %v2596 = vpop.f32.mrb[0].mxu0
        %v2597 = vpop.f32.mrb[0].mxu0
        %v2598 = vadd.f32 0.0, %v2597
        %v2599 = vpop.f32.mrb[0].mxu0
        %2600 = vmatprep.mubr.bf16.mxu0 0
        %2601 = vmatmul.mubr.bf16.gmra.mrb[0].mxu0 %v2547
        %v2602 = vpop.f32.mrb[0].mxu0
        %v2603 = vadd.f32 0.0, %v2602
        %v2604 = vpop.f32.mrb[0].mxu0
        %v2605 = vpop.f32.mrb[0].mxu0
        %v2606 = vadd.f32 0.0, %v2605
        %v2607 = vpop.f32.mrb[0].mxu0
        %2608 = vmatprep.mubr.bf16.mxu0 0
        %2609 = vmatmul.mubr.bf16.gmra.mrb[0].mxu0 %v2550
        %v2610 = vpop.f32.mrb[0].mxu0
        %v2611 = vadd.f32 0.0, %v2610
        %v2612 = vpop.f32.mrb[0].mxu0
        %v2613 = vpop.f32.mrb[0].mxu0
        %v2614 = vadd.f32 0.0, %v2613
        %v2615 = vpop.f32.mrb[0].mxu0
        %2616 = vdwg.mxu0
        %v2617 = vpack.c.bf16 %v2590, %v2587
        %v2618 = vpack.c.bf16 %v2598, %v2595
        %v2619 = vpack.c.bf16 %v2606, %v2603
        %v2620 = vpack.c.bf16 %v2614, %v2611
        %v2622 = vsel %vm809, %v2617, 0
        %v2625 = vsel %vm809, %v2618, 0
        %v2628 = vsel %vm809, %v2619, 0
        %v2631 = vsel %vm809, %v2620, 0
        %2633 = vmatprep.subr.bf16.mxu0 0
        %2634 = vmatpush1.bf16.msra.mxu0 %v1085
        %2635 = vmatprep.subr.bf16.mxu0 0
        %2636 = vmatpush1.bf16.msra.mxu0 %v1086
        %2637 = vmatprep.subr.bf16.mxu0 0
        %2638 = vmatpush1.bf16.msra.mxu0 0
        %2639 = vmatprep.subr.bf16.mxu0 0
        %2640 = vmatpush1.bf16.msra.mxu0 0
        %2641 = vmatprep.subr.bf16.mxu0 0
        %2642 = vmatpush1.bf16.msra.mxu0 0
        %2643 = vmatprep.subr.bf16.mxu0 0
        %2644 = vmatpush1.bf16.msra.mxu0 0
        %2645 = vmatprep.subr.bf16.mxu0 0
        %2646 = vmatpush1.bf16.msra.mxu0 0
        %2647 = vmatprep.subr.bf16.mxu0 0
        %2648 = vmatpush1.bf16.msra.mxu0 0
        %2649 = vmatprep.subr.bf16.mxu0 0
        %2650 = vmatpush1.bf16.msra.mxu0 0
        %2651 = vmatprep.subr.bf16.mxu0 0
        %2652 = vmatpush1.bf16.msra.mxu0 0
        %2653 = vmatprep.subr.bf16.mxu0 0
        %2654 = vmatpush1.bf16.msra.mxu0 0
        %2655 = vmatprep.subr.bf16.mxu0 0
        %2656 = vmatpush1.bf16.msra.mxu0 0
        %2657 = vmatprep.subr.bf16.mxu0 0
        %2658 = vmatpush1.bf16.msra.mxu0 0
        %2659 = vmatprep.subr.bf16.mxu0 0
        %2660 = vmatpush1.bf16.msra.mxu0 0
        %2661 = vmatprep.subr.bf16.mxu0 0
        %2662 = vmatpush1.bf16.msra.mxu0 0
        %2663 = vmatprep.subr.bf16.mxu0 0
        %2664 = vmatpush1.bf16.msra.mxu0 0
        %2665 = vmatprep.mubr.bf16.mxu0 0
        %2666 = vmatmul.mubr.bf16.gmra.mrb[0].mxu0 %v2622
        %v2667 = vpop.f32.mrb[0].mxu0
        %v2668 = vadd.f32 0.0, %v2667
        %v2669 = vpop.f32.mrb[0].mxu0
        %v2670 = vpop.f32.mrb[0].mxu0
        %v2671 = vadd.f32 0.0, %v2670
        %v2672 = vpop.f32.mrb[0].mxu0
        %2673 = vmatprep.mubr.bf16.mxu0 0
        %2674 = vmatmul.mubr.bf16.gmra.mrb[0].mxu0 %v2625
        %v2675 = vpop.f32.mrb[0].mxu0
        %v2676 = vadd.f32 0.0, %v2675
        %v2677 = vpop.f32.mrb[0].mxu0
        %v2678 = vpop.f32.mrb[0].mxu0
        %v2679 = vadd.f32 0.0, %v2678
        %v2680 = vpop.f32.mrb[0].mxu0
        %2681 = vmatprep.mubr.bf16.mxu0 0
        %2682 = vmatmul.mubr.bf16.gmra.mrb[0].mxu0 %v2628
        %v2683 = vpop.f32.mrb[0].mxu0
        %v2684 = vadd.f32 0.0, %v2683
        %v2685 = vpop.f32.mrb[0].mxu0
        %v2686 = vpop.f32.mrb[0].mxu0
        %v2687 = vadd.f32 0.0, %v2686
        %v2688 = vpop.f32.mrb[0].mxu0
        %2689 = vmatprep.mubr.bf16.mxu0 0
        %2690 = vmatmul.mubr.bf16.gmra.mrb[0].mxu0 %v2631
        %v2691 = vpop.f32.mrb[0].mxu0
        %v2692 = vadd.f32 0.0, %v2691
        %v2693 = vpop.f32.mrb[0].mxu0
        %v2694 = vpop.f32.mrb[0].mxu0
        %v2695 = vadd.f32 0.0, %v2694
        %v2696 = vpop.f32.mrb[0].mxu0
        %2697 = vdwg.mxu0
        %v2698 = vadd.f32 %v382, %v2668
        %v2699 = vadd.f32 %v383, %v2671
        %v2700 = vadd.f32 %v384, %v2676
        %v2701 = vadd.f32 %v385, %v2679
        %v2702 = vadd.f32 %v386, %v2684
        %v2703 = vadd.f32 %v387, %v2687
        %v2704 = vadd.f32 %v388, %v2692
        %v2705 = vadd.f32 %v389, %v2695
        %2710 = vrot.lane.b32.xlu0 %v797, 96
        %v2711 = vpop.permute.xlu0 %2710
        %2712 = vrot.lane.b32.xlu0 %v800, 96
        %v2713 = vpop.permute.xlu0 %2712
        %2714 = vrot.lane.b32.xlu0 %v803, 96
        %v2715 = vpop.permute.xlu0 %2714
        %2716 = vrot.lane.b32.xlu0 %v806, 96
        %v2717 = vpop.permute.xlu0 %2716
        %2722 = vrot.lane.b32.xlu0 %v798, 96
        %v2723 = vpop.permute.xlu0 %2722
        %2724 = vrot.lane.b32.xlu0 %v801, 96
        %v2725 = vpop.permute.xlu0 %2724
        %2726 = vrot.lane.b32.xlu0 %v804, 96
        %v2727 = vpop.permute.xlu0 %2726
        %2728 = vrot.lane.b32.xlu0 %v807, 96
        %v2729 = vpop.permute.xlu0 %2728
        %v2731 = vsel %vm809, %v2711, 0
        %v2734 = vsel %vm809, %v2713, 0
        %v2737 = vsel %vm809, %v2715, 0
        %v2740 = vsel %vm809, %v2717, 0
        %v2743 = vsel %vm809, %v2723, 0
        %v2746 = vsel %vm809, %v2725, 0
        %v2749 = vsel %vm809, %v2727, 0
        %v2752 = vsel %vm809, %v2729, 0
        %2754 = vmatprep.subr.bf16.mxu0 0
        %2755 = vmatpush1.bf16.xpose.msra.mxu0 %v2743
        %2756 = vmatprep.subr.bf16.mxu0 0
        %2757 = vmatpush1.bf16.xpose.msra.mxu0 %v2746
        %2758 = vmatprep.subr.bf16.mxu0 0
        %2759 = vmatpush1.bf16.xpose.msra.mxu0 %v2749
        %2760 = vmatprep.subr.bf16.mxu0 0
        %2761 = vmatpush1.bf16.xpose.msra.mxu0 %v2752
        %2762 = vmatprep.subr.bf16.mxu0 0
        %2763 = vmatpush1.bf16.xpose.msra.mxu0 0
        %2764 = vmatprep.subr.bf16.mxu0 0
        %2765 = vmatpush1.bf16.xpose.msra.mxu0 0
        %2766 = vmatprep.subr.bf16.mxu0 0
        %2767 = vmatpush1.bf16.xpose.msra.mxu0 0
        %2768 = vmatprep.subr.bf16.mxu0 0
        %2769 = vmatpush1.bf16.xpose.msra.mxu0 0
        %2770 = vmatprep.subr.bf16.mxu0 0
        %2771 = vmatpush1.bf16.xpose.msra.mxu0 0
        %2772 = vmatprep.subr.bf16.mxu0 0
        %2773 = vmatpush1.bf16.xpose.msra.mxu0 0
        %2774 = vmatprep.subr.bf16.mxu0 0
        %2775 = vmatpush1.bf16.xpose.msra.mxu0 0
        %2776 = vmatprep.subr.bf16.mxu0 0
        %2777 = vmatpush1.bf16.xpose.msra.mxu0 0
        %2778 = vmatprep.subr.bf16.mxu0 0
        %2779 = vmatpush1.bf16.xpose.msra.mxu0 0
        %2780 = vmatprep.subr.bf16.mxu0 0
        %2781 = vmatpush1.bf16.xpose.msra.mxu0 0
        %2782 = vmatprep.subr.bf16.mxu0 0
        %2783 = vmatpush1.bf16.xpose.msra.mxu0 0
        %2784 = vmatprep.subr.bf16.mxu0 0
        %2785 = vmatpush1.bf16.xpose.msra.mxu0 0
        %2786 = vmatprep.mubr.bf16.mxu0 0
        %2787 = vmatmul.mubr.bf16.gmra.mrb[0].mxu0 %v2731
        %v2788 = vpop.f32.mrb[0].mxu0
        %v2789 = vadd.f32 0.0, %v2788
        %v2790 = vpop.f32.mrb[0].mxu0
        %v2791 = vpop.f32.mrb[0].mxu0
        %v2792 = vadd.f32 0.0, %v2791
        %v2793 = vpop.f32.mrb[0].mxu0
        %2794 = vmatprep.mubr.bf16.mxu0 0
        %2795 = vmatmul.mubr.bf16.gmra.mrb[0].mxu0 %v2734
        %v2796 = vpop.f32.mrb[0].mxu0
        %v2797 = vadd.f32 0.0, %v2796
        %v2798 = vpop.f32.mrb[0].mxu0
        %v2799 = vpop.f32.mrb[0].mxu0
        %v2800 = vadd.f32 0.0, %v2799
        %v2801 = vpop.f32.mrb[0].mxu0
        %2802 = vmatprep.mubr.bf16.mxu0 0
        %2803 = vmatmul.mubr.bf16.gmra.mrb[0].mxu0 %v2737
        %v2804 = vpop.f32.mrb[0].mxu0
        %v2805 = vadd.f32 0.0, %v2804
        %v2806 = vpop.f32.mrb[0].mxu0
        %v2807 = vpop.f32.mrb[0].mxu0
        %v2808 = vadd.f32 0.0, %v2807
        %v2809 = vpop.f32.mrb[0].mxu0
        %2810 = vmatprep.mubr.bf16.mxu0 0
        %2811 = vmatmul.mubr.bf16.gmra.mrb[0].mxu0 %v2740
        %v2812 = vpop.f32.mrb[0].mxu0
        %v2813 = vadd.f32 0.0, %v2812
        %v2814 = vpop.f32.mrb[0].mxu0
        %v2815 = vpop.f32.mrb[0].mxu0
        %v2816 = vadd.f32 0.0, %v2815
        %v2817 = vpop.f32.mrb[0].mxu0
        %2818 = vdwg.mxu0
        %v2819 = vsel %vm899, %v2789, -inf
        %2820 = vmax.xlane.f32.xlu0 %v2819
        %v2821 = vpop.xlane.xlu0 %2820
        %v2822 = vsel %vm899, %v2792, -inf
        %2823 = vmax.xlane.f32.xlu0 %v2822
        %v2824 = vpop.xlane.xlu0 %2823
        %v2825 = vsel %vm899, %v2797, -inf
        %2826 = vmax.xlane.f32.xlu0 %v2825
        %v2827 = vpop.xlane.xlu0 %2826
        %v2828 = vsel %vm899, %v2800, -inf
        %2829 = vmax.xlane.f32.xlu0 %v2828
        %v2830 = vpop.xlane.xlu0 %2829
        %v2831 = vsel %vm899, %v2805, -inf
        %2832 = vmax.xlane.f32.xlu0 %v2831
        %v2833 = vpop.xlane.xlu0 %2832
        %v2834 = vsel %vm899, %v2808, -inf
        %2835 = vmax.xlane.f32.xlu0 %v2834
        %v2836 = vpop.xlane.xlu0 %2835
        %v2837 = vsel %vm899, %v2813, -inf
        %2838 = vmax.xlane.f32.xlu0 %v2837
        %v2839 = vpop.xlane.xlu0 %2838
        %v2840 = vsel %vm899, %v2816, -inf
        %2841 = vmax.xlane.f32.xlu0 %v2840
        %v2842 = vpop.xlane.xlu0 %2841
        %v2843 = vsub.f32 %v2789, %v2821
        %v2844 = vsub.f32 %v2792, %v2824
        %v2845 = vsub.f32 %v2797, %v2827
        %v2846 = vsub.f32 %v2800, %v2830
        %v2847 = vsub.f32 %v2805, %v2833
        %v2848 = vsub.f32 %v2808, %v2836
        %v2849 = vsub.f32 %v2813, %v2839
        %v2850 = vsub.f32 %v2816, %v2842
        %v2851 = vmul.f32 %v2843, 1.442695
        %v2852 = vpow.pop %v2851
        %v2853 = vmul.f32 %v2844, 1.442695
        %v2854 = vpow.pop %v2853
        %v2855 = vmul.f32 %v2845, 1.442695
        %v2856 = vpow.pop %v2855
        %v2857 = vmul.f32 %v2846, 1.442695
        %v2858 = vpow.pop %v2857
        %v2859 = vmul.f32 %v2847, 1.442695
        %v2860 = vpow.pop %v2859
        %v2861 = vmul.f32 %v2848, 1.442695
        %v2862 = vpow.pop %v2861
        %v2863 = vmul.f32 %v2849, 1.442695
        %v2864 = vpow.pop %v2863
        %v2865 = vmul.f32 %v2850, 1.442695
        %v2866 = vpow.pop %v2865
        %v2867 = vsel %vm899, %v2852, 0.0
        %2868 = vadd.xlane.f32.xlu0 %v2867
        %v2869 = vpop.xlane.xlu0 %2868
        %v2870 = vsel %vm899, %v2854, 0.0
        %2871 = vadd.xlane.f32.xlu0 %v2870
        %v2872 = vpop.xlane.xlu0 %2871
        %v2873 = vsel %vm899, %v2856, 0.0
        %2874 = vadd.xlane.f32.xlu0 %v2873
        %v2875 = vpop.xlane.xlu0 %2874
        %v2876 = vsel %vm899, %v2858, 0.0
        %2877 = vadd.xlane.f32.xlu0 %v2876
        %v2878 = vpop.xlane.xlu0 %2877
        %v2879 = vsel %vm899, %v2860, 0.0
        %2880 = vadd.xlane.f32.xlu0 %v2879
        %v2881 = vpop.xlane.xlu0 %2880
        %v2882 = vsel %vm899, %v2862, 0.0
        %2883 = vadd.xlane.f32.xlu0 %v2882
        %v2884 = vpop.xlane.xlu0 %2883
        %v2885 = vsel %vm899, %v2864, 0.0
        %2886 = vadd.xlane.f32.xlu0 %v2885
        %v2887 = vpop.xlane.xlu0 %2886
        %v2888 = vsel %vm899, %v2866, 0.0
        %2889 = vadd.xlane.f32.xlu0 %v2888
        %v2890 = vpop.xlane.xlu0 %2889
        %v2891 = vrcp.pop %v2869
        %v2892 = vrcp.pop %v2872
        %v2893 = vrcp.pop %v2875
        %v2894 = vrcp.pop %v2878
        %v2895 = vrcp.pop %v2881
        %v2896 = vrcp.pop %v2884
        %v2897 = vrcp.pop %v2887
        %v2898 = vrcp.pop %v2890
        %v2899 = vmul.f32 %v2852, %v2891
        %v2900 = vmul.f32 %v2854, %v2892
        %v2901 = vmul.f32 %v2856, %v2893
        %v2902 = vmul.f32 %v2858, %v2894
        %v2903 = vmul.f32 %v2860, %v2895
        %v2904 = vmul.f32 %v2862, %v2896
        %v2905 = vmul.f32 %v2864, %v2897
        %v2906 = vmul.f32 %v2866, %v2898
        %v2907 = vpack.c.bf16 %v2900, %v2899
        %v2908 = vpack.c.bf16 %v2902, %v2901
        %v2909 = vpack.c.bf16 %v2904, %v2903
        %v2910 = vpack.c.bf16 %v2906, %v2905
        %2915 = vrot.lane.b32.xlu0 %v799, 96
        %v2916 = vpop.permute.xlu0 %2915
        %2917 = vrot.lane.b32.xlu0 %v802, 96
        %v2918 = vpop.permute.xlu0 %2917
        %2919 = vrot.lane.b32.xlu0 %v805, 96
        %v2920 = vpop.permute.xlu0 %2919
        %2921 = vrot.lane.b32.xlu0 %v808, 96
        %v2922 = vpop.permute.xlu0 %2921
        %v2928 = vsel %vm899, %v2907, 0
        %v2931 = vsel %vm899, %v2908, 0
        %v2934 = vsel %vm899, %v2909, 0
        %v2937 = vsel %vm899, %v2910, 0
        %2939 = vmatprep.subr.bf16.mxu0 0
        %2940 = vmatpush1.bf16.msra.mxu0 %v2916
        %2941 = vmatprep.subr.bf16.mxu0 0
        %2942 = vmatpush1.bf16.msra.mxu0 %v2918
        %2943 = vmatprep.subr.bf16.mxu0 0
        %2944 = vmatpush1.bf16.msra.mxu0 %v2920
        %2945 = vmatprep.subr.bf16.mxu0 0
        %2946 = vmatpush1.bf16.msra.mxu0 %v2922
        %2947 = vmatprep.subr.bf16.mxu0 0
        %2948 = vmatpush1.bf16.msra.mxu0 0
        %2949 = vmatprep.subr.bf16.mxu0 0
        %2950 = vmatpush1.bf16.msra.mxu0 0
        %2951 = vmatprep.subr.bf16.mxu0 0
        %2952 = vmatpush1.bf16.msra.mxu0 0
        %2953 = vmatprep.subr.bf16.mxu0 0
        %2954 = vmatpush1.bf16.msra.mxu0 0
        %2955 = vmatprep.subr.bf16.mxu0 0
        %2956 = vmatpush1.bf16.msra.mxu0 0
        %2957 = vmatprep.subr.bf16.mxu0 0
        %2958 = vmatpush1.bf16.msra.mxu0 0
        %2959 = vmatprep.subr.bf16.mxu0 0
        %2960 = vmatpush1.bf16.msra.mxu0 0
        %2961 = vmatprep.subr.bf16.mxu0 0
        %2962 = vmatpush1.bf16.msra.mxu0 0
        %2963 = vmatprep.subr.bf16.mxu0 0
        %2964 = vmatpush1.bf16.msra.mxu0 0
        %2965 = vmatprep.subr.bf16.mxu0 0
        %2966 = vmatpush1.bf16.msra.mxu0 0
        %2967 = vmatprep.subr.bf16.mxu0 0
        %2968 = vmatpush1.bf16.msra.mxu0 0
        %2969 = vmatprep.subr.bf16.mxu0 0
        %2970 = vmatpush1.bf16.msra.mxu0 0
        %2971 = vmatprep.mubr.bf16.mxu0 0
        %2972 = vmatmul.mubr.bf16.gmra.mrb[0].mxu0 %v2928
        %v2973 = vpop.f32.mrb[0].mxu0
        %v2974 = vadd.f32 0.0, %v2973
        %v2975 = vpop.f32.mrb[0].mxu0
        %v2976 = vpop.f32.mrb[0].mxu0
        %v2977 = vadd.f32 0.0, %v2976
        %v2978 = vpop.f32.mrb[0].mxu0
        %2979 = vmatprep.mubr.bf16.mxu0 0
        %2980 = vmatmul.mubr.bf16.gmra.mrb[0].mxu0 %v2931
        %v2981 = vpop.f32.mrb[0].mxu0
        %v2982 = vadd.f32 0.0, %v2981
        %v2983 = vpop.f32.mrb[0].mxu0
        %v2984 = vpop.f32.mrb[0].mxu0
        %v2985 = vadd.f32 0.0, %v2984
        %v2986 = vpop.f32.mrb[0].mxu0
        %2987 = vmatprep.mubr.bf16.mxu0 0
        %2988 = vmatmul.mubr.bf16.gmra.mrb[0].mxu0 %v2934
        %v2989 = vpop.f32.mrb[0].mxu0
        %v2990 = vadd.f32 0.0, %v2989
        %v2991 = vpop.f32.mrb[0].mxu0
        %v2992 = vpop.f32.mrb[0].mxu0
        %v2993 = vadd.f32 0.0, %v2992
        %v2994 = vpop.f32.mrb[0].mxu0
        %2995 = vmatprep.mubr.bf16.mxu0 0
        %2996 = vmatmul.mubr.bf16.gmra.mrb[0].mxu0 %v2937
        %v2997 = vpop.f32.mrb[0].mxu0
        %v2998 = vadd.f32 0.0, %v2997
        %v2999 = vpop.f32.mrb[0].mxu0
        %v3000 = vpop.f32.mrb[0].mxu0
        %v3001 = vadd.f32 0.0, %v3000
        %v3002 = vpop.f32.mrb[0].mxu0
        %3003 = vdwg.mxu0
        %v3004 = vpack.c.bf16 %v2977, %v2974
        %v3005 = vpack.c.bf16 %v2985, %v2982
        %v3006 = vpack.c.bf16 %v2993, %v2990
        %v3007 = vpack.c.bf16 %v3001, %v2998
        %v3009 = vsel %vm809, %v3004, 0
        %v3012 = vsel %vm809, %v3005, 0
        %v3015 = vsel %vm809, %v3006, 0
        %v3018 = vsel %vm809, %v3007, 0
        %3020 = vmatprep.subr.bf16.mxu0 0
        %3021 = vmatpush1.bf16.msra.mxu0 %v1488
        %3022 = vmatprep.subr.bf16.mxu0 0
        %3023 = vmatpush1.bf16.msra.mxu0 %v1489
        %3024 = vmatprep.subr.bf16.mxu0 0
        %3025 = vmatpush1.bf16.msra.mxu0 0
        %3026 = vmatprep.subr.bf16.mxu0 0
        %3027 = vmatpush1.bf16.msra.mxu0 0
        %3028 = vmatprep.subr.bf16.mxu0 0
        %3029 = vmatpush1.bf16.msra.mxu0 0
        %3030 = vmatprep.subr.bf16.mxu0 0
        %3031 = vmatpush1.bf16.msra.mxu0 0
        %3032 = vmatprep.subr.bf16.mxu0 0
        %3033 = vmatpush1.bf16.msra.mxu0 0
        %3034 = vmatprep.subr.bf16.mxu0 0
        %3035 = vmatpush1.bf16.msra.mxu0 0
        %3036 = vmatprep.subr.bf16.mxu0 0
        %3037 = vmatpush1.bf16.msra.mxu0 0
        %3038 = vmatprep.subr.bf16.mxu0 0
        %3039 = vmatpush1.bf16.msra.mxu0 0
        %3040 = vmatprep.subr.bf16.mxu0 0
        %3041 = vmatpush1.bf16.msra.mxu0 0
        %3042 = vmatprep.subr.bf16.mxu0 0
        %3043 = vmatpush1.bf16.msra.mxu0 0
        %3044 = vmatprep.subr.bf16.mxu0 0
        %3045 = vmatpush1.bf16.msra.mxu0 0
        %3046 = vmatprep.subr.bf16.mxu0 0
        %3047 = vmatpush1.bf16.msra.mxu0 0
        %3048 = vmatprep.subr.bf16.mxu0 0
        %3049 = vmatpush1.bf16.msra.mxu0 0
        %3050 = vmatprep.subr.bf16.mxu0 0
        %3051 = vmatpush1.bf16.msra.mxu0 0
        %3052 = vmatprep.mubr.bf16.mxu0 0
        %3053 = vmatmul.mubr.bf16.gmra.mrb[0].mxu0 %v3009
        %v3054 = vpop.f32.mrb[0].mxu0
        %v3055 = vadd.f32 0.0, %v3054
        %v3056 = vpop.f32.mrb[0].mxu0
        %v3057 = vpop.f32.mrb[0].mxu0
        %v3058 = vadd.f32 0.0, %v3057
        %v3059 = vpop.f32.mrb[0].mxu0
        %3060 = vmatprep.mubr.bf16.mxu0 0
        %3061 = vmatmul.mubr.bf16.gmra.mrb[0].mxu0 %v3012
        %v3062 = vpop.f32.mrb[0].mxu0
        %v3063 = vadd.f32 0.0, %v3062
        %v3064 = vpop.f32.mrb[0].mxu0
        %v3065 = vpop.f32.mrb[0].mxu0
        %v3066 = vadd.f32 0.0, %v3065
        %v3067 = vpop.f32.mrb[0].mxu0
        %3068 = vmatprep.mubr.bf16.mxu0 0
        %3069 = vmatmul.mubr.bf16.gmra.mrb[0].mxu0 %v3015
        %v3070 = vpop.f32.mrb[0].mxu0
        %v3071 = vadd.f32 0.0, %v3070
        %v3072 = vpop.f32.mrb[0].mxu0
        %v3073 = vpop.f32.mrb[0].mxu0
        %v3074 = vadd.f32 0.0, %v3073
        %v3075 = vpop.f32.mrb[0].mxu0
        %3076 = vmatprep.mubr.bf16.mxu0 0
        %3077 = vmatmul.mubr.bf16.gmra.mrb[0].mxu0 %v3018
        %v3078 = vpop.f32.mrb[0].mxu0
        %v3079 = vadd.f32 0.0, %v3078
        %v3080 = vpop.f32.mrb[0].mxu0
        %v3081 = vpop.f32.mrb[0].mxu0
        %v3082 = vadd.f32 0.0, %v3081
        %v3083 = vpop.f32.mrb[0].mxu0
        %3084 = vdwg.mxu0
        %v3085 = vadd.f32 %v2698, %v3055
        %v3086 = vadd.f32 %v2699, %v3058
        %v3087 = vadd.f32 %v2700, %v3063
        %v3088 = vadd.f32 %v2701, %v3066
        %v3089 = vadd.f32 %v2702, %v3071
        %v3090 = vadd.f32 %v2703, %v3074
        %v3091 = vadd.f32 %v2704, %v3079
        %v3092 = vadd.f32 %v2705, %v3082
        %3093 = vrot.lane.b32.xlu0 %v797, 64
        %v3094 = vpop.permute.xlu0 %3093
        %3095 = vrot.lane.b32.xlu0 %v800, 64
        %v3096 = vpop.permute.xlu0 %3095
        %3097 = vrot.lane.b32.xlu0 %v803, 64
        %v3098 = vpop.permute.xlu0 %3097
        %3099 = vrot.lane.b32.xlu0 %v806, 64
        %v3100 = vpop.permute.xlu0 %3099
        %3101 = vrot.lane.b32.xlu0 %v798, 64
        %v3102 = vpop.permute.xlu0 %3101
        %3103 = vrot.lane.b32.xlu0 %v801, 64
        %v3104 = vpop.permute.xlu0 %3103
        %3105 = vrot.lane.b32.xlu0 %v804, 64
        %v3106 = vpop.permute.xlu0 %3105
        %3107 = vrot.lane.b32.xlu0 %v807, 64
        %v3108 = vpop.permute.xlu0 %3107
        %v3110 = vsel %vm809, %v3094, 0
        %v3113 = vsel %vm809, %v3096, 0
        %v3116 = vsel %vm809, %v3098, 0
        %v3119 = vsel %vm809, %v3100, 0
        %v3122 = vsel %vm809, %v3102, 0
        %v3125 = vsel %vm809, %v3104, 0
        %v3128 = vsel %vm809, %v3106, 0
        %v3131 = vsel %vm809, %v3108, 0
        %3133 = vmatprep.subr.bf16.mxu0 0
        %3134 = vmatpush1.bf16.xpose.msra.mxu0 %v3122
        %3135 = vmatprep.subr.bf16.mxu0 0
        %3136 = vmatpush1.bf16.xpose.msra.mxu0 %v3125
        %3137 = vmatprep.subr.bf16.mxu0 0
        %3138 = vmatpush1.bf16.xpose.msra.mxu0 %v3128
        %3139 = vmatprep.subr.bf16.mxu0 0
        %3140 = vmatpush1.bf16.xpose.msra.mxu0 %v3131
        %3141 = vmatprep.subr.bf16.mxu0 0
        %3142 = vmatpush1.bf16.xpose.msra.mxu0 0
        %3143 = vmatprep.subr.bf16.mxu0 0
        %3144 = vmatpush1.bf16.xpose.msra.mxu0 0
        %3145 = vmatprep.subr.bf16.mxu0 0
        %3146 = vmatpush1.bf16.xpose.msra.mxu0 0
        %3147 = vmatprep.subr.bf16.mxu0 0
        %3148 = vmatpush1.bf16.xpose.msra.mxu0 0
        %3149 = vmatprep.subr.bf16.mxu0 0
        %3150 = vmatpush1.bf16.xpose.msra.mxu0 0
        %3151 = vmatprep.subr.bf16.mxu0 0
        %3152 = vmatpush1.bf16.xpose.msra.mxu0 0
        %3153 = vmatprep.subr.bf16.mxu0 0
        %3154 = vmatpush1.bf16.xpose.msra.mxu0 0
        %3155 = vmatprep.subr.bf16.mxu0 0
        %3156 = vmatpush1.bf16.xpose.msra.mxu0 0
        %3157 = vmatprep.subr.bf16.mxu0 0
        %3158 = vmatpush1.bf16.xpose.msra.mxu0 0
        %3159 = vmatprep.subr.bf16.mxu0 0
        %3160 = vmatpush1.bf16.xpose.msra.mxu0 0
        %3161 = vmatprep.subr.bf16.mxu0 0
        %3162 = vmatpush1.bf16.xpose.msra.mxu0 0
        %3163 = vmatprep.subr.bf16.mxu0 0
        %3164 = vmatpush1.bf16.xpose.msra.mxu0 0
        %3165 = vmatprep.mubr.bf16.mxu0 0
        %3166 = vmatmul.mubr.bf16.gmra.mrb[0].mxu0 %v3110
        %v3167 = vpop.f32.mrb[0].mxu0
        %v3168 = vadd.f32 0.0, %v3167
        %v3169 = vpop.f32.mrb[0].mxu0
        %v3170 = vpop.f32.mrb[0].mxu0
        %v3171 = vadd.f32 0.0, %v3170
        %v3172 = vpop.f32.mrb[0].mxu0
        %3173 = vmatprep.mubr.bf16.mxu0 0
        %3174 = vmatmul.mubr.bf16.gmra.mrb[0].mxu0 %v3113
        %v3175 = vpop.f32.mrb[0].mxu0
        %v3176 = vadd.f32 0.0, %v3175
        %v3177 = vpop.f32.mrb[0].mxu0
        %v3178 = vpop.f32.mrb[0].mxu0
        %v3179 = vadd.f32 0.0, %v3178
        %v3180 = vpop.f32.mrb[0].mxu0
        %3181 = vmatprep.mubr.bf16.mxu0 0
        %3182 = vmatmul.mubr.bf16.gmra.mrb[0].mxu0 %v3116
        %v3183 = vpop.f32.mrb[0].mxu0
        %v3184 = vadd.f32 0.0, %v3183
        %v3185 = vpop.f32.mrb[0].mxu0
        %v3186 = vpop.f32.mrb[0].mxu0
        %v3187 = vadd.f32 0.0, %v3186
        %v3188 = vpop.f32.mrb[0].mxu0
        %3189 = vmatprep.mubr.bf16.mxu0 0
        %3190 = vmatmul.mubr.bf16.gmra.mrb[0].mxu0 %v3119
        %v3191 = vpop.f32.mrb[0].mxu0
        %v3192 = vadd.f32 0.0, %v3191
        %v3193 = vpop.f32.mrb[0].mxu0
        %v3194 = vpop.f32.mrb[0].mxu0
        %v3195 = vadd.f32 0.0, %v3194
        %v3196 = vpop.f32.mrb[0].mxu0
        %3197 = vdwg.mxu0
        %v3198 = vsel %vm899, %v3168, -inf
        %3199 = vmax.xlane.f32.xlu0 %v3198
        %v3200 = vpop.xlane.xlu0 %3199
        %v3201 = vsel %vm899, %v3171, -inf
        %3202 = vmax.xlane.f32.xlu0 %v3201
        %v3203 = vpop.xlane.xlu0 %3202
        %v3204 = vsel %vm899, %v3176, -inf
        %3205 = vmax.xlane.f32.xlu0 %v3204
        %v3206 = vpop.xlane.xlu0 %3205
        %v3207 = vsel %vm899, %v3179, -inf
        %3208 = vmax.xlane.f32.xlu0 %v3207
        %v3209 = vpop.xlane.xlu0 %3208
        %v3210 = vsel %vm899, %v3184, -inf
        %3211 = vmax.xlane.f32.xlu0 %v3210
        %v3212 = vpop.xlane.xlu0 %3211
        %v3213 = vsel %vm899, %v3187, -inf
        %3214 = vmax.xlane.f32.xlu0 %v3213
        %v3215 = vpop.xlane.xlu0 %3214
        %v3216 = vsel %vm899, %v3192, -inf
        %3217 = vmax.xlane.f32.xlu0 %v3216
        %v3218 = vpop.xlane.xlu0 %3217
        %v3219 = vsel %vm899, %v3195, -inf
        %3220 = vmax.xlane.f32.xlu0 %v3219
        %v3221 = vpop.xlane.xlu0 %3220
        %v3222 = vsub.f32 %v3168, %v3200
        %v3223 = vsub.f32 %v3171, %v3203
        %v3224 = vsub.f32 %v3176, %v3206
        %v3225 = vsub.f32 %v3179, %v3209
        %v3226 = vsub.f32 %v3184, %v3212
        %v3227 = vsub.f32 %v3187, %v3215
        %v3228 = vsub.f32 %v3192, %v3218
        %v3229 = vsub.f32 %v3195, %v3221
        %v3230 = vmul.f32 %v3222, 1.442695
        %v3231 = vpow.pop %v3230
        %v3232 = vmul.f32 %v3223, 1.442695
        %v3233 = vpow.pop %v3232
        %v3234 = vmul.f32 %v3224, 1.442695
        %v3235 = vpow.pop %v3234
        %v3236 = vmul.f32 %v3225, 1.442695
        %v3237 = vpow.pop %v3236
        %v3238 = vmul.f32 %v3226, 1.442695
        %v3239 = vpow.pop %v3238
        %v3240 = vmul.f32 %v3227, 1.442695
        %v3241 = vpow.pop %v3240
        %v3242 = vmul.f32 %v3228, 1.442695
        %v3243 = vpow.pop %v3242
        %v3244 = vmul.f32 %v3229, 1.442695
        %v3245 = vpow.pop %v3244
        %v3246 = vsel %vm899, %v3231, 0.0
        %3247 = vadd.xlane.f32.xlu0 %v3246
        %v3248 = vpop.xlane.xlu0 %3247
        %v3249 = vsel %vm899, %v3233, 0.0
        %3250 = vadd.xlane.f32.xlu0 %v3249
        %v3251 = vpop.xlane.xlu0 %3250
        %v3252 = vsel %vm899, %v3235, 0.0
        %3253 = vadd.xlane.f32.xlu0 %v3252
        %v3254 = vpop.xlane.xlu0 %3253
        %v3255 = vsel %vm899, %v3237, 0.0
        %3256 = vadd.xlane.f32.xlu0 %v3255
        %v3257 = vpop.xlane.xlu0 %3256
        %v3258 = vsel %vm899, %v3239, 0.0
        %3259 = vadd.xlane.f32.xlu0 %v3258
        %v3260 = vpop.xlane.xlu0 %3259
        %v3261 = vsel %vm899, %v3241, 0.0
        %3262 = vadd.xlane.f32.xlu0 %v3261
        %v3263 = vpop.xlane.xlu0 %3262
        %v3264 = vsel %vm899, %v3243, 0.0
        %3265 = vadd.xlane.f32.xlu0 %v3264
        %v3266 = vpop.xlane.xlu0 %3265
        %v3267 = vsel %vm899, %v3245, 0.0
        %3268 = vadd.xlane.f32.xlu0 %v3267
        %v3269 = vpop.xlane.xlu0 %3268
        %v3270 = vrcp.pop %v3248
        %v3271 = vrcp.pop %v3251
        %v3272 = vrcp.pop %v3254
        %v3273 = vrcp.pop %v3257
        %v3274 = vrcp.pop %v3260
        %v3275 = vrcp.pop %v3263
        %v3276 = vrcp.pop %v3266
        %v3277 = vrcp.pop %v3269
        %v3278 = vmul.f32 %v3231, %v3270
        %v3279 = vmul.f32 %v3233, %v3271
        %v3280 = vmul.f32 %v3235, %v3272
        %v3281 = vmul.f32 %v3237, %v3273
        %v3282 = vmul.f32 %v3239, %v3274
        %v3283 = vmul.f32 %v3241, %v3275
        %v3284 = vmul.f32 %v3243, %v3276
        %v3285 = vmul.f32 %v3245, %v3277
        %v3286 = vpack.c.bf16 %v3279, %v3278
        %v3287 = vpack.c.bf16 %v3281, %v3280
        %v3288 = vpack.c.bf16 %v3283, %v3282
        %v3289 = vpack.c.bf16 %v3285, %v3284
        %3290 = vrot.lane.b32.xlu0 %v799, 64
        %v3291 = vpop.permute.xlu0 %3290
        %3292 = vrot.lane.b32.xlu0 %v802, 64
        %v3293 = vpop.permute.xlu0 %3292
        %3294 = vrot.lane.b32.xlu0 %v805, 64
        %v3295 = vpop.permute.xlu0 %3294
        %3296 = vrot.lane.b32.xlu0 %v808, 64
        %v3297 = vpop.permute.xlu0 %3296
        %v3303 = vsel %vm899, %v3286, 0
        %v3306 = vsel %vm899, %v3287, 0
        %v3309 = vsel %vm899, %v3288, 0
        %v3312 = vsel %vm899, %v3289, 0
        %3314 = vmatprep.subr.bf16.mxu0 0
        %3315 = vmatpush1.bf16.msra.mxu0 %v3291
        %3316 = vmatprep.subr.bf16.mxu0 0
        %3317 = vmatpush1.bf16.msra.mxu0 %v3293
        %3318 = vmatprep.subr.bf16.mxu0 0
        %3319 = vmatpush1.bf16.msra.mxu0 %v3295
        %3320 = vmatprep.subr.bf16.mxu0 0
        %3321 = vmatpush1.bf16.msra.mxu0 %v3297
        %3322 = vmatprep.subr.bf16.mxu0 0
        %3323 = vmatpush1.bf16.msra.mxu0 0
        %3324 = vmatprep.subr.bf16.mxu0 0
        %3325 = vmatpush1.bf16.msra.mxu0 0
        %3326 = vmatprep.subr.bf16.mxu0 0
        %3327 = vmatpush1.bf16.msra.mxu0 0
        %3328 = vmatprep.subr.bf16.mxu0 0
        %3329 = vmatpush1.bf16.msra.mxu0 0
        %3330 = vmatprep.subr.bf16.mxu0 0
        %3331 = vmatpush1.bf16.msra.mxu0 0
        %3332 = vmatprep.subr.bf16.mxu0 0
        %3333 = vmatpush1.bf16.msra.mxu0 0
        %3334 = vmatprep.subr.bf16.mxu0 0
        %3335 = vmatpush1.bf16.msra.mxu0 0
        %3336 = vmatprep.subr.bf16.mxu0 0
        %3337 = vmatpush1.bf16.msra.mxu0 0
        %3338 = vmatprep.subr.bf16.mxu0 0
        %3339 = vmatpush1.bf16.msra.mxu0 0
        %3340 = vmatprep.subr.bf16.mxu0 0
        %3341 = vmatpush1.bf16.msra.mxu0 0
        %3342 = vmatprep.subr.bf16.mxu0 0
        %3343 = vmatpush1.bf16.msra.mxu0 0
        %3344 = vmatprep.subr.bf16.mxu0 0
        %3345 = vmatpush1.bf16.msra.mxu0 0
        %3346 = vmatprep.mubr.bf16.mxu0 0
        %3347 = vmatmul.mubr.bf16.gmra.mrb[0].mxu0 %v3303
        %v3348 = vpop.f32.mrb[0].mxu0
        %v3349 = vadd.f32 0.0, %v3348
        %v3350 = vpop.f32.mrb[0].mxu0
        %v3351 = vpop.f32.mrb[0].mxu0
        %v3352 = vadd.f32 0.0, %v3351
        %v3353 = vpop.f32.mrb[0].mxu0
        %3354 = vmatprep.mubr.bf16.mxu0 0
        %3355 = vmatmul.mubr.bf16.gmra.mrb[0].mxu0 %v3306
        %v3356 = vpop.f32.mrb[0].mxu0
        %v3357 = vadd.f32 0.0, %v3356
        %v3358 = vpop.f32.mrb[0].mxu0
        %v3359 = vpop.f32.mrb[0].mxu0
        %v3360 = vadd.f32 0.0, %v3359
        %v3361 = vpop.f32.mrb[0].mxu0
        %3362 = vmatprep.mubr.bf16.mxu0 0
        %3363 = vmatmul.mubr.bf16.gmra.mrb[0].mxu0 %v3309
        %v3364 = vpop.f32.mrb[0].mxu0
        %v3365 = vadd.f32 0.0, %v3364
        %v3366 = vpop.f32.mrb[0].mxu0
        %v3367 = vpop.f32.mrb[0].mxu0
        %v3368 = vadd.f32 0.0, %v3367
        %v3369 = vpop.f32.mrb[0].mxu0
        %3370 = vmatprep.mubr.bf16.mxu0 0
        %3371 = vmatmul.mubr.bf16.gmra.mrb[0].mxu0 %v3312
        %v3372 = vpop.f32.mrb[0].mxu0
        %v3373 = vadd.f32 0.0, %v3372
        %v3374 = vpop.f32.mrb[0].mxu0
        %v3375 = vpop.f32.mrb[0].mxu0
        %v3376 = vadd.f32 0.0, %v3375
        %v3377 = vpop.f32.mrb[0].mxu0
        %3378 = vdwg.mxu0
        %v3379 = vpack.c.bf16 %v3352, %v3349
        %v3380 = vpack.c.bf16 %v3360, %v3357
        %v3381 = vpack.c.bf16 %v3368, %v3365
        %v3382 = vpack.c.bf16 %v3376, %v3373
        %v3384 = vsel %vm809, %v3379, 0
        %v3387 = vsel %vm809, %v3380, 0
        %v3390 = vsel %vm809, %v3381, 0
        %v3393 = vsel %vm809, %v3382, 0
        %3395 = vmatprep.subr.bf16.mxu0 0
        %3396 = vmatpush1.bf16.msra.mxu0 %v1879
        %3397 = vmatprep.subr.bf16.mxu0 0
        %3398 = vmatpush1.bf16.msra.mxu0 %v1880
        %3399 = vmatprep.subr.bf16.mxu0 0
        %3400 = vmatpush1.bf16.msra.mxu0 0
        %3401 = vmatprep.subr.bf16.mxu0 0
        %3402 = vmatpush1.bf16.msra.mxu0 0
        %3403 = vmatprep.subr.bf16.mxu0 0
        %3404 = vmatpush1.bf16.msra.mxu0 0
        %3405 = vmatprep.subr.bf16.mxu0 0
        %3406 = vmatpush1.bf16.msra.mxu0 0
        %3407 = vmatprep.subr.bf16.mxu0 0
        %3408 = vmatpush1.bf16.msra.mxu0 0
        %3409 = vmatprep.subr.bf16.mxu0 0
        %3410 = vmatpush1.bf16.msra.mxu0 0
        %3411 = vmatprep.subr.bf16.mxu0 0
        %3412 = vmatpush1.bf16.msra.mxu0 0
        %3413 = vmatprep.subr.bf16.mxu0 0
        %3414 = vmatpush1.bf16.msra.mxu0 0
        %3415 = vmatprep.subr.bf16.mxu0 0
        %3416 = vmatpush1.bf16.msra.mxu0 0
        %3417 = vmatprep.subr.bf16.mxu0 0
        %3418 = vmatpush1.bf16.msra.mxu0 0
        %3419 = vmatprep.subr.bf16.mxu0 0
        %3420 = vmatpush1.bf16.msra.mxu0 0
        %3421 = vmatprep.subr.bf16.mxu0 0
        %3422 = vmatpush1.bf16.msra.mxu0 0
        %3423 = vmatprep.subr.bf16.mxu0 0
        %3424 = vmatpush1.bf16.msra.mxu0 0
        %3425 = vmatprep.subr.bf16.mxu0 0
        %3426 = vmatpush1.bf16.msra.mxu0 0
        %3427 = vmatprep.mubr.bf16.mxu0 0
        %3428 = vmatmul.mubr.bf16.gmra.mrb[0].mxu0 %v3384
        %v3429 = vpop.f32.mrb[0].mxu0
        %v3430 = vadd.f32 0.0, %v3429
        %v3431 = vpop.f32.mrb[0].mxu0
        %v3432 = vpop.f32.mrb[0].mxu0
        %v3433 = vadd.f32 0.0, %v3432
        %v3434 = vpop.f32.mrb[0].mxu0
        %3435 = vmatprep.mubr.bf16.mxu0 0
        %3436 = vmatmul.mubr.bf16.gmra.mrb[0].mxu0 %v3387
        %v3437 = vpop.f32.mrb[0].mxu0
        %v3438 = vadd.f32 0.0, %v3437
        %v3439 = vpop.f32.mrb[0].mxu0
        %v3440 = vpop.f32.mrb[0].mxu0
        %v3441 = vadd.f32 0.0, %v3440
        %v3442 = vpop.f32.mrb[0].mxu0
        %3443 = vmatprep.mubr.bf16.mxu0 0
        %3444 = vmatmul.mubr.bf16.gmra.mrb[0].mxu0 %v3390
        %v3445 = vpop.f32.mrb[0].mxu0
        %v3446 = vadd.f32 0.0, %v3445
        %v3447 = vpop.f32.mrb[0].mxu0
        %v3448 = vpop.f32.mrb[0].mxu0
        %v3449 = vadd.f32 0.0, %v3448
        %v3450 = vpop.f32.mrb[0].mxu0
        %3451 = vmatprep.mubr.bf16.mxu0 0
        %3452 = vmatmul.mubr.bf16.gmra.mrb[0].mxu0 %v3393
        %v3453 = vpop.f32.mrb[0].mxu0
        %v3454 = vadd.f32 0.0, %v3453
        %v3455 = vpop.f32.mrb[0].mxu0
        %v3456 = vpop.f32.mrb[0].mxu0
        %v3457 = vadd.f32 0.0, %v3456
        %v3458 = vpop.f32.mrb[0].mxu0
        %3459 = vdwg.mxu0
        %v3460 = vadd.f32 %v3085, %v3430
        %v3461 = vadd.f32 %v3086, %v3433
        %v3462 = vadd.f32 %v3087, %v3438
        %v3463 = vadd.f32 %v3088, %v3441
        %v3464 = vadd.f32 %v3089, %v3446
        %v3465 = vadd.f32 %v3090, %v3449
        %v3466 = vadd.f32 %v3091, %v3454
        %v3467 = vadd.f32 %v3092, %v3457
        %3468 = vrot.lane.b32.xlu0 %v797, 32
        %v3469 = vpop.permute.xlu0 %3468
        %3470 = vrot.lane.b32.xlu0 %v800, 32
        %v3471 = vpop.permute.xlu0 %3470
        %3472 = vrot.lane.b32.xlu0 %v803, 32
        %v3473 = vpop.permute.xlu0 %3472
        %3474 = vrot.lane.b32.xlu0 %v806, 32
        %v3475 = vpop.permute.xlu0 %3474
        %3476 = vrot.lane.b32.xlu0 %v798, 32
        %v3477 = vpop.permute.xlu0 %3476
        %3478 = vrot.lane.b32.xlu0 %v801, 32
        %v3479 = vpop.permute.xlu0 %3478
        %3480 = vrot.lane.b32.xlu0 %v804, 32
        %v3481 = vpop.permute.xlu0 %3480
        %3482 = vrot.lane.b32.xlu0 %v807, 32
        %v3483 = vpop.permute.xlu0 %3482
        %v3485 = vsel %vm809, %v3469, 0
        %v3488 = vsel %vm809, %v3471, 0
        %v3491 = vsel %vm809, %v3473, 0
        %v3494 = vsel %vm809, %v3475, 0
        %v3497 = vsel %vm809, %v3477, 0
        %v3500 = vsel %vm809, %v3479, 0
        %v3503 = vsel %vm809, %v3481, 0
        %v3506 = vsel %vm809, %v3483, 0
        %3508 = vmatprep.subr.bf16.mxu0 0
        %3509 = vmatpush1.bf16.xpose.msra.mxu0 %v3497
        %3510 = vmatprep.subr.bf16.mxu0 0
        %3511 = vmatpush1.bf16.xpose.msra.mxu0 %v3500
        %3512 = vmatprep.subr.bf16.mxu0 0
        %3513 = vmatpush1.bf16.xpose.msra.mxu0 %v3503
        %3514 = vmatprep.subr.bf16.mxu0 0
        %3515 = vmatpush1.bf16.xpose.msra.mxu0 %v3506
        %3516 = vmatprep.subr.bf16.mxu0 0
        %3517 = vmatpush1.bf16.xpose.msra.mxu0 0
        %3518 = vmatprep.subr.bf16.mxu0 0
        %3519 = vmatpush1.bf16.xpose.msra.mxu0 0
        %3520 = vmatprep.subr.bf16.mxu0 0
        %3521 = vmatpush1.bf16.xpose.msra.mxu0 0
        %3522 = vmatprep.subr.bf16.mxu0 0
        %3523 = vmatpush1.bf16.xpose.msra.mxu0 0
        %3524 = vmatprep.subr.bf16.mxu0 0
        %3525 = vmatpush1.bf16.xpose.msra.mxu0 0
        %3526 = vmatprep.subr.bf16.mxu0 0
        %3527 = vmatpush1.bf16.xpose.msra.mxu0 0
        %3528 = vmatprep.subr.bf16.mxu0 0
        %3529 = vmatpush1.bf16.xpose.msra.mxu0 0
        %3530 = vmatprep.subr.bf16.mxu0 0
        %3531 = vmatpush1.bf16.xpose.msra.mxu0 0
        %3532 = vmatprep.subr.bf16.mxu0 0
        %3533 = vmatpush1.bf16.xpose.msra.mxu0 0
        %3534 = vmatprep.subr.bf16.mxu0 0
        %3535 = vmatpush1.bf16.xpose.msra.mxu0 0
        %3536 = vmatprep.subr.bf16.mxu0 0
        %3537 = vmatpush1.bf16.xpose.msra.mxu0 0
        %3538 = vmatprep.subr.bf16.mxu0 0
        %3539 = vmatpush1.bf16.xpose.msra.mxu0 0
        %3540 = vmatprep.mubr.bf16.mxu0 0
        %3541 = vmatmul.mubr.bf16.gmra.mrb[0].mxu0 %v3485
        %v3542 = vpop.f32.mrb[0].mxu0
        %v3543 = vadd.f32 0.0, %v3542
        %v3544 = vpop.f32.mrb[0].mxu0
        %v3545 = vpop.f32.mrb[0].mxu0
        %v3546 = vadd.f32 0.0, %v3545
        %v3547 = vpop.f32.mrb[0].mxu0
        %3548 = vmatprep.mubr.bf16.mxu0 0
        %3549 = vmatmul.mubr.bf16.gmra.mrb[0].mxu0 %v3488
        %v3550 = vpop.f32.mrb[0].mxu0
        %v3551 = vadd.f32 0.0, %v3550
        %v3552 = vpop.f32.mrb[0].mxu0
        %v3553 = vpop.f32.mrb[0].mxu0
        %v3554 = vadd.f32 0.0, %v3553
        %v3555 = vpop.f32.mrb[0].mxu0
        %3556 = vmatprep.mubr.bf16.mxu0 0
        %3557 = vmatmul.mubr.bf16.gmra.mrb[0].mxu0 %v3491
        %v3558 = vpop.f32.mrb[0].mxu0
        %v3559 = vadd.f32 0.0, %v3558
        %v3560 = vpop.f32.mrb[0].mxu0
        %v3561 = vpop.f32.mrb[0].mxu0
        %v3562 = vadd.f32 0.0, %v3561
        %v3563 = vpop.f32.mrb[0].mxu0
        %3564 = vmatprep.mubr.bf16.mxu0 0
        %3565 = vmatmul.mubr.bf16.gmra.mrb[0].mxu0 %v3494
        %v3566 = vpop.f32.mrb[0].mxu0
        %v3567 = vadd.f32 0.0, %v3566
        %v3568 = vpop.f32.mrb[0].mxu0
        %v3569 = vpop.f32.mrb[0].mxu0
        %v3570 = vadd.f32 0.0, %v3569
        %v3571 = vpop.f32.mrb[0].mxu0
        %3572 = vdwg.mxu0
        %v3573 = vsel %vm899, %v3543, -inf
        %3574 = vmax.xlane.f32.xlu0 %v3573
        %v3575 = vpop.xlane.xlu0 %3574
        %v3576 = vsel %vm899, %v3546, -inf
        %3577 = vmax.xlane.f32.xlu0 %v3576
        %v3578 = vpop.xlane.xlu0 %3577
        %v3579 = vsel %vm899, %v3551, -inf
        %3580 = vmax.xlane.f32.xlu0 %v3579
        %v3581 = vpop.xlane.xlu0 %3580
        %v3582 = vsel %vm899, %v3554, -inf
        %3583 = vmax.xlane.f32.xlu0 %v3582
        %v3584 = vpop.xlane.xlu0 %3583
        %v3585 = vsel %vm899, %v3559, -inf
        %3586 = vmax.xlane.f32.xlu0 %v3585
        %v3587 = vpop.xlane.xlu0 %3586
        %v3588 = vsel %vm899, %v3562, -inf
        %3589 = vmax.xlane.f32.xlu0 %v3588
        %v3590 = vpop.xlane.xlu0 %3589
        %v3591 = vsel %vm899, %v3567, -inf
        %3592 = vmax.xlane.f32.xlu0 %v3591
        %v3593 = vpop.xlane.xlu0 %3592
        %v3594 = vsel %vm899, %v3570, -inf
        %3595 = vmax.xlane.f32.xlu0 %v3594
        %v3596 = vpop.xlane.xlu0 %3595
        %v3597 = vsub.f32 %v3543, %v3575
        %v3598 = vsub.f32 %v3546, %v3578
        %v3599 = vsub.f32 %v3551, %v3581
        %v3600 = vsub.f32 %v3554, %v3584
        %v3601 = vsub.f32 %v3559, %v3587
        %v3602 = vsub.f32 %v3562, %v3590
        %v3603 = vsub.f32 %v3567, %v3593
        %v3604 = vsub.f32 %v3570, %v3596
        %v3605 = vmul.f32 %v3597, 1.442695
        %v3606 = vpow.pop %v3605
        %v3607 = vmul.f32 %v3598, 1.442695
        %v3608 = vpow.pop %v3607
        %v3609 = vmul.f32 %v3599, 1.442695
        %v3610 = vpow.pop %v3609
        %v3611 = vmul.f32 %v3600, 1.442695
        %v3612 = vpow.pop %v3611
        %v3613 = vmul.f32 %v3601, 1.442695
        %v3614 = vpow.pop %v3613
        %v3615 = vmul.f32 %v3602, 1.442695
        %v3616 = vpow.pop %v3615
        %v3617 = vmul.f32 %v3603, 1.442695
        %v3618 = vpow.pop %v3617
        %v3619 = vmul.f32 %v3604, 1.442695
        %v3620 = vpow.pop %v3619
        %v3621 = vsel %vm899, %v3606, 0.0
        %3622 = vadd.xlane.f32.xlu0 %v3621
        %v3623 = vpop.xlane.xlu0 %3622
        %v3624 = vsel %vm899, %v3608, 0.0
        %3625 = vadd.xlane.f32.xlu0 %v3624
        %v3626 = vpop.xlane.xlu0 %3625
        %v3627 = vsel %vm899, %v3610, 0.0
        %3628 = vadd.xlane.f32.xlu0 %v3627
        %v3629 = vpop.xlane.xlu0 %3628
        %v3630 = vsel %vm899, %v3612, 0.0
        %3631 = vadd.xlane.f32.xlu0 %v3630
        %v3632 = vpop.xlane.xlu0 %3631
        %v3633 = vsel %vm899, %v3614, 0.0
        %3634 = vadd.xlane.f32.xlu0 %v3633
        %v3635 = vpop.xlane.xlu0 %3634
        %v3636 = vsel %vm899, %v3616, 0.0
        %3637 = vadd.xlane.f32.xlu0 %v3636
        %v3638 = vpop.xlane.xlu0 %3637
        %v3639 = vsel %vm899, %v3618, 0.0
        %3640 = vadd.xlane.f32.xlu0 %v3639
        %v3641 = vpop.xlane.xlu0 %3640
        %v3642 = vsel %vm899, %v3620, 0.0
        %3643 = vadd.xlane.f32.xlu0 %v3642
        %v3644 = vpop.xlane.xlu0 %3643
        %v3645 = vrcp.pop %v3623
        %v3646 = vrcp.pop %v3626
        %v3647 = vrcp.pop %v3629
        %v3648 = vrcp.pop %v3632
        %v3649 = vrcp.pop %v3635
        %v3650 = vrcp.pop %v3638
        %v3651 = vrcp.pop %v3641
        %v3652 = vrcp.pop %v3644
        %v3653 = vmul.f32 %v3606, %v3645
        %v3654 = vmul.f32 %v3608, %v3646
        %v3655 = vmul.f32 %v3610, %v3647
        %v3656 = vmul.f32 %v3612, %v3648
        %v3657 = vmul.f32 %v3614, %v3649
        %v3658 = vmul.f32 %v3616, %v3650
        %v3659 = vmul.f32 %v3618, %v3651
        %v3660 = vmul.f32 %v3620, %v3652
        %v3661 = vpack.c.bf16 %v3654, %v3653
        %v3662 = vpack.c.bf16 %v3656, %v3655
        %v3663 = vpack.c.bf16 %v3658, %v3657
        %v3664 = vpack.c.bf16 %v3660, %v3659
        %3665 = vrot.lane.b32.xlu0 %v799, 32
        %v3666 = vpop.permute.xlu0 %3665
        %3667 = vrot.lane.b32.xlu0 %v802, 32
        %v3668 = vpop.permute.xlu0 %3667
        %3669 = vrot.lane.b32.xlu0 %v805, 32
        %v3670 = vpop.permute.xlu0 %3669
        %3671 = vrot.lane.b32.xlu0 %v808, 32
        %v3672 = vpop.permute.xlu0 %3671
        %v3678 = vsel %vm899, %v3661, 0
        %v3681 = vsel %vm899, %v3662, 0
        %v3684 = vsel %vm899, %v3663, 0
        %v3687 = vsel %vm899, %v3664, 0
        %3689 = vmatprep.subr.bf16.mxu0 0
        %3690 = vmatpush1.bf16.msra.mxu0 %v3666
        %3691 = vmatprep.subr.bf16.mxu0 0
        %3692 = vmatpush1.bf16.msra.mxu0 %v3668
        %3693 = vmatprep.subr.bf16.mxu0 0
        %3694 = vmatpush1.bf16.msra.mxu0 %v3670
        %3695 = vmatprep.subr.bf16.mxu0 0
        %3696 = vmatpush1.bf16.msra.mxu0 %v3672
        %3697 = vmatprep.subr.bf16.mxu0 0
        %3698 = vmatpush1.bf16.msra.mxu0 0
        %3699 = vmatprep.subr.bf16.mxu0 0
        %3700 = vmatpush1.bf16.msra.mxu0 0
        %3701 = vmatprep.subr.bf16.mxu0 0
        %3702 = vmatpush1.bf16.msra.mxu0 0
        %3703 = vmatprep.subr.bf16.mxu0 0
        %3704 = vmatpush1.bf16.msra.mxu0 0
        %3705 = vmatprep.subr.bf16.mxu0 0
        %3706 = vmatpush1.bf16.msra.mxu0 0
        %3707 = vmatprep.subr.bf16.mxu0 0
        %3708 = vmatpush1.bf16.msra.mxu0 0
        %3709 = vmatprep.subr.bf16.mxu0 0
        %3710 = vmatpush1.bf16.msra.mxu0 0
        %3711 = vmatprep.subr.bf16.mxu0 0
        %3712 = vmatpush1.bf16.msra.mxu0 0
        %3713 = vmatprep.subr.bf16.mxu0 0
        %3714 = vmatpush1.bf16.msra.mxu0 0
        %3715 = vmatprep.subr.bf16.mxu0 0
        %3716 = vmatpush1.bf16.msra.mxu0 0
        %3717 = vmatprep.subr.bf16.mxu0 0
        %3718 = vmatpush1.bf16.msra.mxu0 0
        %3719 = vmatprep.subr.bf16.mxu0 0
        %3720 = vmatpush1.bf16.msra.mxu0 0
        %3721 = vmatprep.mubr.bf16.mxu0 0
        %3722 = vmatmul.mubr.bf16.gmra.mrb[0].mxu0 %v3678
        %v3723 = vpop.f32.mrb[0].mxu0
        %v3724 = vadd.f32 0.0, %v3723
        %v3725 = vpop.f32.mrb[0].mxu0
        %v3726 = vpop.f32.mrb[0].mxu0
        %v3727 = vadd.f32 0.0, %v3726
        %v3728 = vpop.f32.mrb[0].mxu0
        %3729 = vmatprep.mubr.bf16.mxu0 0
        %3730 = vmatmul.mubr.bf16.gmra.mrb[0].mxu0 %v3681
        %v3731 = vpop.f32.mrb[0].mxu0
        %v3732 = vadd.f32 0.0, %v3731
        %v3733 = vpop.f32.mrb[0].mxu0
        %v3734 = vpop.f32.mrb[0].mxu0
        %v3735 = vadd.f32 0.0, %v3734
        %v3736 = vpop.f32.mrb[0].mxu0
        %3737 = vmatprep.mubr.bf16.mxu0 0
        %3738 = vmatmul.mubr.bf16.gmra.mrb[0].mxu0 %v3684
        %v3739 = vpop.f32.mrb[0].mxu0
        %v3740 = vadd.f32 0.0, %v3739
        %v3741 = vpop.f32.mrb[0].mxu0
        %v3742 = vpop.f32.mrb[0].mxu0
        %v3743 = vadd.f32 0.0, %v3742
        %v3744 = vpop.f32.mrb[0].mxu0
        %3745 = vmatprep.mubr.bf16.mxu0 0
        %3746 = vmatmul.mubr.bf16.gmra.mrb[0].mxu0 %v3687
        %v3747 = vpop.f32.mrb[0].mxu0
        %v3748 = vadd.f32 0.0, %v3747
        %v3749 = vpop.f32.mrb[0].mxu0
        %v3750 = vpop.f32.mrb[0].mxu0
        %v3751 = vadd.f32 0.0, %v3750
        %v3752 = vpop.f32.mrb[0].mxu0
        %3753 = vdwg.mxu0
        %v3754 = vpack.c.bf16 %v3727, %v3724
        %v3755 = vpack.c.bf16 %v3735, %v3732
        %v3756 = vpack.c.bf16 %v3743, %v3740
        %v3757 = vpack.c.bf16 %v3751, %v3748
        %v3759 = vsel %vm809, %v3754, 0
        %v3762 = vsel %vm809, %v3755, 0
        %v3765 = vsel %vm809, %v3756, 0
        %v3768 = vsel %vm809, %v3757, 0
        %3770 = vmatprep.subr.bf16.mxu0 0
        %3771 = vmatpush1.bf16.msra.mxu0 %v2270
        %3772 = vmatprep.subr.bf16.mxu0 0
        %3773 = vmatpush1.bf16.msra.mxu0 %v2271
        %3774 = vmatprep.subr.bf16.mxu0 0
        %3775 = vmatpush1.bf16.msra.mxu0 0
        %3776 = vmatprep.subr.bf16.mxu0 0
        %3777 = vmatpush1.bf16.msra.mxu0 0
        %3778 = vmatprep.subr.bf16.mxu0 0
        %3779 = vmatpush1.bf16.msra.mxu0 0
        %3780 = vmatprep.subr.bf16.mxu0 0
        %3781 = vmatpush1.bf16.msra.mxu0 0
        %3782 = vmatprep.subr.bf16.mxu0 0
        %3783 = vmatpush1.bf16.msra.mxu0 0
        %3784 = vmatprep.subr.bf16.mxu0 0
        %3785 = vmatpush1.bf16.msra.mxu0 0
        %3786 = vmatprep.subr.bf16.mxu0 0
        %3787 = vmatpush1.bf16.msra.mxu0 0
        %3788 = vmatprep.subr.bf16.mxu0 0
        %3789 = vmatpush1.bf16.msra.mxu0 0
        %3790 = vmatprep.subr.bf16.mxu0 0
        %3791 = vmatpush1.bf16.msra.mxu0 0
        %3792 = vmatprep.subr.bf16.mxu0 0
        %3793 = vmatpush1.bf16.msra.mxu0 0
        %3794 = vmatprep.subr.bf16.mxu0 0
        %3795 = vmatpush1.bf16.msra.mxu0 0
        %3796 = vmatprep.subr.bf16.mxu0 0
        %3797 = vmatpush1.bf16.msra.mxu0 0
        %3798 = vmatprep.subr.bf16.mxu0 0
        %3799 = vmatpush1.bf16.msra.mxu0 0
        %3800 = vmatprep.subr.bf16.mxu0 0
        %3801 = vmatpush1.bf16.msra.mxu0 0
        %3802 = vmatprep.mubr.bf16.mxu0 0
        %3803 = vmatmul.mubr.bf16.gmra.mrb[0].mxu0 %v3759
        %v3804 = vpop.f32.mrb[0].mxu0
        %v3805 = vadd.f32 0.0, %v3804
        %v3806 = vpop.f32.mrb[0].mxu0
        %v3807 = vpop.f32.mrb[0].mxu0
        %v3808 = vadd.f32 0.0, %v3807
        %v3809 = vpop.f32.mrb[0].mxu0
        %3810 = vmatprep.mubr.bf16.mxu0 0
        %3811 = vmatmul.mubr.bf16.gmra.mrb[0].mxu0 %v3762
        %v3812 = vpop.f32.mrb[0].mxu0
        %v3813 = vadd.f32 0.0, %v3812
        %v3814 = vpop.f32.mrb[0].mxu0
        %v3815 = vpop.f32.mrb[0].mxu0
        %v3816 = vadd.f32 0.0, %v3815
        %v3817 = vpop.f32.mrb[0].mxu0
        %3818 = vmatprep.mubr.bf16.mxu0 0
        %3819 = vmatmul.mubr.bf16.gmra.mrb[0].mxu0 %v3765
        %v3820 = vpop.f32.mrb[0].mxu0
        %v3821 = vadd.f32 0.0, %v3820
        %v3822 = vpop.f32.mrb[0].mxu0
        %v3823 = vpop.f32.mrb[0].mxu0
        %v3824 = vadd.f32 0.0, %v3823
        %v3825 = vpop.f32.mrb[0].mxu0
        %3826 = vmatprep.mubr.bf16.mxu0 0
        %3827 = vmatmul.mubr.bf16.gmra.mrb[0].mxu0 %v3768
        %v3828 = vpop.f32.mrb[0].mxu0
        %v3829 = vadd.f32 0.0, %v3828
        %v3830 = vpop.f32.mrb[0].mxu0
        %v3831 = vpop.f32.mrb[0].mxu0
        %v3832 = vadd.f32 0.0, %v3831
        %v3833 = vpop.f32.mrb[0].mxu0
        %3834 = vdwg.mxu0
        %v3835 = vadd.f32 %v3460, %v3805
        %v3836 = vadd.f32 %v3461, %v3808
        %v3837 = vadd.f32 %v3462, %v3813
        %v3838 = vadd.f32 %v3463, %v3816
        %v3839 = vadd.f32 %v3464, %v3821
        %v3840 = vadd.f32 %v3465, %v3824
        %v3841 = vadd.f32 %v3466, %v3829
        %v3842 = vadd.f32 %v3467, %v3832
        %s3843 = sld [smem:[#allocation2 + %s373]]
        %s3844 = smul.f32 %s3843, 128.0
        %v3845 = vadd.f32 %v2351, %v2352
        %v3846 = vadd.f32 %v3845, %v2353
        %v3847 = vadd.f32 %v3846, %v2354
        %v3848 = vadd.f32 %v3847, %v2355
        %v3849 = vadd.f32 %v3848, %v2356
        %v3850 = vadd.f32 %v3849, %v2357
        %v3851 = vadd.f32 %v3850, %v2358
        %3852 = vadd.xlane.f32.xlu0 %v3851
        %v3853 = vpop.xlane.xlu0 %3852
        %v3854 = vrot.slane %v3853, 4
        %v3855 = vadd.f32 %v3853, %v3854
        %v3856 = vrot.slane %v3855, 2
        %v3857 = vadd.f32 %v3855, %v3856
        %v3858 = vrot.slane %v3857, 1
        %v3859 = vadd.f32 %v3857, %v3858
        %s3860 = vtos %v3859
        %v3861 = vstv %s3844
        %v3862 = vrcp.pop %v3861
        %s3863 = vtos %v3862
        %s3864 = smul.f32 %s3860, %s3863
        %v3865 = vstv %s3864
        %v3866 = vsub.f32 %v2351, %v3865
        %v3867 = vsub.f32 %v2352, %v3865
        %v3868 = vsub.f32 %v2353, %v3865
        %v3869 = vsub.f32 %v2354, %v3865
        %v3870 = vsub.f32 %v2355, %v3865
        %v3871 = vsub.f32 %v2356, %v3865
        %v3872 = vsub.f32 %v2357, %v3865
        %v3873 = vsub.f32 %v2358, %v3865
        %v3874 = vmul.f32 %v3866, %v3866
        %v3875 = vmul.f32 %v3867, %v3867
        %v3876 = vmul.f32 %v3868, %v3868
        %v3877 = vmul.f32 %v3869, %v3869
        %v3878 = vmul.f32 %v3870, %v3870
        %v3879 = vmul.f32 %v3871, %v3871
        %v3880 = vmul.f32 %v3872, %v3872
        %v3881 = vmul.f32 %v3873, %v3873
        %v3882 = vadd.f32 %v3874, %v3875
        %v3883 = vadd.f32 %v3882, %v3876
        %v3884 = vadd.f32 %v3883, %v3877
        %v3885 = vadd.f32 %v3884, %v3878
        %v3886 = vadd.f32 %v3885, %v3879
        %v3887 = vadd.f32 %v3886, %v3880
        %v3888 = vadd.f32 %v3887, %v3881
        %3889 = vadd.xlane.f32.xlu0 %v3888
        %v3890 = vpop.xlane.xlu0 %3889
        %v3891 = vrot.slane %v3890, 4
        %v3892 = vadd.f32 %v3890, %v3891
        %v3893 = vrot.slane %v3892, 2
        %v3894 = vadd.f32 %v3892, %v3893
        %v3895 = vrot.slane %v3894, 1
        %v3896 = vadd.f32 %v3894, %v3895
        %s3897 = vtos %v3896
        %v3898 = vstv %s3897
        %v3899 = vrsqrt.pop %v3898
        %v3900 = vmul.f32 %v3898, %v3899
        %vm3901 = vcmp.eq.f32.partialorder %v3898, inf
        %v3902 = vsel %vm3901, %v3898, %v3900
        %vm3903 = vcmp.eq.f32.partialorder %v3898, 0.0
        %v3904 = vand.u32 %v3898, 2147483648
        %v3905 = vsel %vm3903, %v3904, %v3902
        %s3906 = vtos %v3905
        %v3907 = vstv %s3906
        %v3908 = vrcp.pop %v3907
        %s3909 = vtos %v3908
        %s3910 = smul.f32 %s3844, %s3909
        %v3911 = vstv %s3910
        %v3912 = vmul.f32 %v3866, %v3911
        %v3913 = vmul.f32 %v3867, %v3911
        %v3914 = vmul.f32 %v3868, %v3911
        %v3915 = vmul.f32 %v3869, %v3911
        %v3916 = vmul.f32 %v3870, %v3911
        %v3917 = vmul.f32 %v3871, %v3911
        %v3918 = vmul.f32 %v3872, %v3911
        %v3919 = vmul.f32 %v3873, %v3911
        %s3920 = sadd.s32 %s373, 1
        %s3921 = sld [smem:[#allocation2 + %s3920]]
        %s3922 = smul.f32 %s3921, 128.0
        %v3923 = vadd.f32 %v3835, %v3836
        %v3924 = vadd.f32 %v3923, %v3837
        %v3925 = vadd.f32 %v3924, %v3838
        %v3926 = vadd.f32 %v3925, %v3839
        %v3927 = vadd.f32 %v3926, %v3840
        %v3928 = vadd.f32 %v3927, %v3841
        %v3929 = vadd.f32 %v3928, %v3842
        %3930 = vadd.xlane.f32.xlu0 %v3929
        %v3931 = vpop.xlane.xlu0 %3930
        %v3932 = vrot.slane %v3931, 4
        %v3933 = vadd.f32 %v3931, %v3932
        %v3934 = vrot.slane %v3933, 2
        %v3935 = vadd.f32 %v3933, %v3934
        %v3936 = vrot.slane %v3935, 1
        %v3937 = vadd.f32 %v3935, %v3936
        %s3938 = vtos %v3937
        %v3939 = vstv %s3922
        %v3940 = vrcp.pop %v3939
        %s3941 = vtos %v3940
        %s3942 = smul.f32 %s3938, %s3941
        %v3943 = vstv %s3942
        %v3944 = vsub.f32 %v3835, %v3943
        %v3945 = vsub.f32 %v3836, %v3943
        %v3946 = vsub.f32 %v3837, %v3943
        %v3947 = vsub.f32 %v3838, %v3943
        %v3948 = vsub.f32 %v3839, %v3943
        %v3949 = vsub.f32 %v3840, %v3943
        %v3950 = vsub.f32 %v3841, %v3943
        %v3951 = vsub.f32 %v3842, %v3943
        %v3952 = vmul.f32 %v3944, %v3944
        %v3953 = vmul.f32 %v3945, %v3945
        %v3954 = vmul.f32 %v3946, %v3946
        %v3955 = vmul.f32 %v3947, %v3947
        %v3956 = vmul.f32 %v3948, %v3948
        %v3957 = vmul.f32 %v3949, %v3949
        %v3958 = vmul.f32 %v3950, %v3950
        %v3959 = vmul.f32 %v3951, %v3951
        %v3960 = vadd.f32 %v3952, %v3953
        %v3961 = vadd.f32 %v3960, %v3954
        %v3962 = vadd.f32 %v3961, %v3955
        %v3963 = vadd.f32 %v3962, %v3956
        %v3964 = vadd.f32 %v3963, %v3957
        %v3965 = vadd.f32 %v3964, %v3958
        %v3966 = vadd.f32 %v3965, %v3959
        %3967 = vadd.xlane.f32.xlu0 %v3966
        %v3968 = vpop.xlane.xlu0 %3967
        %v3969 = vrot.slane %v3968, 4
        %v3970 = vadd.f32 %v3968, %v3969
        %v3971 = vrot.slane %v3970, 2
        %v3972 = vadd.f32 %v3970, %v3971
        %v3973 = vrot.slane %v3972, 1
        %v3974 = vadd.f32 %v3972, %v3973
        %s3975 = vtos %v3974
        %v3976 = vstv %s3975
        %v3977 = vrsqrt.pop %v3976
        %v3978 = vmul.f32 %v3976, %v3977
        %vm3979 = vcmp.eq.f32.partialorder %v3976, inf
        %v3980 = vsel %vm3979, %v3976, %v3978
        %vm3981 = vcmp.eq.f32.partialorder %v3976, 0.0
        %v3982 = vand.u32 %v3976, 2147483648
        %v3983 = vsel %vm3981, %v3982, %v3980
        %s3984 = vtos %v3983
        %v3985 = vstv %s3984
        %v3986 = vrcp.pop %v3985
        %s3987 = vtos %v3986
        %s3988 = smul.f32 %s3922, %s3987
        %v3989 = vstv %s3988
        %v3990 = vmul.f32 %v3944, %v3989
        %v3991 = vmul.f32 %v3945, %v3989
        %v3992 = vmul.f32 %v3946, %v3989
        %v3993 = vmul.f32 %v3947, %v3989
        %v3994 = vmul.f32 %v3948, %v3989
        %v3995 = vmul.f32 %v3949, %v3989
        %v3996 = vmul.f32 %v3950, %v3989
        %v3997 = vmul.f32 %v3951, %v3989
        %v3998 = vpack.c.bf16 %v3913, %v3912
        %v3999 = vpack.c.bf16 %v3915, %v3914
        %v4000 = vpack.c.bf16 %v3917, %v3916
        %v4001 = vpack.c.bf16 %v3919, %v3918
        %v4002 = vpack.c.bf16 %v3991, %v3990
        %v4003 = vpack.c.bf16 %v3993, %v3992
        %v4004 = vpack.c.bf16 %v3995, %v3994
        %v4005 = vpack.c.bf16 %v3997, %v3996
        %v4006 = vld [vmem:[#allocation10] sm:$0xf]
        %v4007 = vld [vmem:[#allocation10 + $0x4] sm:$0xf]
        %v4008 = vld [vmem:[#allocation10 + $0x8] sm:$0xf]
        %v4009 = vld [vmem:[#allocation10 + $0xc] sm:$0xf]
        %v4010 = vld [vmem:[#allocation10 + $0x10] sm:$0xf]
        %v4011 = vld [vmem:[#allocation10 + $0x14] sm:$0xf]
        %v4012 = vld [vmem:[#allocation10 + $0x18] sm:$0xf]
        %v4013 = vld [vmem:[#allocation10 + $0x1c] sm:$0xf]
        %v4014 = vld [vmem:[#allocation10 + $0x20] sm:$0xf]
        %v4015 = vld [vmem:[#allocation10 + $0x24] sm:$0xf]
        %v4016 = vld [vmem:[#allocation10 + $0x28] sm:$0xf]
        %v4017 = vld [vmem:[#allocation10 + $0x2c] sm:$0xf]
        %v4018 = vld [vmem:[#allocation10 + $0x30] sm:$0xf]
        %v4019 = vld [vmem:[#allocation10 + $0x34] sm:$0xf]
        %v4020 = vld [vmem:[#allocation10 + $0x38] sm:$0xf]
        %v4021 = vld [vmem:[#allocation10 + $0x3c] sm:$0xf]
        %v4038 = vunpack.c.l.b16 %v4006
        %v4039 = vunpack.c.l.b16 %v4007
        %v4040 = vunpack.c.l.b16 %v4008
        %v4041 = vunpack.c.l.b16 %v4009
        %v4042 = vunpack.c.l.b16 %v4010
        %v4043 = vunpack.c.l.b16 %v4011
        %v4044 = vunpack.c.l.b16 %v4012
        %v4045 = vunpack.c.l.b16 %v4013
        %v4046 = vunpack.c.l.b16 %v4014
        %v4047 = vunpack.c.l.b16 %v4015
        %v4048 = vunpack.c.l.b16 %v4016
        %v4049 = vunpack.c.l.b16 %v4017
        %v4050 = vunpack.c.l.b16 %v4018
        %v4051 = vunpack.c.l.b16 %v4019
        %v4052 = vunpack.c.l.b16 %v4020
        %v4053 = vunpack.c.l.b16 %v4021
        %v4054 = vpack.c.b16 %v4039, %v4038
        %v4055 = vpack.c.b16 %v4041, %v4040
        %v4056 = vpack.c.b16 %v4043, %v4042
        %v4057 = vpack.c.b16 %v4045, %v4044
        %v4058 = vpack.c.b16 %v4047, %v4046
        %v4059 = vpack.c.b16 %v4049, %v4048
        %v4060 = vpack.c.b16 %v4051, %v4050
        %v4061 = vpack.c.b16 %v4053, %v4052
        %4070 = vmatprep.subr.bf16.mxu0 0
        %4071 = vmatpush1.bf16.msra.mxu0 %v4054
        %4072 = vmatprep.subr.bf16.mxu0 0
        %4073 = vmatpush1.bf16.msra.mxu0 %v4055
        %4074 = vmatprep.subr.bf16.mxu0 0
        %4075 = vmatpush1.bf16.msra.mxu0 %v4056
        %4076 = vmatprep.subr.bf16.mxu0 0
        %4077 = vmatpush1.bf16.msra.mxu0 %v4057
        %4078 = vmatprep.subr.bf16.mxu0 0
        %4079 = vmatpush1.bf16.msra.mxu0 %v4058
        %4080 = vmatprep.subr.bf16.mxu0 0
        %4081 = vmatpush1.bf16.msra.mxu0 %v4059
        %4082 = vmatprep.subr.bf16.mxu0 0
        %4083 = vmatpush1.bf16.msra.mxu0 %v4060
        %4084 = vmatprep.subr.bf16.mxu0 0
        %4085 = vmatpush1.bf16.msra.mxu0 %v4061
        %4086 = vmatprep.subr.bf16.mxu0 0
        %4087 = vmatpush1.bf16.msra.mxu0 0
        %4088 = vmatprep.subr.bf16.mxu0 0
        %4089 = vmatpush1.bf16.msra.mxu0 0
        %4090 = vmatprep.subr.bf16.mxu0 0
        %4091 = vmatpush1.bf16.msra.mxu0 0
        %4092 = vmatprep.subr.bf16.mxu0 0
        %4093 = vmatpush1.bf16.msra.mxu0 0
        %4094 = vmatprep.subr.bf16.mxu0 0
        %4095 = vmatpush1.bf16.msra.mxu0 0
        %4096 = vmatprep.subr.bf16.mxu0 0
        %4097 = vmatpush1.bf16.msra.mxu0 0
        %4098 = vmatprep.subr.bf16.mxu0 0
        %4099 = vmatpush1.bf16.msra.mxu0 0
        %4100 = vmatprep.subr.bf16.mxu0 0
        %4101 = vmatpush1.bf16.msra.mxu0 0
        %4102 = vmatprep.mubr.bf16.mxu0 0
        %4103 = vmatmul.mubr.bf16.gmra.mrb[0].mxu0 %v3998
        %v4104 = vpop.f32.mrb[0].mxu0
        %v4105 = vadd.f32 0.0, %v4104
        %v4106 = vpop.f32.mrb[0].mxu0
        %v4107 = vpop.f32.mrb[0].mxu0
        %v4108 = vadd.f32 0.0, %v4107
        %v4109 = vpop.f32.mrb[0].mxu0
        %4110 = vmatprep.mubr.bf16.mxu0 0
        %4111 = vmatmul.mubr.bf16.gmra.mrb[0].mxu0 %v3999
        %v4112 = vpop.f32.mrb[0].mxu0
        %v4113 = vadd.f32 0.0, %v4112
        %v4114 = vpop.f32.mrb[0].mxu0
        %v4115 = vpop.f32.mrb[0].mxu0
        %v4116 = vadd.f32 0.0, %v4115
        %v4117 = vpop.f32.mrb[0].mxu0
        %4118 = vmatprep.mubr.bf16.mxu0 0
        %4119 = vmatmul.mubr.bf16.gmra.mrb[0].mxu0 %v4000
        %v4120 = vpop.f32.mrb[0].mxu0
        %v4121 = vadd.f32 0.0, %v4120
        %v4122 = vpop.f32.mrb[0].mxu0
        %v4123 = vpop.f32.mrb[0].mxu0
        %v4124 = vadd.f32 0.0, %v4123
        %v4125 = vpop.f32.mrb[0].mxu0
        %4126 = vmatprep.mubr.bf16.mxu0 0
        %4127 = vmatmul.mubr.bf16.gmra.mrb[0].mxu0 %v4001
        %v4128 = vpop.f32.mrb[0].mxu0
        %v4129 = vadd.f32 0.0, %v4128
        %v4130 = vpop.f32.mrb[0].mxu0
        %v4131 = vpop.f32.mrb[0].mxu0
        %v4132 = vadd.f32 0.0, %v4131
        %v4133 = vpop.f32.mrb[0].mxu0
        %4134 = vmatprep.mubr.bf16.mxu0 0
        %4135 = vmatmul.mubr.bf16.gmra.mrb[0].mxu0 %v4002
        %v4136 = vpop.f32.mrb[0].mxu0
        %v4137 = vadd.f32 0.0, %v4136
        %v4138 = vpop.f32.mrb[0].mxu0
        %v4139 = vpop.f32.mrb[0].mxu0
        %v4140 = vadd.f32 0.0, %v4139
        %v4141 = vpop.f32.mrb[0].mxu0
        %4142 = vmatprep.mubr.bf16.mxu0 0
        %4143 = vmatmul.mubr.bf16.gmra.mrb[0].mxu0 %v4003
        %v4144 = vpop.f32.mrb[0].mxu0
        %v4145 = vadd.f32 0.0, %v4144
        %v4146 = vpop.f32.mrb[0].mxu0
        %v4147 = vpop.f32.mrb[0].mxu0
        %v4148 = vadd.f32 0.0, %v4147
        %v4149 = vpop.f32.mrb[0].mxu0
        %4150 = vmatprep.mubr.bf16.mxu0 0
        %4151 = vmatmul.mubr.bf16.gmra.mrb[0].mxu0 %v4004
        %v4152 = vpop.f32.mrb[0].mxu0
        %v4153 = vadd.f32 0.0, %v4152
        %v4154 = vpop.f32.mrb[0].mxu0
        %v4155 = vpop.f32.mrb[0].mxu0
        %v4156 = vadd.f32 0.0, %v4155
        %v4157 = vpop.f32.mrb[0].mxu0
        %4158 = vmatprep.mubr.bf16.mxu0 0
        %4159 = vmatmul.mubr.bf16.gmra.mrb[0].mxu0 %v4005
        %v4160 = vpop.f32.mrb[0].mxu0
        %v4161 = vadd.f32 0.0, %v4160
        %v4162 = vpop.f32.mrb[0].mxu0
        %v4163 = vpop.f32.mrb[0].mxu0
        %v4164 = vadd.f32 0.0, %v4163
        %v4165 = vpop.f32.mrb[0].mxu0
        %4166 = vdwg.mxu0
        %v4167 = vxor.u32 %v4105, 2147483648
        %v4168 = vxor.u32 %v4108, 2147483648
        %v4169 = vxor.u32 %v4113, 2147483648
        %v4170 = vxor.u32 %v4116, 2147483648
        %v4171 = vxor.u32 %v4121, 2147483648
        %v4172 = vxor.u32 %v4124, 2147483648
        %v4173 = vxor.u32 %v4129, 2147483648
        %v4174 = vxor.u32 %v4132, 2147483648
        %v4175 = vxor.u32 %v4137, 2147483648
        %v4176 = vxor.u32 %v4140, 2147483648
        %v4177 = vxor.u32 %v4145, 2147483648
        %v4178 = vxor.u32 %v4148, 2147483648
        %v4179 = vxor.u32 %v4153, 2147483648
        %v4180 = vxor.u32 %v4156, 2147483648
        %v4181 = vxor.u32 %v4161, 2147483648
        %v4182 = vxor.u32 %v4164, 2147483648
        %v4183 = vmul.f32 %v4167, 1.442695
        %v4184 = vpow.pop %v4183
        %v4185 = vmul.f32 %v4168, 1.442695
        %v4186 = vpow.pop %v4185
        %v4187 = vmul.f32 %v4169, 1.442695
        %v4188 = vpow.pop %v4187
        %v4189 = vmul.f32 %v4170, 1.442695
        %v4190 = vpow.pop %v4189
        %v4191 = vmul.f32 %v4171, 1.442695
        %v4192 = vpow.pop %v4191
        %v4193 = vmul.f32 %v4172, 1.442695
        %v4194 = vpow.pop %v4193
        %v4195 = vmul.f32 %v4173, 1.442695
        %v4196 = vpow.pop %v4195
        %v4197 = vmul.f32 %v4174, 1.442695
        %v4198 = vpow.pop %v4197
        %v4199 = vmul.f32 %v4175, 1.442695
        %v4200 = vpow.pop %v4199
        %v4201 = vmul.f32 %v4176, 1.442695
        %v4202 = vpow.pop %v4201
        %v4203 = vmul.f32 %v4177, 1.442695
        %v4204 = vpow.pop %v4203
        %v4205 = vmul.f32 %v4178, 1.442695
        %v4206 = vpow.pop %v4205
        %v4207 = vmul.f32 %v4179, 1.442695
        %v4208 = vpow.pop %v4207
        %v4209 = vmul.f32 %v4180, 1.442695
        %v4210 = vpow.pop %v4209
        %v4211 = vmul.f32 %v4181, 1.442695
        %v4212 = vpow.pop %v4211
        %v4213 = vmul.f32 %v4182, 1.442695
        %v4214 = vpow.pop %v4213
        %v4215 = vadd.f32 %v4184, 1.0
        %v4216 = vadd.f32 %v4186, 1.0
        %v4217 = vadd.f32 %v4188, 1.0
        %v4218 = vadd.f32 %v4190, 1.0
        %v4219 = vadd.f32 %v4192, 1.0
        %v4220 = vadd.f32 %v4194, 1.0
        %v4221 = vadd.f32 %v4196, 1.0
        %v4222 = vadd.f32 %v4198, 1.0
        %v4223 = vadd.f32 %v4200, 1.0
        %v4224 = vadd.f32 %v4202, 1.0
        %v4225 = vadd.f32 %v4204, 1.0
        %v4226 = vadd.f32 %v4206, 1.0
        %v4227 = vadd.f32 %v4208, 1.0
        %v4228 = vadd.f32 %v4210, 1.0
        %v4229 = vadd.f32 %v4212, 1.0
        %v4230 = vadd.f32 %v4214, 1.0
        %v4231 = vrcp.pop %v4215
        %v4232 = vmul.f32 1.0, %v4231
        %v4233 = vrcp.pop %v4216
        %v4234 = vmul.f32 1.0, %v4233
        %v4235 = vrcp.pop %v4217
        %v4236 = vmul.f32 1.0, %v4235
        %v4237 = vrcp.pop %v4218
        %v4238 = vmul.f32 1.0, %v4237
        %v4239 = vrcp.pop %v4219
        %v4240 = vmul.f32 1.0, %v4239
        %v4241 = vrcp.pop %v4220
        %v4242 = vmul.f32 1.0, %v4241
        %v4243 = vrcp.pop %v4221
        %v4244 = vmul.f32 1.0, %v4243
        %v4245 = vrcp.pop %v4222
        %v4246 = vmul.f32 1.0, %v4245
        %v4247 = vrcp.pop %v4223
        %v4248 = vmul.f32 1.0, %v4247
        %v4249 = vrcp.pop %v4224
        %v4250 = vmul.f32 1.0, %v4249
        %v4251 = vrcp.pop %v4225
        %v4252 = vmul.f32 1.0, %v4251
        %v4253 = vrcp.pop %v4226
        %v4254 = vmul.f32 1.0, %v4253
        %v4255 = vrcp.pop %v4227
        %v4256 = vmul.f32 1.0, %v4255
        %v4257 = vrcp.pop %v4228
        %v4258 = vmul.f32 1.0, %v4257
        %v4259 = vrcp.pop %v4229
        %v4260 = vmul.f32 1.0, %v4259
        %v4261 = vrcp.pop %v4230
        %v4262 = vmul.f32 1.0, %v4261
        %v4263 = vmul.f32 %v4105, %v4232
        %v4264 = vmul.f32 %v4108, %v4234
        %v4265 = vmul.f32 %v4113, %v4236
        %v4266 = vmul.f32 %v4116, %v4238
        %v4267 = vmul.f32 %v4121, %v4240
        %v4268 = vmul.f32 %v4124, %v4242
        %v4269 = vmul.f32 %v4129, %v4244
        %v4270 = vmul.f32 %v4132, %v4246
        %v4271 = vmul.f32 %v4137, %v4248
        %v4272 = vmul.f32 %v4140, %v4250
        %v4273 = vmul.f32 %v4145, %v4252
        %v4274 = vmul.f32 %v4148, %v4254
        %v4275 = vmul.f32 %v4153, %v4256
        %v4276 = vmul.f32 %v4156, %v4258
        %v4277 = vmul.f32 %v4161, %v4260
        %v4278 = vmul.f32 %v4164, %v4262
        %v4279 = vpack.c.bf16 %v4264, %v4263
        %v4280 = vpack.c.bf16 %v4266, %v4265
        %v4281 = vpack.c.bf16 %v4268, %v4267
        %v4282 = vpack.c.bf16 %v4270, %v4269
        %v4283 = vpack.c.bf16 %v4272, %v4271
        %v4284 = vpack.c.bf16 %v4274, %v4273
        %v4285 = vpack.c.bf16 %v4276, %v4275
        %v4286 = vpack.c.bf16 %v4278, %v4277
        %v4287 = vld [vmem:[#allocation12] sm:$0xf]
        %v4288 = vld [vmem:[#allocation12 + $0x4] sm:$0xf]
        %v4289 = vld [vmem:[#allocation12 + $0x8] sm:$0xf]
        %v4290 = vld [vmem:[#allocation12 + $0xc] sm:$0xf]
        %v4291 = vld [vmem:[#allocation12 + $0x10] sm:$0xf]
        %v4292 = vld [vmem:[#allocation12 + $0x14] sm:$0xf]
        %v4293 = vld [vmem:[#allocation12 + $0x18] sm:$0xf]
        %v4294 = vld [vmem:[#allocation12 + $0x1c] sm:$0xf]
        %v4295 = vld [vmem:[#allocation12 + $0x20] sm:$0xf]
        %v4296 = vld [vmem:[#allocation12 + $0x24] sm:$0xf]
        %v4297 = vld [vmem:[#allocation12 + $0x28] sm:$0xf]
        %v4298 = vld [vmem:[#allocation12 + $0x2c] sm:$0xf]
        %v4299 = vld [vmem:[#allocation12 + $0x30] sm:$0xf]
        %v4300 = vld [vmem:[#allocation12 + $0x34] sm:$0xf]
        %v4301 = vld [vmem:[#allocation12 + $0x38] sm:$0xf]
        %v4302 = vld [vmem:[#allocation12 + $0x3c] sm:$0xf]
        %v4319 = vunpack.c.l.b16 %v4287
        %v4320 = vunpack.c.l.b16 %v4288
        %v4321 = vunpack.c.l.b16 %v4289
        %v4322 = vunpack.c.l.b16 %v4290
        %v4323 = vunpack.c.l.b16 %v4291
        %v4324 = vunpack.c.l.b16 %v4292
        %v4325 = vunpack.c.l.b16 %v4293
        %v4326 = vunpack.c.l.b16 %v4294
        %v4327 = vunpack.c.l.b16 %v4295
        %v4328 = vunpack.c.l.b16 %v4296
        %v4329 = vunpack.c.l.b16 %v4297
        %v4330 = vunpack.c.l.b16 %v4298
        %v4331 = vunpack.c.l.b16 %v4299
        %v4332 = vunpack.c.l.b16 %v4300
        %v4333 = vunpack.c.l.b16 %v4301
        %v4334 = vunpack.c.l.b16 %v4302
        %v4335 = vpack.c.b16 %v4320, %v4319
        %v4336 = vpack.c.b16 %v4322, %v4321
        %v4337 = vpack.c.b16 %v4324, %v4323
        %v4338 = vpack.c.b16 %v4326, %v4325
        %v4339 = vpack.c.b16 %v4328, %v4327
        %v4340 = vpack.c.b16 %v4330, %v4329
        %v4341 = vpack.c.b16 %v4332, %v4331
        %v4342 = vpack.c.b16 %v4334, %v4333
        %4351 = vmatprep.subr.bf16.mxu0 0
        %4352 = vmatpush1.bf16.msra.mxu0 %v4335
        %4353 = vmatprep.subr.bf16.mxu0 0
        %4354 = vmatpush1.bf16.msra.mxu0 %v4336
        %4355 = vmatprep.subr.bf16.mxu0 0
        %4356 = vmatpush1.bf16.msra.mxu0 %v4337
        %4357 = vmatprep.subr.bf16.mxu0 0
        %4358 = vmatpush1.bf16.msra.mxu0 %v4338
        %4359 = vmatprep.subr.bf16.mxu0 0
        %4360 = vmatpush1.bf16.msra.mxu0 %v4339
        %4361 = vmatprep.subr.bf16.mxu0 0
        %4362 = vmatpush1.bf16.msra.mxu0 %v4340
        %4363 = vmatprep.subr.bf16.mxu0 0
        %4364 = vmatpush1.bf16.msra.mxu0 %v4341
        %4365 = vmatprep.subr.bf16.mxu0 0
        %4366 = vmatpush1.bf16.msra.mxu0 %v4342
        %4367 = vmatprep.subr.bf16.mxu0 0
        %4368 = vmatpush1.bf16.msra.mxu0 0
        %4369 = vmatprep.subr.bf16.mxu0 0
        %4370 = vmatpush1.bf16.msra.mxu0 0
        %4371 = vmatprep.subr.bf16.mxu0 0
        %4372 = vmatpush1.bf16.msra.mxu0 0
        %4373 = vmatprep.subr.bf16.mxu0 0
        %4374 = vmatpush1.bf16.msra.mxu0 0
        %4375 = vmatprep.subr.bf16.mxu0 0
        %4376 = vmatpush1.bf16.msra.mxu0 0
        %4377 = vmatprep.subr.bf16.mxu0 0
        %4378 = vmatpush1.bf16.msra.mxu0 0
        %4379 = vmatprep.subr.bf16.mxu0 0
        %4380 = vmatpush1.bf16.msra.mxu0 0
        %4381 = vmatprep.subr.bf16.mxu0 0
        %4382 = vmatpush1.bf16.msra.mxu0 0
        %4383 = vmatprep.mubr.bf16.mxu0 0
        %4384 = vmatmul.mubr.bf16.gmra.mrb[0].mxu0 %v4279
        %v4385 = vpop.f32.mrb[0].mxu0
        %v4386 = vadd.f32 %v3912, %v4385
        %v4387 = vpop.f32.mrb[0].mxu0
        %v4388 = vpop.f32.mrb[0].mxu0
        %v4389 = vadd.f32 %v3913, %v4388
        %v4390 = vpop.f32.mrb[0].mxu0
        %4391 = vmatprep.mubr.bf16.mxu0 0
        %4392 = vmatmul.mubr.bf16.gmra.mrb[0].mxu0 %v4280
        %v4393 = vpop.f32.mrb[0].mxu0
        %v4394 = vadd.f32 %v3914, %v4393
        %v4395 = vpop.f32.mrb[0].mxu0
        %v4396 = vpop.f32.mrb[0].mxu0
        %v4397 = vadd.f32 %v3915, %v4396
        %v4398 = vpop.f32.mrb[0].mxu0
        %4399 = vmatprep.mubr.bf16.mxu0 0
        %4400 = vmatmul.mubr.bf16.gmra.mrb[0].mxu0 %v4281
        %v4401 = vpop.f32.mrb[0].mxu0
        %v4402 = vadd.f32 %v3916, %v4401
        %v4403 = vpop.f32.mrb[0].mxu0
        %v4404 = vpop.f32.mrb[0].mxu0
        %v4405 = vadd.f32 %v3917, %v4404
        %v4406 = vpop.f32.mrb[0].mxu0
        %4407 = vmatprep.mubr.bf16.mxu0 0
        %4408 = vmatmul.mubr.bf16.gmra.mrb[0].mxu0 %v4282
        %v4409 = vpop.f32.mrb[0].mxu0
        %v4410 = vadd.f32 %v3918, %v4409
        %v4411 = vpop.f32.mrb[0].mxu0
        %v4412 = vpop.f32.mrb[0].mxu0
        %v4413 = vadd.f32 %v3919, %v4412
        %v4414 = vpop.f32.mrb[0].mxu0
        %4415 = vmatprep.mubr.bf16.mxu0 0
        %4416 = vmatmul.mubr.bf16.gmra.mrb[0].mxu0 %v4283
        %v4417 = vpop.f32.mrb[0].mxu0
        %v4418 = vadd.f32 %v3990, %v4417
        %v4419 = vpop.f32.mrb[0].mxu0
        %v4420 = vpop.f32.mrb[0].mxu0
        %v4421 = vadd.f32 %v3991, %v4420
        %v4422 = vpop.f32.mrb[0].mxu0
        %4423 = vmatprep.mubr.bf16.mxu0 0
        %4424 = vmatmul.mubr.bf16.gmra.mrb[0].mxu0 %v4284
        %v4425 = vpop.f32.mrb[0].mxu0
        %v4426 = vadd.f32 %v3992, %v4425
        %v4427 = vpop.f32.mrb[0].mxu0
        %v4428 = vpop.f32.mrb[0].mxu0
        %v4429 = vadd.f32 %v3993, %v4428
        %v4430 = vpop.f32.mrb[0].mxu0
        %4431 = vmatprep.mubr.bf16.mxu0 0
        %4432 = vmatmul.mubr.bf16.gmra.mrb[0].mxu0 %v4285
        %v4433 = vpop.f32.mrb[0].mxu0
        %v4434 = vadd.f32 %v3994, %v4433
        %v4435 = vpop.f32.mrb[0].mxu0
        %v4436 = vpop.f32.mrb[0].mxu0
        %v4437 = vadd.f32 %v3995, %v4436
        %v4438 = vpop.f32.mrb[0].mxu0
        %4439 = vmatprep.mubr.bf16.mxu0 0
        %4440 = vmatmul.mubr.bf16.gmra.mrb[0].mxu0 %v4286
        %v4441 = vpop.f32.mrb[0].mxu0
        %v4442 = vadd.f32 %v3996, %v4441
        %v4443 = vpop.f32.mrb[0].mxu0
        %v4444 = vpop.f32.mrb[0].mxu0
        %v4445 = vadd.f32 %v3997, %v4444
        %v4446 = vpop.f32.mrb[0].mxu0
        %4447 = vdwg.mxu0
        %v4448 = vadd.f32 %v4386, %v4389
        %v4449 = vadd.f32 %v4448, %v4394
        %v4450 = vadd.f32 %v4449, %v4397
        %v4451 = vadd.f32 %v4450, %v4402
        %v4452 = vadd.f32 %v4451, %v4405
        %v4453 = vadd.f32 %v4452, %v4410
        %v4454 = vadd.f32 %v4453, %v4413
        %4455 = vadd.xlane.f32.xlu0 %v4454
        %v4456 = vpop.xlane.xlu0 %4455
        %v4457 = vrot.slane %v4456, 4
        %v4458 = vadd.f32 %v4456, %v4457
        %v4459 = vrot.slane %v4458, 2
        %v4460 = vadd.f32 %v4458, %v4459
        %v4461 = vrot.slane %v4460, 1
        %v4462 = vadd.f32 %v4460, %v4461
        %s4463 = vtos %v4462
        %v4464 = vstv %s3844
        %v4465 = vrcp.pop %v4464
        %s4466 = vtos %v4465
        %s4467 = smul.f32 %s4463, %s4466
        %v4468 = vstv %s4467
        %v4469 = vsub.f32 %v4386, %v4468
        %v4470 = vsub.f32 %v4389, %v4468
        %v4471 = vsub.f32 %v4394, %v4468
        %v4472 = vsub.f32 %v4397, %v4468
        %v4473 = vsub.f32 %v4402, %v4468
        %v4474 = vsub.f32 %v4405, %v4468
        %v4475 = vsub.f32 %v4410, %v4468
        %v4476 = vsub.f32 %v4413, %v4468
        %v4477 = vmul.f32 %v4469, %v4469
        %v4478 = vmul.f32 %v4470, %v4470
        %v4479 = vmul.f32 %v4471, %v4471
        %v4480 = vmul.f32 %v4472, %v4472
        %v4481 = vmul.f32 %v4473, %v4473
        %v4482 = vmul.f32 %v4474, %v4474
        %v4483 = vmul.f32 %v4475, %v4475
        %v4484 = vmul.f32 %v4476, %v4476
        %v4485 = vadd.f32 %v4477, %v4478
        %v4486 = vadd.f32 %v4485, %v4479
        %v4487 = vadd.f32 %v4486, %v4480
        %v4488 = vadd.f32 %v4487, %v4481
        %v4489 = vadd.f32 %v4488, %v4482
        %v4490 = vadd.f32 %v4489, %v4483
        %v4491 = vadd.f32 %v4490, %v4484
        %4492 = vadd.xlane.f32.xlu0 %v4491
        %v4493 = vpop.xlane.xlu0 %4492
        %v4494 = vrot.slane %v4493, 4
        %v4495 = vadd.f32 %v4493, %v4494
        %v4496 = vrot.slane %v4495, 2
        %v4497 = vadd.f32 %v4495, %v4496
        %v4498 = vrot.slane %v4497, 1
        %v4499 = vadd.f32 %v4497, %v4498
        %s4500 = vtos %v4499
        %v4501 = vstv %s4500
        %v4502 = vrsqrt.pop %v4501
        %v4503 = vmul.f32 %v4501, %v4502
        %vm4504 = vcmp.eq.f32.partialorder %v4501, inf
        %v4505 = vsel %vm4504, %v4501, %v4503
        %vm4506 = vcmp.eq.f32.partialorder %v4501, 0.0
        %v4507 = vand.u32 %v4501, 2147483648
        %v4508 = vsel %vm4506, %v4507, %v4505
        %s4509 = vtos %v4508
        %v4510 = vstv %s4509
        %v4511 = vrcp.pop %v4510
        %s4512 = vtos %v4511
        %s4513 = smul.f32 %s3844, %s4512
        %v4514 = vstv %s4513
        %v4515 = vmul.f32 %v4469, %v4514
        %v4516 = vmul.f32 %v4470, %v4514
        %v4517 = vmul.f32 %v4471, %v4514
        %v4518 = vmul.f32 %v4472, %v4514
        %v4519 = vmul.f32 %v4473, %v4514
        %v4520 = vmul.f32 %v4474, %v4514
        %v4521 = vmul.f32 %v4475, %v4514
        %v4522 = vmul.f32 %v4476, %v4514
        %4523 = vst [vmem:[%s369] sm:$0xff] %v4515
        %4524 = vst [vmem:[%s369 + $0x8] sm:$0xff] %v4516
        %4525 = vst [vmem:[%s369 + $0x10] sm:$0xff] %v4517
        %4526 = vst [vmem:[%s369 + $0x18] sm:$0xff] %v4518
        %4527 = vst [vmem:[%s369 + $0x20] sm:$0xff] %v4519
        %4528 = vst [vmem:[%s369 + $0x28] sm:$0xff] %v4520
        %4529 = vst [vmem:[%s369 + $0x30] sm:$0xff] %v4521
        %4530 = vst [vmem:[%s369 + $0x38] sm:$0xff] %v4522
        %s4531 = sld [smem:[#allocation2 + %s3920]]
        %s4532 = smul.f32 %s4531, 128.0
        %v4533 = vadd.f32 %v4418, %v4421
        %v4534 = vadd.f32 %v4533, %v4426
        %v4535 = vadd.f32 %v4534, %v4429
        %v4536 = vadd.f32 %v4535, %v4434
        %v4537 = vadd.f32 %v4536, %v4437
        %v4538 = vadd.f32 %v4537, %v4442
        %v4539 = vadd.f32 %v4538, %v4445
        %4540 = vadd.xlane.f32.xlu0 %v4539
        %v4541 = vpop.xlane.xlu0 %4540
        %v4542 = vrot.slane %v4541, 4
        %v4543 = vadd.f32 %v4541, %v4542
        %v4544 = vrot.slane %v4543, 2
        %v4545 = vadd.f32 %v4543, %v4544
        %v4546 = vrot.slane %v4545, 1
        %v4547 = vadd.f32 %v4545, %v4546
        %s4548 = vtos %v4547
        %v4549 = vstv %s4532
        %v4550 = vrcp.pop %v4549
        %s4551 = vtos %v4550
        %s4552 = smul.f32 %s4548, %s4551
        %v4553 = vstv %s4552
        %v4554 = vsub.f32 %v4418, %v4553
        %v4555 = vsub.f32 %v4421, %v4553
        %v4556 = vsub.f32 %v4426, %v4553
        %v4557 = vsub.f32 %v4429, %v4553
        %v4558 = vsub.f32 %v4434, %v4553
        %v4559 = vsub.f32 %v4437, %v4553
        %v4560 = vsub.f32 %v4442, %v4553
        %v4561 = vsub.f32 %v4445, %v4553
        %v4562 = vmul.f32 %v4554, %v4554
        %v4563 = vmul.f32 %v4555, %v4555
        %v4564 = vmul.f32 %v4556, %v4556
        %v4565 = vmul.f32 %v4557, %v4557
        %v4566 = vmul.f32 %v4558, %v4558
        %v4567 = vmul.f32 %v4559, %v4559
        %v4568 = vmul.f32 %v4560, %v4560
        %v4569 = vmul.f32 %v4561, %v4561
        %v4570 = vadd.f32 %v4562, %v4563
        %v4571 = vadd.f32 %v4570, %v4564
        %v4572 = vadd.f32 %v4571, %v4565
        %v4573 = vadd.f32 %v4572, %v4566
        %v4574 = vadd.f32 %v4573, %v4567
        %v4575 = vadd.f32 %v4574, %v4568
        %v4576 = vadd.f32 %v4575, %v4569
        %4577 = vadd.xlane.f32.xlu0 %v4576
        %v4578 = vpop.xlane.xlu0 %4577
        %v4579 = vrot.slane %v4578, 4
        %v4580 = vadd.f32 %v4578, %v4579
        %v4581 = vrot.slane %v4580, 2
        %v4582 = vadd.f32 %v4580, %v4581
        %v4583 = vrot.slane %v4582, 1
        %v4584 = vadd.f32 %v4582, %v4583
        %s4585 = vtos %v4584
        %v4586 = vstv %s4585
        %v4587 = vrsqrt.pop %v4586
        %v4588 = vmul.f32 %v4586, %v4587
        %vm4589 = vcmp.eq.f32.partialorder %v4586, inf
        %v4590 = vsel %vm4589, %v4586, %v4588
        %vm4591 = vcmp.eq.f32.partialorder %v4586, 0.0
        %v4592 = vand.u32 %v4586, 2147483648
        %v4593 = vsel %vm4591, %v4592, %v4590
        %s4594 = vtos %v4593
        %v4595 = vstv %s4594
        %v4596 = vrcp.pop %v4595
        %s4597 = vtos %v4596
        %s4598 = smul.f32 %s4532, %s4597
        %v4599 = vstv %s4598
        %v4600 = vmul.f32 %v4554, %v4599
        %v4601 = vmul.f32 %v4555, %v4599
        %v4602 = vmul.f32 %v4556, %v4599
        %v4603 = vmul.f32 %v4557, %v4599
        %v4604 = vmul.f32 %v4558, %v4599
        %v4605 = vmul.f32 %v4559, %v4599
        %v4606 = vmul.f32 %v4560, %v4599
        %v4607 = vmul.f32 %v4561, %v4599
        %s4608 = scalar_lea.vmem %s369, 64 [#allocation13]
        %4609 = vst [vmem:[%s4608] sm:$0xff] %v4600
        %4610 = vst [vmem:[%s4608 + $0x8] sm:$0xff] %v4601
        %4611 = vst [vmem:[%s4608 + $0x10] sm:$0xff] %v4602
        %4612 = vst [vmem:[%s4608 + $0x18] sm:$0xff] %v4603
        %4613 = vst [vmem:[%s4608 + $0x20] sm:$0xff] %v4604
        %4614 = vst [vmem:[%s4608 + $0x28] sm:$0xff] %v4605
        %4615 = vst [vmem:[%s4608 + $0x30] sm:$0xff] %v4606
        %4616 = vst [vmem:[%s4608 + $0x38] sm:$0xff] %v4607
        %s4617 = sand.u32 %s187, 1
        %s4618 = scalar_lea.sflag [#allocation4], %s4617
        %s4619 = sand.u32 %s187, 1
        %s4620 = smul.addr %s4619, 128
        %s4621 = scalar_lea.vmem [#allocation13], %s4620
        // Predicated region
        $region73: #{attn_block_pallas.1} parent=47 // pred_check
          %p4622 = pneg %p197
        $region74: #{attn_block_pallas.1} parent=47 // pred_check_branch
          %4624 = sbr.rel (%p4622) target = $region76
        $region75: #{attn_block_pallas.1} parent=47 // pred_region
          %s4625 = smul.u32 2, %s27
          %s4627 = ssub.s32 2048, 2048
          %4628 = vsyncadd %s4618, %s4627
          %s4629 = smul.addr %s4625, 8
          %s4630 = smul.addr %s4629, 128
          %s4631 = scalar_lea.hbm %s7, %s4630
          %s4632 = sshll.u32 %s4621, 4
          %s4633 = int_to_ptr.vmem [resolvable:$true] %s4632
          %4638 = dma.vmem_to_hbm [thread:$0]  %s4633, 2048, %s4631, %s4618, 128, 128, 8
        $region76: #{attn_block_pallas.1} parent=47 // pred_fallthru
          _
      $region48: #{attn_block_pallas.1} parent=5 // pred_fallthru
        _
      %p4639 = scmp.le.s32.totalorder 2, %s22
      // Predicated region
      $region77: #{attn_block_pallas.1} parent=5 // pred_check
        %p4640 = pneg %p4639
      $region78: #{attn_block_pallas.1} parent=5 // pred_check_branch
        %4642 = sbr.rel (%p4640) target = $region80
      $region79: #{attn_block_pallas.1} parent=5 // pred_region
        %s4643 = ssub.s32 %s22, 2
        // Predicated region
        $region81: #{attn_block_pallas.1} parent=79 // pred_check
          %p4644 = pneg %p203
        $region82: #{attn_block_pallas.1} parent=79 // pred_check_branch
          %4646 = sbr.rel (%p4644) target = $region84
        $region83: #{attn_block_pallas.1} parent=79 // pred_region
          %s4647 = sand.u32 %s188, 1
          %s4648 = scalar_lea.sflag [#allocation4], %s4647
          %s4649 = sand.u32 %s188, 1
          %s4650 = smul.addr %s4649, 128
          %s4651 = scalar_lea.vmem [#allocation13], %s4650
          %4652 = dma.done %s4648, 2048
        $region84: #{attn_block_pallas.1} parent=79 // pred_fallthru
          _
      $region80: #{attn_block_pallas.1} parent=5 // pred_fallthru
        _
    $region6: #{attn_block_pallas.1} parent=1 // loop_footer
      %s26 = sadd.s32 1, %s22
    $region7: #{attn_block_pallas.1} parent=1 // loop_footer_branch
      %21 = sbr.rel target = $region3
    $region8: #{attn_block_pallas.1} parent=1 // loop_exit
      _
    %4653 = vsyncpa [#allocation3], 1
    %s4654 = scalar_lea.sflag [#allocation3], 1
    %4655 = vsyncpa %s4654, 1
    %4656 = vsyncpa [#allocation8], 1
    %4657 = vsyncpa [#allocation11], 1
    %4658 = vsyncpa [#allocation4], 1
    %s4659 = scalar_lea.sflag [#allocation4], 1
    %4660 = vsyncpa %s4659, 1
    %4661 = vsyncpa [#allocation5], 1
    %s4662 = scalar_lea.sflag [#allocation5], 1
    %4663 = vsyncpa %s4662, 1

</llo_original>
